<compile_context>
chip_gen: v7x
topology: tpu7x:2x2x1
jax: 0.10.0
libtpu: 0.0.40
codegen_flags: <defaults>
</compile_context>

<pallas_src>
import collections

import numpy as np
import jax
import jax.numpy as jnp
from jax.experimental import pallas as pl
from jax.experimental.pallas import tpu as pltpu

# ---------------- config (deterministic, synthetic) ----------------
CLASSES = 4
BBOX_ATTRS = 5 + CLASSES          # x, y, w, h, obj, classes
IMAGE_W = IMAGE_H = 416.0
LAMBDA_XY = 1.0
LAMBDA_WH = 1.0
LAMBDA_NOOBJ = 1.0
LAMBDA_OBJ = 1.0
LAMBDA_CLASS = 1.0
LAMBDA_CONF = 1.0

_ANCHORS = np.asarray(
    [[[10, 13], [16, 30], [33, 23]],
     [[30, 61], [62, 45], [59, 119]],
     [[116, 90], [156, 198], [373, 326]]], dtype=np.float64)
_ANCHORS = _ANCHORS.copy()
_ANCHORS[:, :, 0] /= IMAGE_W
_ANCHORS[:, :, 1] /= IMAGE_H
NORMD_ANCHORS = _ANCHORS.reshape(9, 2)                                # (9, 2)
NORMD_ANCHORS_BOX = np.concatenate(
    [np.zeros((9, 2), dtype=np.float64), NORMD_ANCHORS], axis=1)      # (9, 4)

DecodedLevel = collections.namedtuple(
    "DecodedLevel", ["target", "s_obj", "s_scale_obj", "n_cells"])


# ---------------- Pallas kernel ----------------
def _level_rowsums(z, t):
    """Per-row lane sums for one pyramid level.

    z, t: (R, FF) f32 slabs, R = B*3*BBOX_ATTRS, FF = F*F.
      row r holds attribute (r % 9) of group (r // 9):
        attrs 0,1 : x/y offsets     -> BCE(sigmoid(z), t), unmasked
        attrs 2,3 : w/h log-ratios  -> (z - t)^2, unmasked
        attr  4   : objectness      -> BCE(sigmoid(z), t), unmasked
        attrs 5+  : class one-hot; target == -1 marks "no-object cell",
                    excluded from the class BCE sum.
    Returns (row_bce, row_se), each (R, 1) f32.
    """
    valid = t >= 0.0                                   # sentinel only on class rows
    # Fused BCE-with-logits == torch BCELoss(sigmoid(z), t) for |z| < ~16.6.
    lse = jnp.log(1.0 + jnp.exp(-jnp.abs(z)))
    bce = jnp.where(valid, jnp.maximum(z, 0.0) - z * t + lse, 0.0)
    d = z - t
    row_bce = jnp.sum(bce, axis=1, keepdims=True)      # (R, 1)
    row_se = jnp.sum(d * d, axis=1, keepdims=True)     # (R, 1)
    return row_bce, row_se


def _yolo_rowsum_kernel(p13, t13, p26, t26, p52_hbm, t52_hbm,
                        ob13, os13, ob26, os26, ob52, os52,
                        p52_buf, t52_buf, sem):
    # Start the large level-52 HBM->VMEM copies immediately so they overlap
    # with the level-13 / level-26 compute below.
    cp_p = pltpu.make_async_copy(p52_hbm, p52_buf, sem.at[0])
    cp_t = pltpu.make_async_copy(t52_hbm, t52_buf, sem.at[1])
    cp_p.start()
    cp_t.start()

    rb, rs = _level_rowsums(p13[...], t13[...])
    ob13[...] = rb
    os13[...] = rs

    rb, rs = _level_rowsums(p26[...], t26[...])
    ob26[...] = rb
    os26[...] = rs

    cp_p.wait()
    cp_t.wait()
    rb, rs = _level_rowsums(p52_buf[...], t52_buf[...])
    ob52[...] = rb
    os52[...] = rs


def _loss_rowsums(preds3, tgts3):
    # TODO(synk): for batch >> 2 (or to use both v7x TensorCores) add a grid
    # over the B*3 group axis with dimension_semantics=("parallel",) and
    # per-block partial row-sum outputs; at B=2 the whole problem fits VMEM.
    p13, p26, p52 = preds3
    t13, t26, t52 = tgts3
    R = p13.shape[0]
    ff52 = p52.shape[1]
    total = R * (p13.shape[1] + p26.shape[1] + ff52)

    vmem = pl.BlockSpec(memory_space=pltpu.MemorySpace.VMEM)
    hbm = pl.BlockSpec(memory_space=pl.ANY)
    out_struct = jax.ShapeDtypeStruct((R, 1), jnp.float32)

    return pl.pallas_call(
        _yolo_rowsum_kernel,
        out_shape=(out_struct,) * 6,
        in_specs=[vmem, vmem, vmem, vmem, hbm, hbm],
        out_specs=(vmem,) * 6,
        scratch_shapes=[pltpu.VMEM((R, ff52), jnp.float32),
                        pltpu.VMEM((R, ff52), jnp.float32),
                        pltpu.SemaphoreType.DMA((2,))],
        cost_estimate=pl.CostEstimate(
            flops=12 * total,
            transcendentals=2 * total,
            bytes_accessed=8 * total + 24 * R),
    )(p13, t13, p26, t26, p52, t52)


# ---------------- forward (device side) ----------------
@jax.jit
def _device_forward(preds3, tgts3, stats):
    # stats: (3, 3) f32 -- per level [sum(obj), sum((2 - w*h) * obj), n_cells]
    rowsums = _loss_rowsums(preds3, tgts3)
    losses = []
    for l in range(3):
        # Fold the (B*3*A, 1) row sums down to per-attribute sums (tiny).
        a_bce = jnp.sum(jnp.reshape(rowsums[2 * l][:, 0], (-1, BBOX_ATTRS)), axis=0)
        a_se = jnp.sum(jnp.reshape(rowsums[2 * l + 1][:, 0], (-1, BBOX_ATTRS)), axis=0)

        s_obj = stats[l, 0]
        s_scale = stats[l, 1]
        n = stats[l, 2]
        s_noobj = n - s_obj                              # noobj mask == 1 - obj mask

        # torch BCELoss / MSELoss default to reduction='mean' (a scalar) which
        # the reference then multiplies by mask tensors and sums.
        bce_x_mean = a_bce[0] / n
        bce_y_mean = a_bce[1] / n
        mse_w_mean = a_se[2] / n
        mse_h_mean = a_se[3] / n
        bce_c_mean = a_bce[4] / n

        loss_x = bce_x_mean * s_scale
        loss_y = bce_y_mean * s_scale
        loss_w = mse_w_mean * 0.5 * s_scale
        loss_h = mse_h_mean * 0.5 * s_scale
        loss_conf = (LAMBDA_OBJ * bce_c_mean * s_obj
                     + LAMBDA_NOOBJ * bce_c_mean * s_noobj)
        # mean over selected (obj) cells x classes; NaN when no objects (torch)
        loss_class = jnp.sum(a_bce[5:]) / (s_obj * CLASSES)

        losses.append(loss_x * LAMBDA_XY + loss_y * LAMBDA_XY
                      + loss_w * LAMBDA_WH + loss_h * LAMBDA_WH
                      + loss_conf * LAMBDA_CONF + loss_class * LAMBDA_CLASS)

    losses = jnp.stack(losses)
    valid = jnp.logical_not(jnp.isnan(losses))           # drop NaN levels like torch
    loss = jnp.sum(jnp.where(valid, losses, 0.0))
    loss_num = stats[0, 0] + stats[1, 0] + stats[2, 0]
    return loss / loss_num


def yolov3_loss_forward(predict_feature_list, decoded_list):
    preds3 = []
    for pf in predict_feature_list:
        B = pf.shape[0]
        F = pf.shape[2]
        # (B, 3*A, F, F) -> (B*3*A, F*F): contiguous reshape, no transpose/copy.
        preds3.append(jnp.reshape(pf, (B * 3 * BBOX_ATTRS, F * F))
                      .astype(jnp.float32))
    tgts3 = tuple(jnp.asarray(d.target) for d in decoded_list)
    stats = jnp.asarray(
        [[d.s_obj, d.s_scale_obj, float(d.n_cells)] for d in decoded_list],
        dtype=jnp.float32)
    return _device_forward(tuple(preds3), tgts3, stats)


# ---------------- host-side target decoding (glue, numpy) ----------------
def _jaccard_np(box_a, box_b):
    max_xy = np.minimum(box_a[:, None, 2:], box_b[None, :, 2:])
    min_xy = np.maximum(box_a[:, None, :2], box_b[None, :, :2])
    inter = np.clip(max_xy - min_xy, 0.0, None)
    inter = inter[:, :, 0] * inter[:, :, 1]
    area_a = ((box_a[:, 2] - box_a[:, 0]) * (box_a[:, 3] - box_a[:, 1]))[:, None]
    area_b = ((box_b[:, 2] - box_b[:, 0]) * (box_b[:, 3] - box_b[:, 1]))[None, :]
    return inter / (area_a + area_b - inter)


def decode_pyramid_target(target_list, feat):
    # TODO(synk): the data-dependent GT-box -> anchor/grid-cell scatter stays
    # host-side (it is a Python loop over a handful of boxes in PyTorch too).
    assert feat in (13, 26, 52)
    idx_list = {13: (0, 1, 2), 26: (3, 4, 5), 52: (6, 7, 8)}[feat]

    bs = len(target_list)
    # Target built directly in kernel layout (b, anchor, attr, gy, gx); rows are
    # [tx, ty, tw, th, obj, classes...].  Class rows default to the -1 sentinel
    # (= "not an object cell, exclude from the class BCE sum").
    tgt = np.zeros((bs, 3, BBOX_ATTRS, feat, feat), np.float32)
    tgt[:, :, 5:, :, :] = -1.0
    wxw = np.zeros((bs, 3, feat, feat), np.float32)
    wyh = np.zeros((bs, 3, feat, feat), np.float32)

    for b, boxes in enumerate(target_list):
        boxes = np.asarray(boxes, np.float64)
        if boxes.shape[0] == 0:
            continue
        feat_box = boxes[:, :4] * feat
        gx = np.floor(feat_box[:, 0]).astype(np.int32)
        gy = np.floor(feat_box[:, 1]).astype(np.int32)
        off_x = feat_box[:, 0] - gx
        off_y = feat_box[:, 1] - gy
        tbox = boxes[:, :4].copy()
        tbox[:, 0] = 0.0
        tbox[:, 1] = 0.0
        ious = _jaccard_np(tbox, NORMD_ANCHORS_BOX)
        best = np.argmax(ious, axis=-1)
        for bi, ai in enumerate(best):
            if ai not in idx_list:
                continue
            pa = int(ai) % 3
            gyi, gxi = int(gy[bi]), int(gx[bi])
            tgt[b, pa, 0, gyi, gxi] = off_x[bi]
            tgt[b, pa, 1, gyi, gxi] = off_y[bi]
            tgt[b, pa, 2, gyi, gxi] = np.log(boxes[bi, 2] / NORMD_ANCHORS[ai, 0])
            tgt[b, pa, 3, gyi, gxi] = np.log(boxes[bi, 3] / NORMD_ANCHORS[ai, 1])
            tgt[b, pa, 4, gyi, gxi] = 1.0
            # obj cell: clear the sentinel, then set the one-hot class
            # (a later box in the same cell keeps earlier 1s, like torch).
            tgt[b, pa, 5:, gyi, gxi] = np.maximum(tgt[b, pa, 5:, gyi, gxi], 0.0)
            tgt[b, pa, 5 + int(boxes[bi, 4]), gyi, gxi] = 1.0
            wxw[b, pa, gyi, gxi] = boxes[bi, 2]
            wyh[b, pa, gyi, gxi] = boxes[bi, 3]

    obj = tgt[:, :, 4, :, :]
    s_obj = float(np.sum(obj))
    s_scale_obj = float(np.sum((2.0 - wxw * wyh) * obj))
    n_cells = bs * 3 * feat * feat
    return DecodedLevel(
        target=tgt.reshape(bs * 3 * BBOX_ATTRS, feat * feat),
        s_obj=s_obj, s_scale_obj=s_scale_obj, n_cells=n_cells)


# ---------------- pure-JAX reference (torch semantics, no Pallas) ----------------
def _reference_level(pred_feat, dec):
    B = pred_feat.shape[0]
    F = pred_feat.shape[2]
    pf = jnp.reshape(pred_feat, (B * 3, BBOX_ATTRS, F * F)).astype(jnp.float32)
    t = jnp.reshape(jnp.asarray(dec.target), (B * 3, BBOX_ATTRS, F * F))

    def bce(p, tt):
        return -(tt * jnp.maximum(jnp.log(p), -100.0)
                 + (1.0 - tt) * jnp.maximum(jnp.log(1.0 - p), -100.0))

    px = jax.nn.sigmoid(pf[:, 0, :])
    py = jax.nn.sigmoid(pf[:, 1, :])
    pw = pf[:, 2, :]
    ph = pf[:, 3, :]
    pc = jax.nn.sigmoid(pf[:, 4, :])
    pcls = jax.nn.sigmoid(pf[:, 5:, :])

    tobj = t[:, 4, :]
    tcls = jnp.maximum(t[:, 5:, :], 0.0)     # -1 sentinel -> torch's 0 target

    n = float(dec.n_cells)
    s_obj = dec.s_obj
    s_noobj = n - s_obj
    s_scale = dec.s_scale_obj

    loss_x = jnp.mean(bce(px, t[:, 0, :])) * s_scale
    loss_y = jnp.mean(bce(py, t[:, 1, :])) * s_scale
    loss_w = jnp.mean((pw - t[:, 2, :]) ** 2) * 0.5 * s_scale
    loss_h = jnp.mean((ph - t[:, 3, :]) ** 2) * 0.5 * s_scale
    bce_c = jnp.mean(bce(pc, tobj))
    loss_conf = LAMBDA_OBJ * bce_c * s_obj + LAMBDA_NOOBJ * bce_c * s_noobj
    loss_class = jnp.sum(bce(pcls, tcls) * tobj[:, None, :]) / (s_obj * CLASSES)
    loss = (loss_x * LAMBDA_XY + loss_y * LAMBDA_XY + loss_w * LAMBDA_WH
            + loss_h * LAMBDA_WH + loss_conf * LAMBDA_CONF
            + loss_class * LAMBDA_CLASS)
    return loss, s_obj


def reference_forward(predict_feature_list, decoded_list):
    pairs = [_reference_level(p, d)
             for p, d in zip(predict_feature_list, decoded_list)]
    losses = jnp.stack([p[0] for p in pairs])
    valid = jnp.logical_not(jnp.isnan(losses))
    loss = jnp.sum(jnp.where(valid, losses, 0.0))
    loss_num = pairs[0][1] + pairs[1][1] + pairs[2][1]
    return loss / loss_num


# ---------------- main ----------------
if __name__ == "__main__":
    key = jax.random.PRNGKey(0)
    B = 2
    feat_sizes = [13, 26, 52]

    k_pred, k_tgt = jax.random.split(key)
    pred_keys = jax.random.split(k_pred, 3)
    preds = [jax.random.normal(kk, (B, 3 * BBOX_ATTRS, f, f), jnp.float32)
             for f, kk in zip(feat_sizes, pred_keys)]

    # synthetic GT targets: per image (num_boxes, 5) = [cx, cy, w, h, class], normalized
    n_boxes = 3
    kxy, kwh, kc = jax.random.split(k_tgt, 3)
    cxy = jax.random.uniform(kxy, (B, n_boxes, 2), minval=0.1, maxval=0.9)
    wh = jax.random.uniform(kwh, (B, n_boxes, 2), minval=0.02, maxval=0.6)
    cls_id = jax.random.randint(kc, (B, n_boxes, 1), 0, CLASSES).astype(jnp.float32)
    targets = jnp.concatenate([cxy, wh, cls_id], axis=-1)
    target_list = [np.asarray(targets[b]) for b in range(B)]

    decoded = [decode_pyramid_target(target_list, f) for f in feat_sizes]

    loss = yolov3_loss_forward(preds, decoded)
    loss = jax.block_until_ready(loss)
    assert np.isfinite(float(loss)), f"loss not finite: {loss}"

    ref = jax.block_until_ready(reference_forward(preds, decoded))
    np.testing.assert_allclose(float(loss), float(ref), rtol=2e-3, atol=1e-5)

    print("KERNEL_OK")
</pallas_src>

<mosaic_0001>
module attributes {stable_mosaic.version = 11 : i64} {
  func.func @_yolo_rowsum_kernel(%arg0: memref<54x169xf32, #tpu.memory_space<vmem>>, %arg1: memref<54x169xf32, #tpu.memory_space<vmem>>, %arg2: memref<54x676xf32, #tpu.memory_space<vmem>>, %arg3: memref<54x676xf32, #tpu.memory_space<vmem>>, %arg4: memref<54x2704xf32, #tpu.memory_space<any>>, %arg5: memref<54x2704xf32, #tpu.memory_space<any>>, %arg6: memref<54x1xf32, #tpu.memory_space<vmem>>, %arg7: memref<54x1xf32, #tpu.memory_space<vmem>>, %arg8: memref<54x1xf32, #tpu.memory_space<vmem>>, %arg9: memref<54x1xf32, #tpu.memory_space<vmem>>, %arg10: memref<54x1xf32, #tpu.memory_space<vmem>>, %arg11: memref<54x1xf32, #tpu.memory_space<vmem>>, %arg12: memref<54x2704xf32, #tpu.memory_space<vmem>>, %arg13: memref<54x2704xf32, #tpu.memory_space<vmem>>, %arg14: memref<2x!tpu.dma_semaphore, #tpu.memory_space<semaphore_mem>>) attributes {dimension_semantics = [], scalar_prefetch = 0 : i64, scratch_operands = 3 : i64, tpu.core_type = #tpu.core_type<tc>} {
    %c0_i32 = arith.constant 0 : i32
    %0 = tpu.memref_slice %arg14[%c0_i32] : memref<2x!tpu.dma_semaphore, #tpu.memory_space<semaphore_mem>> -> memref<1x!tpu.dma_semaphore, #tpu.memory_space<semaphore_mem>>
    %1 = tpu.memref_squeeze %0 : memref<1x!tpu.dma_semaphore, #tpu.memory_space<semaphore_mem>> -> memref<!tpu.dma_semaphore, #tpu.memory_space<semaphore_mem>>
    tpu.enqueue_dma source(%arg4 : memref<54x2704xf32, #tpu.memory_space<any>>) target(%arg12 : memref<54x2704xf32, #tpu.memory_space<vmem>>) target_semaphore(%1 : memref<!tpu.dma_semaphore, #tpu.memory_space<semaphore_mem>>)
    %c1_i32 = arith.constant 1 : i32
    %2 = tpu.memref_slice %arg14[%c1_i32] : memref<2x!tpu.dma_semaphore, #tpu.memory_space<semaphore_mem>> -> memref<1x!tpu.dma_semaphore, #tpu.memory_space<semaphore_mem>>
    %3 = tpu.memref_squeeze %2 : memref<1x!tpu.dma_semaphore, #tpu.memory_space<semaphore_mem>> -> memref<!tpu.dma_semaphore, #tpu.memory_space<semaphore_mem>>
    tpu.enqueue_dma source(%arg5 : memref<54x2704xf32, #tpu.memory_space<any>>) target(%arg13 : memref<54x2704xf32, #tpu.memory_space<vmem>>) target_semaphore(%3 : memref<!tpu.dma_semaphore, #tpu.memory_space<semaphore_mem>>)
    %c0 = arith.constant 0 : index
    %c0_0 = arith.constant 0 : index
    %4 = vector.load %arg0[%c0, %c0_0] : memref<54x169xf32, #tpu.memory_space<vmem>>, vector<54x169xf32>
    %c0_1 = arith.constant 0 : index
    %c0_2 = arith.constant 0 : index
    %5 = vector.load %arg1[%c0_1, %c0_2] : memref<54x169xf32, #tpu.memory_space<vmem>>, vector<54x169xf32>
    %cst = arith.constant 0.000000e+00 : f32
    %6 = vector.broadcast %cst : f32 to vector<54x169xf32>
    %7 = arith.cmpf oge, %5, %6 : vector<54x169xf32>
    %8 = math.absf %4 : vector<54x169xf32>
    %cst_3 = arith.constant 0.000000e+00 : f32
    %9 = vector.broadcast %cst_3 : f32 to vector<54x169xf32>
    %10 = arith.subf %9, %8 : vector<54x169xf32>
    %11 = math.exp %10 : vector<54x169xf32>
    %cst_4 = arith.constant 1.000000e+00 : f32
    %12 = vector.broadcast %cst_4 : f32 to vector<54x169xf32>
    %13 = arith.addf %12, %11 : vector<54x169xf32>
    %14 = math.log %13 : vector<54x169xf32>
    %cst_5 = arith.constant 0.000000e+00 : f32
    %15 = vector.broadcast %cst_5 : f32 to vector<54x169xf32>
    %16 = arith.maximumf %4, %15 : vector<54x169xf32>
    %17 = arith.mulf %4, %5 : vector<54x169xf32>
    %18 = arith.subf %16, %17 : vector<54x169xf32>
    %19 = arith.addf %18, %14 : vector<54x169xf32>
    %cst_6 = arith.constant 0.000000e+00 : f32
    %20 = vector.broadcast %cst_6 : f32 to vector<54x169xf32>
    %21 = arith.select %7, %19, %20 : vector<54x169xi1>, vector<54x169xf32>
    %22 = arith.subf %4, %5 : vector<54x169xf32>
    %cst_7 = arith.constant dense<0.000000e+00> : vector<54xf32>
    %23 = vector.multi_reduction <add>, %21, %cst_7 [1] : vector<54x169xf32> to vector<54xf32>
    %24 = vector.shape_cast %23 : vector<54xf32> to vector<54x1xf32>
    %25 = arith.mulf %22, %22 : vector<54x169xf32>
    %cst_8 = arith.constant dense<0.000000e+00> : vector<54xf32>
    %26 = vector.multi_reduction <add>, %25, %cst_8 [1] : vector<54x169xf32> to vector<54xf32>
    %27 = vector.shape_cast %26 : vector<54xf32> to vector<54x1xf32>
    %c0_9 = arith.constant 0 : index
    %c0_10 = arith.constant 0 : index
    %28 = vector.load %arg6[%c0_9, %c0_10] : memref<54x1xf32, #tpu.memory_space<vmem>>, vector<54x1xf32>
    tpu.vector_store %arg6[%c0_9, %c0_10], %24 {strides = array<i32>} : memref<54x1xf32, #tpu.memory_space<vmem>>, vector<54x1xf32>,
    %c0_11 = arith.constant 0 : index
    %c0_12 = arith.constant 0 : index
    %29 = vector.load %arg7[%c0_11, %c0_12] : memref<54x1xf32, #tpu.memory_space<vmem>>, vector<54x1xf32>
    tpu.vector_store %arg7[%c0_11, %c0_12], %27 {strides = array<i32>} : memref<54x1xf32, #tpu.memory_space<vmem>>, vector<54x1xf32>,
    %c0_13 = arith.constant 0 : index
    %c0_14 = arith.constant 0 : index
    %30 = vector.load %arg2[%c0_13, %c0_14] : memref<54x676xf32, #tpu.memory_space<vmem>>, vector<54x676xf32>
    %c0_15 = arith.constant 0 : index
    %c0_16 = arith.constant 0 : index
    %31 = vector.load %arg3[%c0_15, %c0_16] : memref<54x676xf32, #tpu.memory_space<vmem>>, vector<54x676xf32>
    %cst_17 = arith.constant 0.000000e+00 : f32
    %32 = vector.broadcast %cst_17 : f32 to vector<54x676xf32>
    %33 = arith.cmpf oge, %31, %32 : vector<54x676xf32>
    %34 = math.absf %30 : vector<54x676xf32>
    %cst_18 = arith.constant 0.000000e+00 : f32
    %35 = vector.broadcast %cst_18 : f32 to vector<54x676xf32>
    %36 = arith.subf %35, %34 : vector<54x676xf32>
    %37 = math.exp %36 : vector<54x676xf32>
    %cst_19 = arith.constant 1.000000e+00 : f32
    %38 = vector.broadcast %cst_19 : f32 to vector<54x676xf32>
    %39 = arith.addf %38, %37 : vector<54x676xf32>
    %40 = math.log %39 : vector<54x676xf32>
    %cst_20 = arith.constant 0.000000e+00 : f32
    %41 = vector.broadcast %cst_20 : f32 to vector<54x676xf32>
    %42 = arith.maximumf %30, %41 : vector<54x676xf32>
    %43 = arith.mulf %30, %31 : vector<54x676xf32>
    %44 = arith.subf %42, %43 : vector<54x676xf32>
    %45 = arith.addf %44, %40 : vector<54x676xf32>
    %cst_21 = arith.constant 0.000000e+00 : f32
    %46 = vector.broadcast %cst_21 : f32 to vector<54x676xf32>
    %47 = arith.select %33, %45, %46 : vector<54x676xi1>, vector<54x676xf32>
    %48 = arith.subf %30, %31 : vector<54x676xf32>
    %cst_22 = arith.constant dense<0.000000e+00> : vector<54xf32>
    %49 = vector.multi_reduction <add>, %47, %cst_22 [1] : vector<54x676xf32> to vector<54xf32>
    %50 = vector.shape_cast %49 : vector<54xf32> to vector<54x1xf32>
    %51 = arith.mulf %48, %48 : vector<54x676xf32>
    %cst_23 = arith.constant dense<0.000000e+00> : vector<54xf32>
    %52 = vector.multi_reduction <add>, %51, %cst_23 [1] : vector<54x676xf32> to vector<54xf32>
    %53 = vector.shape_cast %52 : vector<54xf32> to vector<54x1xf32>
    %c0_24 = arith.constant 0 : index
    %c0_25 = arith.constant 0 : index
    %54 = vector.load %arg8[%c0_24, %c0_25] : memref<54x1xf32, #tpu.memory_space<vmem>>, vector<54x1xf32>
    tpu.vector_store %arg8[%c0_24, %c0_25], %50 {strides = array<i32>} : memref<54x1xf32, #tpu.memory_space<vmem>>, vector<54x1xf32>,
    %c0_26 = arith.constant 0 : index
    %c0_27 = arith.constant 0 : index
    %55 = vector.load %arg9[%c0_26, %c0_27] : memref<54x1xf32, #tpu.memory_space<vmem>>, vector<54x1xf32>
    tpu.vector_store %arg9[%c0_26, %c0_27], %53 {strides = array<i32>} : memref<54x1xf32, #tpu.memory_space<vmem>>, vector<54x1xf32>,
    %c0_i32_28 = arith.constant 0 : i32
    %56 = tpu.memref_slice %arg14[%c0_i32_28] : memref<2x!tpu.dma_semaphore, #tpu.memory_space<semaphore_mem>> -> memref<1x!tpu.dma_semaphore, #tpu.memory_space<semaphore_mem>>
    %57 = tpu.memref_squeeze %56 : memref<1x!tpu.dma_semaphore, #tpu.memory_space<semaphore_mem>> -> memref<!tpu.dma_semaphore, #tpu.memory_space<semaphore_mem>>
    tpu.wait_dma2 semaphore(%57 : memref<!tpu.dma_semaphore, #tpu.memory_space<semaphore_mem>>) src(%arg4 : memref<54x2704xf32, #tpu.memory_space<any>>) dst(%arg12 : memref<54x2704xf32, #tpu.memory_space<vmem>>)
    %c1_i32_29 = arith.constant 1 : i32
    %58 = tpu.memref_slice %arg14[%c1_i32_29] : memref<2x!tpu.dma_semaphore, #tpu.memory_space<semaphore_mem>> -> memref<1x!tpu.dma_semaphore, #tpu.memory_space<semaphore_mem>>
    %59 = tpu.memref_squeeze %58 : memref<1x!tpu.dma_semaphore, #tpu.memory_space<semaphore_mem>> -> memref<!tpu.dma_semaphore, #tpu.memory_space<semaphore_mem>>
    tpu.wait_dma2 semaphore(%59 : memref<!tpu.dma_semaphore, #tpu.memory_space<semaphore_mem>>) src(%arg5 : memref<54x2704xf32, #tpu.memory_space<any>>) dst(%arg13 : memref<54x2704xf32, #tpu.memory_space<vmem>>)
    %c0_30 = arith.constant 0 : index
    %c0_31 = arith.constant 0 : index
    %60 = vector.load %arg12[%c0_30, %c0_31] : memref<54x2704xf32, #tpu.memory_space<vmem>>, vector<54x2704xf32>
    %c0_32 = arith.constant 0 : index
    %c0_33 = arith.constant 0 : index
    %61 = vector.load %arg13[%c0_32, %c0_33] : memref<54x2704xf32, #tpu.memory_space<vmem>>, vector<54x2704xf32>
    %cst_34 = arith.constant 0.000000e+00 : f32
    %62 = vector.broadcast %cst_34 : f32 to vector<54x2704xf32>
    %63 = arith.cmpf oge, %61, %62 : vector<54x2704xf32>
    %64 = math.absf %60 : vector<54x2704xf32>
    %cst_35 = arith.constant 0.000000e+00 : f32
    %65 = vector.broadcast %cst_35 : f32 to vector<54x2704xf32>
    %66 = arith.subf %65, %64 : vector<54x2704xf32>
    %67 = math.exp %66 : vector<54x2704xf32>
    %cst_36 = arith.constant 1.000000e+00 : f32
    %68 = vector.broadcast %cst_36 : f32 to vector<54x2704xf32>
    %69 = arith.addf %68, %67 : vector<54x2704xf32>
    %70 = math.log %69 : vector<54x2704xf32>
    %cst_37 = arith.constant 0.000000e+00 : f32
    %71 = vector.broadcast %cst_37 : f32 to vector<54x2704xf32>
    %72 = arith.maximumf %60, %71 : vector<54x2704xf32>
    %73 = arith.mulf %60, %61 : vector<54x2704xf32>
    %74 = arith.subf %72, %73 : vector<54x2704xf32>
    %75 = arith.addf %74, %70 : vector<54x2704xf32>
    %cst_38 = arith.constant 0.000000e+00 : f32
    %76 = vector.broadcast %cst_38 : f32 to vector<54x2704xf32>
    %77 = arith.select %63, %75, %76 : vector<54x2704xi1>, vector<54x2704xf32>
    %78 = arith.subf %60, %61 : vector<54x2704xf32>
    %cst_39 = arith.constant dense<0.000000e+00> : vector<54xf32>
    %79 = vector.multi_reduction <add>, %77, %cst_39 [1] : vector<54x2704xf32> to vector<54xf32>
    %80 = vector.shape_cast %79 : vector<54xf32> to vector<54x1xf32>
    %81 = arith.mulf %78, %78 : vector<54x2704xf32>
    %cst_40 = arith.constant dense<0.000000e+00> : vector<54xf32>
    %82 = vector.multi_reduction <add>, %81, %cst_40 [1] : vector<54x2704xf32> to vector<54xf32>
    %83 = vector.shape_cast %82 : vector<54xf32> to vector<54x1xf32>
    %c0_41 = arith.constant 0 : index
    %c0_42 = arith.constant 0 : index
    %84 = vector.load %arg10[%c0_41, %c0_42] : memref<54x1xf32, #tpu.memory_space<vmem>>, vector<54x1xf32>
    tpu.vector_store %arg10[%c0_41, %c0_42], %80 {strides = array<i32>} : memref<54x1xf32, #tpu.memory_space<vmem>>, vector<54x1xf32>,
    %c0_43 = arith.constant 0 : index
    %c0_44 = arith.constant 0 : index
    %85 = vector.load %arg11[%c0_43, %c0_44] : memref<54x1xf32, #tpu.memory_space<vmem>>, vector<54x1xf32>
    tpu.vector_store %arg11[%c0_43, %c0_44], %83 {strides = array<i32>} : memref<54x1xf32, #tpu.memory_space<vmem>>, vector<54x1xf32>,
    return
  }
}

</mosaic_0001>

<llo_original>
// kernel: squeeze.53
$region0: #{squeeze.53}
  %s0 = inlined_call_operand.vmem [shape: f32[54], index: 0, kind: input, shape index: {}]
  %s1 = inlined_call_operand.vmem [shape: f32[6,9], index: 1, kind: output, shape index: {}]
  $region1: #{squeeze.53} parent=0
    #allocation0 [shape = 'u8[4096]{0}', space=vmem, size = 0x1000, scoped, tag = 'scoped mem for input reshape']
    %s3 = sshllo.u32 0, 1
    %v4 = vld [vmem:[%s0] sm:%s3]
    %5 = vst [vmem:[#allocation0] sm:%s3] %v4
    %v6 = vld [vmem:[#allocation0] sm:$0x1]
    %vm7 = vcmask 72704
    %8 = vst.msk [vmem:[%s1] sm:$0x1] %vm7, %v6
    %v9 = vld [vmem:[#allocation0] sm:$0x1]
    %10 = vrot.lane.b32.xlu0 %v9, 119
    %v11 = vpop.permute.xlu0 %10
    %vm12 = vcmask 72704
    %s13 = scalar_lea.vmem %s1, 1
    %14 = vst.msk [vmem:[%s13] sm:$0x1] %vm12, %v11
    %v15 = vld [vmem:[#allocation0] sm:$0x1]
    %16 = vrot.lane.b32.xlu0 %v15, 110
    %v17 = vpop.permute.xlu0 %16
    %vm18 = vcmask 72704
    %s19 = scalar_lea.vmem %s1, 2
    %20 = vst.msk [vmem:[%s19] sm:$0x1] %vm18, %v17
    %v21 = vld [vmem:[#allocation0] sm:$0x1]
    %22 = vrot.lane.b32.xlu0 %v21, 101
    %v23 = vpop.permute.xlu0 %22
    %vm24 = vcmask 72704
    %s25 = scalar_lea.vmem %s1, 3
    %26 = vst.msk [vmem:[%s25] sm:$0x1] %vm24, %v23
    %v27 = vld [vmem:[#allocation0] sm:$0x1]
    %28 = vrot.lane.b32.xlu0 %v27, 92
    %v29 = vpop.permute.xlu0 %28
    %vm30 = vcmask 72704
    %s31 = scalar_lea.vmem %s1, 4
    %32 = vst.msk [vmem:[%s31] sm:$0x1] %vm30, %v29
    %v33 = vld [vmem:[#allocation0] sm:$0x1]
    %34 = vrot.lane.b32.xlu0 %v33, 83
    %v35 = vpop.permute.xlu0 %34
    %vm36 = vcmask 72704
    %s37 = scalar_lea.vmem %s1, 5
    %38 = vst.msk [vmem:[%s37] sm:$0x1] %vm36, %v35

// kernel: _device_forward.1
$region0: #{_device_forward.1}
  #allocation0 [shape = 'u32[]', space=smem, size = 0x4, offset = 0x4, fixed_abs, tag = 'smem constant byte address 0x4 - core index']
  #allocation1 [shape = 'u32[144,128]{1,0:T(1,128)}', space=vmem, size = 0x12000, scoped, tag = 'internal scratch']
  #allocation2 [shape = 'f32[54,2704]{1,0:T(8,128)}', space=vmem, size = 0x9a000, scoped, tag = 'scratch operand']
  #allocation3 [shape = 'f32[54,2704]{1,0:T(8,128)}', space=vmem, size = 0x9a000, scoped, tag = 'scratch operand']
  #allocation4 [shape = 's32[2]{0}', space=sflag, size = 0x8, scoped, tag = 'scratch operand']
  #allocation12 [shape = 's32[]', space=sflag, size = 0x4, offset = 0, fixed_abs, tag = 'sflag constant byte address 0x0 - dummy sync flag']
  #allocation13 [shape = 's32[]', space=sflag, size = 0x4, offset = 0, fixed_abs, tag = 'sflag constant byte address 0x0 - dummy sync flag']
  #allocation14 [shape = 'u32[]', space=smem, size = 0x4, offset = 0x44, fixed_abs, tag = 'smem constant byte address 0x44 - assertion arg 0']
  #allocation15 [shape = 'u32[]', space=smem, size = 0x4, offset = 0x48, fixed_abs, tag = 'smem constant byte address 0x48 - assertion arg 1']
  #allocation16 [shape = 's32[]', space=sflag, size = 0x4, offset = 0, fixed_abs, tag = 'sflag constant byte address 0x0 - dummy sync flag']
  #allocation17 [shape = 's32[]', space=sflag, size = 0x4, offset = 0, fixed_abs, tag = 'sflag constant byte address 0x0 - dummy sync flag']
  %s0 = inlined_call_operand.hbm [shape: f32[54,169], index: 0, kind: input, shape index: {}]
  %s1 = inlined_call_operand.hbm [shape: f32[54,169], index: 1, kind: input, shape index: {}]
  %s2 = inlined_call_operand.hbm [shape: f32[54,676], index: 2, kind: input, shape index: {}]
  %s3 = inlined_call_operand.hbm [shape: f32[54,676], index: 3, kind: input, shape index: {}]
  %s4 = inlined_call_operand.hbm [shape: f32[54,2704], index: 4, kind: input, shape index: {}]
  %s5 = inlined_call_operand.hbm [shape: f32[54,2704], index: 5, kind: input, shape index: {}]
  %s6 = inlined_call_operand.vmem [shape: f32[54,1], index: 6, kind: output, shape index: {0}]
  %s7 = inlined_call_operand.vmem [shape: f32[54,1], index: 7, kind: output, shape index: {1}]
  %s8 = inlined_call_operand.vmem [shape: f32[54,1], index: 8, kind: output, shape index: {2}]
  %s9 = inlined_call_operand.vmem [shape: f32[54,1], index: 9, kind: output, shape index: {3}]
  %s10 = inlined_call_operand.vmem [shape: f32[54,1], index: 10, kind: output, shape index: {4}]
  %s11 = inlined_call_operand.vmem [shape: f32[54,1], index: 11, kind: output, shape index: {5}]
  %12 = xla_tuple %s6, %s7, %s8, %s9, %s10, %s11
  %s13 = sld [smem:[#allocation0]]
  $region90: #{_device_forward.1} parent=0
    _
  %s15 = ssub.s32 1, %s13
  %s16 = scalar_select 0, %s15, %s13
  $region1: #{_device_forward.1} parent=0
    #allocation5 [shape = 'u8[57344]{0}', space=vmem, size = 0xe000, scoped, tag = 'input window, operand 0, single buffered']
    #allocation6 [shape = 's32[1]{0}', space=sflag, size = 0x4, scoped, tag = 'scoped memory for _device_forward.1']
    #allocation7 [shape = 'u8[57344]{0}', space=vmem, size = 0xe000, scoped, tag = 'input window, operand 1, single buffered']
    #allocation8 [shape = 's32[1]{0}', space=sflag, size = 0x4, scoped, tag = 'scoped memory for _device_forward.1']
    #allocation9 [shape = 'u8[172032]{0}', space=vmem, size = 0x2a000, scoped, tag = 'input window, operand 2, single buffered']
    #allocation10 [shape = 'u8[172032]{0}', space=vmem, size = 0x2a000, scoped, tag = 'input window, operand 3, single buffered']
    #allocation11 [shape = 's32[1]{0}', space=sflag, size = 0x4, scoped, tag = 'scoped memory for _device_forward.1']
    %17 = vsyncpa [#allocation6], 0
    %18 = vsyncpa [#allocation8], 0
    %19 = vsyncpa [#allocation11], 0
    // Predicated region
    $region2: #{_device_forward.1} parent=1 // pred_check
      _
    $region3: #{_device_forward.1} parent=1 // pred_check_branch
      %21 = sbr.rel (0) target = $region5
    $region4: #{_device_forward.1} parent=1 // pred_region
      %s23 = ssub.s32 1792, 1792
      %24 = vsyncadd [#allocation6], %s23
      %s25 = sshll.u32 [#allocation5], 4
      %s26 = int_to_ptr.vmem [resolvable:$true] %s25
      %31 = dma.hbm_to_vmem [thread:$0]  %s0, 1792, %s26, [#allocation6], 256, 256, 16
    $region5: #{_device_forward.1} parent=1 // pred_fallthru
      _
    // Predicated region
    $region6: #{_device_forward.1} parent=1 // pred_check
      _
    $region7: #{_device_forward.1} parent=1 // pred_check_branch
      %33 = sbr.rel (0) target = $region9
    $region8: #{_device_forward.1} parent=1 // pred_region
      %s35 = ssub.s32 1792, 1792
      %36 = vsyncadd [#allocation8], %s35
      %s37 = sshll.u32 [#allocation7], 4
      %s38 = int_to_ptr.vmem [resolvable:$true] %s37
      %43 = dma.hbm_to_vmem [thread:$0]  %s1, 1792, %s38, [#allocation8], 256, 256, 16
    $region9: #{_device_forward.1} parent=1 // pred_fallthru
      _
    // Predicated region
    $region10: #{_device_forward.1} parent=1 // pred_check
      _
    $region11: #{_device_forward.1} parent=1 // pred_check_branch
      %45 = sbr.rel (0) target = $region13
    $region12: #{_device_forward.1} parent=1 // pred_region
      %s47 = ssub.s32 5376, 5376
      %48 = vsyncadd [#allocation8], %s47
      %s49 = sshll.u32 [#allocation9], 4
      %s50 = int_to_ptr.vmem [resolvable:$true] %s49
      %55 = dma.hbm_to_vmem [thread:$0]  %s2, 5376, %s50, [#allocation8], 768, 768, 48
    $region13: #{_device_forward.1} parent=1 // pred_fallthru
      _
    // Predicated region
    $region14: #{_device_forward.1} parent=1 // pred_check
      _
    $region15: #{_device_forward.1} parent=1 // pred_check_branch
      %57 = sbr.rel (0) target = $region17
    $region16: #{_device_forward.1} parent=1 // pred_region
      %s59 = ssub.s32 5376, 5376
      %60 = vsyncadd [#allocation11], %s59
      %s61 = sshll.u32 [#allocation10], 4
      %s62 = int_to_ptr.vmem [resolvable:$true] %s61
      %67 = dma.hbm_to_vmem [thread:$0]  %s3, 5376, %s62, [#allocation11], 768, 768, 48
    $region17: #{_device_forward.1} parent=1 // pred_fallthru
      _
    // Predicated region
    $region18: #{_device_forward.1} parent=1 // pred_check
      _
    $region19: #{_device_forward.1} parent=1 // pred_check_branch
      %69 = sbr.rel (0) target = $region21
    $region20: #{_device_forward.1} parent=1 // pred_region
      %70 = dma.done [#allocation6], 1792
    $region21: #{_device_forward.1} parent=1 // pred_fallthru
      _
    // Predicated region
    $region22: #{_device_forward.1} parent=1 // pred_check
      _
    $region23: #{_device_forward.1} parent=1 // pred_check_branch
      %72 = sbr.rel (0) target = $region25
    $region24: #{_device_forward.1} parent=1 // pred_region
      %73 = dma.done [#allocation8], 1792
    $region25: #{_device_forward.1} parent=1 // pred_fallthru
      _
    // Predicated region
    $region26: #{_device_forward.1} parent=1 // pred_check
      _
    $region27: #{_device_forward.1} parent=1 // pred_check_branch
      %75 = sbr.rel (0) target = $region29
    $region28: #{_device_forward.1} parent=1 // pred_region
      %76 = dma.done [#allocation8], 5376
    $region29: #{_device_forward.1} parent=1 // pred_fallthru
      _
    // Predicated region
    $region30: #{_device_forward.1} parent=1 // pred_check
      _
    $region31: #{_device_forward.1} parent=1 // pred_check_branch
      %78 = sbr.rel (0) target = $region33
    $region32: #{_device_forward.1} parent=1 // pred_region
      %79 = dma.done [#allocation11], 5376
    $region33: #{_device_forward.1} parent=1 // pred_fallthru
      _
    // Predicated region
    $region34: #{_device_forward.1} parent=1 // pred_check
      _
    $region35: #{_device_forward.1} parent=1 // pred_check_branch
      %81 = sbr.rel target = $region37
    $region36: #{_device_forward.1} parent=1 // pred_region
      %82 = sst [smem:[#allocation14]] [#allocation13]
      %83 = sst [smem:[#allocation15]] [#allocation12]
    $region37: #{_device_forward.1} parent=1 // pred_fallthru
      _
    %85 = shalt.err (0)
    %s87 = sshll.u32 [#allocation2], 4
    %s88 = int_to_ptr.vmem [resolvable:$true] %s87
    %90 = dma.hbm_to_vmem [thread:$0]  %s4, 19712, %s88, [#allocation4]
    %s91 = scalar_lea.sflag [#allocation4], 1
    // Predicated region
    $region38: #{_device_forward.1} parent=1 // pred_check
      _
    $region39: #{_device_forward.1} parent=1 // pred_check_branch
      %93 = sbr.rel target = $region41
    $region40: #{_device_forward.1} parent=1 // pred_region
      %94 = sst [smem:[#allocation14]] [#allocation17]
      %95 = sst [smem:[#allocation15]] [#allocation16]
    $region41: #{_device_forward.1} parent=1 // pred_fallthru
      _
    %97 = shalt.err (0)
    %s99 = sshll.u32 [#allocation3], 4
    %s100 = int_to_ptr.vmem [resolvable:$true] %s99
    %102 = dma.hbm_to_vmem [thread:$0]  %s5, 19712, %s100, %s91
    %v103 = vld [vmem:[#allocation5] sm:$0xff]
    %v104 = vld [vmem:[#allocation5 + $0x8] sm:$0xff]
    %v105 = vld [vmem:[#allocation5 + $0x10] sm:$0xff]
    %v106 = vld [vmem:[#allocation5 + $0x18] sm:$0xff]
    %v107 = vld [vmem:[#allocation5 + $0x20] sm:$0xff]
    %v108 = vld [vmem:[#allocation5 + $0x28] sm:$0xff]
    %v109 = vld [vmem:[#allocation5 + $0x30] sm:$0xff]
    %v110 = vld [vmem:[#allocation5 + $0x38] sm:$0xff]
    %v111 = vld [vmem:[#allocation5 + $0x40] sm:$0xff]
    %v112 = vld [vmem:[#allocation5 + $0x48] sm:$0xff]
    %v113 = vld [vmem:[#allocation5 + $0x50] sm:$0xff]
    %v114 = vld [vmem:[#allocation5 + $0x58] sm:$0xff]
    %v115 = vld [vmem:[#allocation5 + $0x60] sm:$0x3f]
    %v116 = vld [vmem:[#allocation5 + $0x68] sm:$0x3f]
    %v117 = vld [vmem:[#allocation7] sm:$0xff]
    %v118 = vld [vmem:[#allocation7 + $0x8] sm:$0xff]
    %v119 = vld [vmem:[#allocation7 + $0x10] sm:$0xff]
    %v120 = vld [vmem:[#allocation7 + $0x18] sm:$0xff]
    %v121 = vld [vmem:[#allocation7 + $0x20] sm:$0xff]
    %v122 = vld [vmem:[#allocation7 + $0x28] sm:$0xff]
    %v123 = vld [vmem:[#allocation7 + $0x30] sm:$0xff]
    %v124 = vld [vmem:[#allocation7 + $0x38] sm:$0xff]
    %v125 = vld [vmem:[#allocation7 + $0x40] sm:$0xff]
    %v126 = vld [vmem:[#allocation7 + $0x48] sm:$0xff]
    %v127 = vld [vmem:[#allocation7 + $0x50] sm:$0xff]
    %v128 = vld [vmem:[#allocation7 + $0x58] sm:$0xff]
    %v129 = vld [vmem:[#allocation7 + $0x60] sm:$0x3f]
    %v130 = vld [vmem:[#allocation7 + $0x68] sm:$0x3f]
    %vm131 = vcmp.ge.f32.partialorder %v117, 0.0
    %vm132 = vcmp.ge.f32.partialorder %v118, 0.0
    %vm133 = vcmp.ge.f32.partialorder %v119, 0.0
    %vm134 = vcmp.ge.f32.partialorder %v120, 0.0
    %vm135 = vcmp.ge.f32.partialorder %v121, 0.0
    %vm136 = vcmp.ge.f32.partialorder %v122, 0.0
    %vm137 = vcmp.ge.f32.partialorder %v123, 0.0
    %vm138 = vcmp.ge.f32.partialorder %v124, 0.0
    %vm139 = vcmp.ge.f32.partialorder %v125, 0.0
    %vm140 = vcmp.ge.f32.partialorder %v126, 0.0
    %vm141 = vcmp.ge.f32.partialorder %v127, 0.0
    %vm142 = vcmp.ge.f32.partialorder %v128, 0.0
    %vm143 = vcmp.ge.f32.partialorder %v129, 0.0
    %vm144 = vcmp.ge.f32.partialorder %v130, 0.0
    %v145 = vand.u32 2147483647, %v103
    %v146 = vand.u32 2147483647, %v104
    %v147 = vand.u32 2147483647, %v105
    %v148 = vand.u32 2147483647, %v106
    %v149 = vand.u32 2147483647, %v107
    %v150 = vand.u32 2147483647, %v108
    %v151 = vand.u32 2147483647, %v109
    %v152 = vand.u32 2147483647, %v110
    %v153 = vand.u32 2147483647, %v111
    %v154 = vand.u32 2147483647, %v112
    %v155 = vand.u32 2147483647, %v113
    %v156 = vand.u32 2147483647, %v114
    %v157 = vand.u32 2147483647, %v115
    %v158 = vand.u32 2147483647, %v116
    %v159 = vsub.f32 0.0, %v145
    %v160 = vsub.f32 0.0, %v146
    %v161 = vsub.f32 0.0, %v147
    %v162 = vsub.f32 0.0, %v148
    %v163 = vsub.f32 0.0, %v149
    %v164 = vsub.f32 0.0, %v150
    %v165 = vsub.f32 0.0, %v151
    %v166 = vsub.f32 0.0, %v152
    %v167 = vsub.f32 0.0, %v153
    %v168 = vsub.f32 0.0, %v154
    %v169 = vsub.f32 0.0, %v155
    %v170 = vsub.f32 0.0, %v156
    %v171 = vsub.f32 0.0, %v157
    %v172 = vsub.f32 0.0, %v158
    %v173 = vmul.f32 %v159, 1.442695
    %v174 = vpow.pop %v173
    %v175 = vmul.f32 %v160, 1.442695
    %v176 = vpow.pop %v175
    %v177 = vmul.f32 %v161, 1.442695
    %v178 = vpow.pop %v177
    %v179 = vmul.f32 %v162, 1.442695
    %v180 = vpow.pop %v179
    %v181 = vmul.f32 %v163, 1.442695
    %v182 = vpow.pop %v181
    %v183 = vmul.f32 %v164, 1.442695
    %v184 = vpow.pop %v183
    %v185 = vmul.f32 %v165, 1.442695
    %v186 = vpow.pop %v185
    %v187 = vmul.f32 %v166, 1.442695
    %v188 = vpow.pop %v187
    %v189 = vmul.f32 %v167, 1.442695
    %v190 = vpow.pop %v189
    %v191 = vmul.f32 %v168, 1.442695
    %v192 = vpow.pop %v191
    %v193 = vmul.f32 %v169, 1.442695
    %v194 = vpow.pop %v193
    %v195 = vmul.f32 %v170, 1.442695
    %v196 = vpow.pop %v195
    %v197 = vmul.f32 %v171, 1.442695
    %v198 = vpow.pop %v197
    %v199 = vmul.f32 %v172, 1.442695
    %v200 = vpow.pop %v199
    %v201 = vadd.f32 %v174, 1.0
    %v202 = vadd.f32 %v176, 1.0
    %v203 = vadd.f32 %v178, 1.0
    %v204 = vadd.f32 %v180, 1.0
    %v205 = vadd.f32 %v182, 1.0
    %v206 = vadd.f32 %v184, 1.0
    %v207 = vadd.f32 %v186, 1.0
    %v208 = vadd.f32 %v188, 1.0
    %v209 = vadd.f32 %v190, 1.0
    %v210 = vadd.f32 %v192, 1.0
    %v211 = vadd.f32 %v194, 1.0
    %v212 = vadd.f32 %v196, 1.0
    %v213 = vadd.f32 %v198, 1.0
    %v214 = vadd.f32 %v200, 1.0
    %v215 = vlog2.pop %v201
    %v216 = vmul.f32 %v215, 0.6931472
    %v217 = vlog2.pop %v202
    %v218 = vmul.f32 %v217, 0.6931472
    %v219 = vlog2.pop %v203
    %v220 = vmul.f32 %v219, 0.6931472
    %v221 = vlog2.pop %v204
    %v222 = vmul.f32 %v221, 0.6931472
    %v223 = vlog2.pop %v205
    %v224 = vmul.f32 %v223, 0.6931472
    %v225 = vlog2.pop %v206
    %v226 = vmul.f32 %v225, 0.6931472
    %v227 = vlog2.pop %v207
    %v228 = vmul.f32 %v227, 0.6931472
    %v229 = vlog2.pop %v208
    %v230 = vmul.f32 %v229, 0.6931472
    %v231 = vlog2.pop %v209
    %v232 = vmul.f32 %v231, 0.6931472
    %v233 = vlog2.pop %v210
    %v234 = vmul.f32 %v233, 0.6931472
    %v235 = vlog2.pop %v211
    %v236 = vmul.f32 %v235, 0.6931472
    %v237 = vlog2.pop %v212
    %v238 = vmul.f32 %v237, 0.6931472
    %v239 = vlog2.pop %v213
    %v240 = vmul.f32 %v239, 0.6931472
    %v241 = vlog2.pop %v214
    %v242 = vmul.f32 %v241, 0.6931472
    %v243 = vmax.f32 %v103, 0.0
    %v244 = vmax.f32 %v104, 0.0
    %v245 = vmax.f32 %v105, 0.0
    %v246 = vmax.f32 %v106, 0.0
    %v247 = vmax.f32 %v107, 0.0
    %v248 = vmax.f32 %v108, 0.0
    %v249 = vmax.f32 %v109, 0.0
    %v250 = vmax.f32 %v110, 0.0
    %v251 = vmax.f32 %v111, 0.0
    %v252 = vmax.f32 %v112, 0.0
    %v253 = vmax.f32 %v113, 0.0
    %v254 = vmax.f32 %v114, 0.0
    %v255 = vmax.f32 %v115, 0.0
    %v256 = vmax.f32 %v116, 0.0
    %v257 = vmul.f32 %v103, %v117
    %v258 = vmul.f32 %v104, %v118
    %v259 = vmul.f32 %v105, %v119
    %v260 = vmul.f32 %v106, %v120
    %v261 = vmul.f32 %v107, %v121
    %v262 = vmul.f32 %v108, %v122
    %v263 = vmul.f32 %v109, %v123
    %v264 = vmul.f32 %v110, %v124
    %v265 = vmul.f32 %v111, %v125
    %v266 = vmul.f32 %v112, %v126
    %v267 = vmul.f32 %v113, %v127
    %v268 = vmul.f32 %v114, %v128
    %v269 = vmul.f32 %v115, %v129
    %v270 = vmul.f32 %v116, %v130
    %v271 = vsub.f32 %v243, %v257
    %v272 = vsub.f32 %v244, %v258
    %v273 = vsub.f32 %v245, %v259
    %v274 = vsub.f32 %v246, %v260
    %v275 = vsub.f32 %v247, %v261
    %v276 = vsub.f32 %v248, %v262
    %v277 = vsub.f32 %v249, %v263
    %v278 = vsub.f32 %v250, %v264
    %v279 = vsub.f32 %v251, %v265
    %v280 = vsub.f32 %v252, %v266
    %v281 = vsub.f32 %v253, %v267
    %v282 = vsub.f32 %v254, %v268
    %v283 = vsub.f32 %v255, %v269
    %v284 = vsub.f32 %v256, %v270
    %v285 = vadd.f32 %v271, %v216
    %v286 = vadd.f32 %v272, %v218
    %v287 = vadd.f32 %v273, %v220
    %v288 = vadd.f32 %v274, %v222
    %v289 = vadd.f32 %v275, %v224
    %v290 = vadd.f32 %v276, %v226
    %v291 = vadd.f32 %v277, %v228
    %v292 = vadd.f32 %v278, %v230
    %v293 = vadd.f32 %v279, %v232
    %v294 = vadd.f32 %v280, %v234
    %v295 = vadd.f32 %v281, %v236
    %v296 = vadd.f32 %v282, %v238
    %v297 = vadd.f32 %v283, %v240
    %v298 = vadd.f32 %v284, %v242
    %v299 = vsel %vm131, %v285, 0.0
    %v300 = vsel %vm132, %v286, 0.0
    %v301 = vsel %vm133, %v287, 0.0
    %v302 = vsel %vm134, %v288, 0.0
    %v303 = vsel %vm135, %v289, 0.0
    %v304 = vsel %vm136, %v290, 0.0
    %v305 = vsel %vm137, %v291, 0.0
    %v306 = vsel %vm138, %v292, 0.0
    %v307 = vsel %vm139, %v293, 0.0
    %v308 = vsel %vm140, %v294, 0.0
    %v309 = vsel %vm141, %v295, 0.0
    %v310 = vsel %vm142, %v296, 0.0
    %v311 = vsel %vm143, %v297, 0.0
    %v312 = vsel %vm144, %v298, 0.0
    %v313 = vsub.f32 %v103, %v117
    %v314 = vsub.f32 %v104, %v118
    %v315 = vsub.f32 %v105, %v119
    %v316 = vsub.f32 %v106, %v120
    %v317 = vsub.f32 %v107, %v121
    %v318 = vsub.f32 %v108, %v122
    %v319 = vsub.f32 %v109, %v123
    %v320 = vsub.f32 %v110, %v124
    %v321 = vsub.f32 %v111, %v125
    %v322 = vsub.f32 %v112, %v126
    %v323 = vsub.f32 %v113, %v127
    %v324 = vsub.f32 %v114, %v128
    %v325 = vsub.f32 %v115, %v129
    %v326 = vsub.f32 %v116, %v130
    %vm327 = vcmask 334848
    %v328 = vsel %vm327, %v300, 0.0
    %v329 = vadd.f32 %v299, %v328
    %330 = vadd.xlane.f32.xlu0 %v329
    %v331 = vpop.xlane.xlu0 %330
    %v332 = vsel %vm327, %v302, 0.0
    %v333 = vadd.f32 %v301, %v332
    %334 = vadd.xlane.f32.xlu0 %v333
    %v335 = vpop.xlane.xlu0 %334
    %v336 = vsel %vm327, %v304, 0.0
    %v337 = vadd.f32 %v303, %v336
    %338 = vadd.xlane.f32.xlu0 %v337
    %v339 = vpop.xlane.xlu0 %338
    %v340 = vsel %vm327, %v306, 0.0
    %v341 = vadd.f32 %v305, %v340
    %342 = vadd.xlane.f32.xlu0 %v341
    %v343 = vpop.xlane.xlu0 %342
    %v344 = vsel %vm327, %v308, 0.0
    %v345 = vadd.f32 %v307, %v344
    %346 = vadd.xlane.f32.xlu0 %v345
    %v347 = vpop.xlane.xlu0 %346
    %v348 = vsel %vm327, %v310, 0.0
    %v349 = vadd.f32 %v309, %v348
    %350 = vadd.xlane.f32.xlu0 %v349
    %v351 = vpop.xlane.xlu0 %350
    %vm352 = vcmask 1045504
    %v353 = vsel %vm352, %v311, 0.0
    %vm354 = vcmask 332800
    %v355 = vsel %vm354, %v312, 0.0
    %v356 = vadd.f32 %v353, %v355
    %357 = vadd.xlane.f32.xlu0 %v356
    %v358 = vpop.xlane.xlu0 %357
    %v359 = vmul.f32 %v313, %v313
    %v360 = vmul.f32 %v314, %v314
    %v361 = vmul.f32 %v315, %v315
    %v362 = vmul.f32 %v316, %v316
    %v363 = vmul.f32 %v317, %v317
    %v364 = vmul.f32 %v318, %v318
    %v365 = vmul.f32 %v319, %v319
    %v366 = vmul.f32 %v320, %v320
    %v367 = vmul.f32 %v321, %v321
    %v368 = vmul.f32 %v322, %v322
    %v369 = vmul.f32 %v323, %v323
    %v370 = vmul.f32 %v324, %v324
    %v371 = vmul.f32 %v325, %v325
    %v372 = vmul.f32 %v326, %v326
    %v373 = vsel %vm327, %v360, 0.0
    %v374 = vadd.f32 %v359, %v373
    %375 = vadd.xlane.f32.xlu0 %v374
    %v376 = vpop.xlane.xlu0 %375
    %v377 = vsel %vm327, %v362, 0.0
    %v378 = vadd.f32 %v361, %v377
    %379 = vadd.xlane.f32.xlu0 %v378
    %v380 = vpop.xlane.xlu0 %379
    %v381 = vsel %vm327, %v364, 0.0
    %v382 = vadd.f32 %v363, %v381
    %383 = vadd.xlane.f32.xlu0 %v382
    %v384 = vpop.xlane.xlu0 %383
    %v385 = vsel %vm327, %v366, 0.0
    %v386 = vadd.f32 %v365, %v385
    %387 = vadd.xlane.f32.xlu0 %v386
    %v388 = vpop.xlane.xlu0 %387
    %v389 = vsel %vm327, %v368, 0.0
    %v390 = vadd.f32 %v367, %v389
    %391 = vadd.xlane.f32.xlu0 %v390
    %v392 = vpop.xlane.xlu0 %391
    %v393 = vsel %vm327, %v370, 0.0
    %v394 = vadd.f32 %v369, %v393
    %395 = vadd.xlane.f32.xlu0 %v394
    %v396 = vpop.xlane.xlu0 %395
    %v397 = vsel %vm352, %v371, 0.0
    %v398 = vsel %vm354, %v372, 0.0
    %v399 = vadd.f32 %v397, %v398
    %400 = vadd.xlane.f32.xlu0 %v399
    %v401 = vpop.xlane.xlu0 %400
    %vm402 = vcmask 7168
    %403 = vst.msk [vmem:[%s6] sm:$0xff] %vm402, %v331
    %404 = vst.msk [vmem:[%s6 + $0x8] sm:$0xff] %vm402, %v335
    %405 = vst.msk [vmem:[%s6 + $0x10] sm:$0xff] %vm402, %v339
    %406 = vst.msk [vmem:[%s6 + $0x18] sm:$0xff] %vm402, %v343
    %407 = vst.msk [vmem:[%s6 + $0x20] sm:$0xff] %vm402, %v347
    %408 = vst.msk [vmem:[%s6 + $0x28] sm:$0xff] %vm402, %v351
    %vm409 = vcmask 5120
    %410 = vst.msk [vmem:[%s6 + $0x30] sm:$0x3f] %vm409, %v358
    %411 = vst.msk [vmem:[%s7] sm:$0xff] %vm402, %v376
    %412 = vst.msk [vmem:[%s7 + $0x8] sm:$0xff] %vm402, %v380
    %413 = vst.msk [vmem:[%s7 + $0x10] sm:$0xff] %vm402, %v384
    %414 = vst.msk [vmem:[%s7 + $0x18] sm:$0xff] %vm402, %v388
    %415 = vst.msk [vmem:[%s7 + $0x20] sm:$0xff] %vm402, %v392
    %416 = vst.msk [vmem:[%s7 + $0x28] sm:$0xff] %vm402, %v396
    %417 = vst.msk [vmem:[%s7 + $0x30] sm:$0x3f] %vm409, %v401
    %v418 = vld [vmem:[#allocation9] sm:$0xff]
    %v419 = vld [vmem:[#allocation9 + $0x8] sm:$0xff]
    %v420 = vld [vmem:[#allocation9 + $0x10] sm:$0xff]
    %v421 = vld [vmem:[#allocation9 + $0x18] sm:$0xff]
    %v422 = vld [vmem:[#allocation9 + $0x20] sm:$0xff]
    %v423 = vld [vmem:[#allocation9 + $0x28] sm:$0xff]
    %v424 = vld [vmem:[#allocation9 + $0x30] sm:$0xff]
    %v425 = vld [vmem:[#allocation9 + $0x38] sm:$0xff]
    %v426 = vld [vmem:[#allocation9 + $0x40] sm:$0xff]
    %v427 = vld [vmem:[#allocation9 + $0x48] sm:$0xff]
    %v428 = vld [vmem:[#allocation9 + $0x50] sm:$0xff]
    %v429 = vld [vmem:[#allocation9 + $0x58] sm:$0xff]
    %v430 = vld [vmem:[#allocation9 + $0x60] sm:$0xff]
    %v431 = vld [vmem:[#allocation9 + $0x68] sm:$0xff]
    %v432 = vld [vmem:[#allocation9 + $0x70] sm:$0xff]
    %v433 = vld [vmem:[#allocation9 + $0x78] sm:$0xff]
    %v434 = vld [vmem:[#allocation9 + $0x80] sm:$0xff]
    %v435 = vld [vmem:[#allocation9 + $0x88] sm:$0xff]
    %v436 = vld [vmem:[#allocation9 + $0x90] sm:$0xff]
    %v437 = vld [vmem:[#allocation9 + $0x98] sm:$0xff]
    %v438 = vld [vmem:[#allocation9 + $0xa0] sm:$0xff]
    %v439 = vld [vmem:[#allocation9 + $0xa8] sm:$0xff]
    %v440 = vld [vmem:[#allocation9 + $0xb0] sm:$0xff]
    %v441 = vld [vmem:[#allocation9 + $0xb8] sm:$0xff]
    %v442 = vld [vmem:[#allocation9 + $0xc0] sm:$0xff]
    %v443 = vld [vmem:[#allocation9 + $0xc8] sm:$0xff]
    %v444 = vld [vmem:[#allocation9 + $0xd0] sm:$0xff]
    %v445 = vld [vmem:[#allocation9 + $0xd8] sm:$0xff]
    %v446 = vld [vmem:[#allocation9 + $0xe0] sm:$0xff]
    %v447 = vld [vmem:[#allocation9 + $0xe8] sm:$0xff]
    %v448 = vld [vmem:[#allocation9 + $0xf0] sm:$0xff]
    %v449 = vld [vmem:[#allocation9 + $0xf8] sm:$0xff]
    %v450 = vld [vmem:[#allocation9 + $0x100] sm:$0xff]
    %v451 = vld [vmem:[#allocation9 + $0x108] sm:$0xff]
    %v452 = vld [vmem:[#allocation9 + $0x110] sm:$0xff]
    %v453 = vld [vmem:[#allocation9 + $0x118] sm:$0xff]
    %v454 = vld [vmem:[#allocation9 + $0x120] sm:$0x3f]
    %v455 = vld [vmem:[#allocation9 + $0x128] sm:$0x3f]
    %v456 = vld [vmem:[#allocation9 + $0x130] sm:$0x3f]
    %v457 = vld [vmem:[#allocation9 + $0x138] sm:$0x3f]
    %v458 = vld [vmem:[#allocation9 + $0x140] sm:$0x3f]
    %v459 = vld [vmem:[#allocation9 + $0x148] sm:$0x3f]
    %v460 = vld [vmem:[#allocation10] sm:$0xff]
    %v461 = vld [vmem:[#allocation10 + $0x8] sm:$0xff]
    %v462 = vld [vmem:[#allocation10 + $0x10] sm:$0xff]
    %v463 = vld [vmem:[#allocation10 + $0x18] sm:$0xff]
    %v464 = vld [vmem:[#allocation10 + $0x20] sm:$0xff]
    %v465 = vld [vmem:[#allocation10 + $0x28] sm:$0xff]
    %v466 = vld [vmem:[#allocation10 + $0x30] sm:$0xff]
    %v467 = vld [vmem:[#allocation10 + $0x38] sm:$0xff]
    %v468 = vld [vmem:[#allocation10 + $0x40] sm:$0xff]
    %v469 = vld [vmem:[#allocation10 + $0x48] sm:$0xff]
    %v470 = vld [vmem:[#allocation10 + $0x50] sm:$0xff]
    %v471 = vld [vmem:[#allocation10 + $0x58] sm:$0xff]
    %v472 = vld [vmem:[#allocation10 + $0x60] sm:$0xff]
    %v473 = vld [vmem:[#allocation10 + $0x68] sm:$0xff]
    %v474 = vld [vmem:[#allocation10 + $0x70] sm:$0xff]
    %v475 = vld [vmem:[#allocation10 + $0x78] sm:$0xff]
    %v476 = vld [vmem:[#allocation10 + $0x80] sm:$0xff]
    %v477 = vld [vmem:[#allocation10 + $0x88] sm:$0xff]
    %v478 = vld [vmem:[#allocation10 + $0x90] sm:$0xff]
    %v479 = vld [vmem:[#allocation10 + $0x98] sm:$0xff]
    %v480 = vld [vmem:[#allocation10 + $0xa0] sm:$0xff]
    %v481 = vld [vmem:[#allocation10 + $0xa8] sm:$0xff]
    %v482 = vld [vmem:[#allocation10 + $0xb0] sm:$0xff]
    %v483 = vld [vmem:[#allocation10 + $0xb8] sm:$0xff]
    %v484 = vld [vmem:[#allocation10 + $0xc0] sm:$0xff]
    %v485 = vld [vmem:[#allocation10 + $0xc8] sm:$0xff]
    %v486 = vld [vmem:[#allocation10 + $0xd0] sm:$0xff]
    %v487 = vld [vmem:[#allocation10 + $0xd8] sm:$0xff]
    %v488 = vld [vmem:[#allocation10 + $0xe0] sm:$0xff]
    %v489 = vld [vmem:[#allocation10 + $0xe8] sm:$0xff]
    %v490 = vld [vmem:[#allocation10 + $0xf0] sm:$0xff]
    %v491 = vld [vmem:[#allocation10 + $0xf8] sm:$0xff]
    %v492 = vld [vmem:[#allocation10 + $0x100] sm:$0xff]
    %v493 = vld [vmem:[#allocation10 + $0x108] sm:$0xff]
    %v494 = vld [vmem:[#allocation10 + $0x110] sm:$0xff]
    %v495 = vld [vmem:[#allocation10 + $0x118] sm:$0xff]
    %v496 = vld [vmem:[#allocation10 + $0x120] sm:$0x3f]
    %v497 = vld [vmem:[#allocation10 + $0x128] sm:$0x3f]
    %v498 = vld [vmem:[#allocation10 + $0x130] sm:$0x3f]
    %v499 = vld [vmem:[#allocation10 + $0x138] sm:$0x3f]
    %v500 = vld [vmem:[#allocation10 + $0x140] sm:$0x3f]
    %v501 = vld [vmem:[#allocation10 + $0x148] sm:$0x3f]
    %vm502 = vcmp.ge.f32.partialorder %v460, 0.0
    %vm503 = vcmp.ge.f32.partialorder %v461, 0.0
    %vm504 = vcmp.ge.f32.partialorder %v462, 0.0
    %vm505 = vcmp.ge.f32.partialorder %v463, 0.0
    %vm506 = vcmp.ge.f32.partialorder %v464, 0.0
    %vm507 = vcmp.ge.f32.partialorder %v465, 0.0
    %vm508 = vcmp.ge.f32.partialorder %v466, 0.0
    %vm509 = vcmp.ge.f32.partialorder %v467, 0.0
    %vm510 = vcmp.ge.f32.partialorder %v468, 0.0
    %vm511 = vcmp.ge.f32.partialorder %v469, 0.0
    %vm512 = vcmp.ge.f32.partialorder %v470, 0.0
    %vm513 = vcmp.ge.f32.partialorder %v471, 0.0
    %vm514 = vcmp.ge.f32.partialorder %v472, 0.0
    %vm515 = vcmp.ge.f32.partialorder %v473, 0.0
    %vm516 = vcmp.ge.f32.partialorder %v474, 0.0
    %vm517 = vcmp.ge.f32.partialorder %v475, 0.0
    %vm518 = vcmp.ge.f32.partialorder %v476, 0.0
    %vm519 = vcmp.ge.f32.partialorder %v477, 0.0
    %vm520 = vcmp.ge.f32.partialorder %v478, 0.0
    %vm521 = vcmp.ge.f32.partialorder %v479, 0.0
    %vm522 = vcmp.ge.f32.partialorder %v480, 0.0
    %vm523 = vcmp.ge.f32.partialorder %v481, 0.0
    %vm524 = vcmp.ge.f32.partialorder %v482, 0.0
    %vm525 = vcmp.ge.f32.partialorder %v483, 0.0
    %vm526 = vcmp.ge.f32.partialorder %v484, 0.0
    %vm527 = vcmp.ge.f32.partialorder %v485, 0.0
    %vm528 = vcmp.ge.f32.partialorder %v486, 0.0
    %vm529 = vcmp.ge.f32.partialorder %v487, 0.0
    %vm530 = vcmp.ge.f32.partialorder %v488, 0.0
    %vm531 = vcmp.ge.f32.partialorder %v489, 0.0
    %vm532 = vcmp.ge.f32.partialorder %v490, 0.0
    %vm533 = vcmp.ge.f32.partialorder %v491, 0.0
    %vm534 = vcmp.ge.f32.partialorder %v492, 0.0
    %vm535 = vcmp.ge.f32.partialorder %v493, 0.0
    %vm536 = vcmp.ge.f32.partialorder %v494, 0.0
    %vm537 = vcmp.ge.f32.partialorder %v495, 0.0
    %vm538 = vcmp.ge.f32.partialorder %v496, 0.0
    %vm539 = vcmp.ge.f32.partialorder %v497, 0.0
    %vm540 = vcmp.ge.f32.partialorder %v498, 0.0
    %vm541 = vcmp.ge.f32.partialorder %v499, 0.0
    %vm542 = vcmp.ge.f32.partialorder %v500, 0.0
    %vm543 = vcmp.ge.f32.partialorder %v501, 0.0
    %v544 = vand.u32 2147483647, %v418
    %v545 = vand.u32 2147483647, %v419
    %v546 = vand.u32 2147483647, %v420
    %v547 = vand.u32 2147483647, %v421
    %v548 = vand.u32 2147483647, %v422
    %v549 = vand.u32 2147483647, %v423
    %v550 = vand.u32 2147483647, %v424
    %v551 = vand.u32 2147483647, %v425
    %v552 = vand.u32 2147483647, %v426
    %v553 = vand.u32 2147483647, %v427
    %v554 = vand.u32 2147483647, %v428
    %v555 = vand.u32 2147483647, %v429
    %v556 = vand.u32 2147483647, %v430
    %v557 = vand.u32 2147483647, %v431
    %v558 = vand.u32 2147483647, %v432
    %v559 = vand.u32 2147483647, %v433
    %v560 = vand.u32 2147483647, %v434
    %v561 = vand.u32 2147483647, %v435
    %v562 = vand.u32 2147483647, %v436
    %v563 = vand.u32 2147483647, %v437
    %v564 = vand.u32 2147483647, %v438
    %v565 = vand.u32 2147483647, %v439
    %v566 = vand.u32 2147483647, %v440
    %v567 = vand.u32 2147483647, %v441
    %v568 = vand.u32 2147483647, %v442
    %v569 = vand.u32 2147483647, %v443
    %v570 = vand.u32 2147483647, %v444
    %v571 = vand.u32 2147483647, %v445
    %v572 = vand.u32 2147483647, %v446
    %v573 = vand.u32 2147483647, %v447
    %v574 = vand.u32 2147483647, %v448
    %v575 = vand.u32 2147483647, %v449
    %v576 = vand.u32 2147483647, %v450
    %v577 = vand.u32 2147483647, %v451
    %v578 = vand.u32 2147483647, %v452
    %v579 = vand.u32 2147483647, %v453
    %v580 = vand.u32 2147483647, %v454
    %v581 = vand.u32 2147483647, %v455
    %v582 = vand.u32 2147483647, %v456
    %v583 = vand.u32 2147483647, %v457
    %v584 = vand.u32 2147483647, %v458
    %v585 = vand.u32 2147483647, %v459
    %v586 = vsub.f32 0.0, %v544
    %v587 = vsub.f32 0.0, %v545
    %v588 = vsub.f32 0.0, %v546
    %v589 = vsub.f32 0.0, %v547
    %v590 = vsub.f32 0.0, %v548
    %v591 = vsub.f32 0.0, %v549
    %v592 = vsub.f32 0.0, %v550
    %v593 = vsub.f32 0.0, %v551
    %v594 = vsub.f32 0.0, %v552
    %v595 = vsub.f32 0.0, %v553
    %v596 = vsub.f32 0.0, %v554
    %v597 = vsub.f32 0.0, %v555
    %v598 = vsub.f32 0.0, %v556
    %v599 = vsub.f32 0.0, %v557
    %v600 = vsub.f32 0.0, %v558
    %v601 = vsub.f32 0.0, %v559
    %v602 = vsub.f32 0.0, %v560
    %v603 = vsub.f32 0.0, %v561
    %v604 = vsub.f32 0.0, %v562
    %v605 = vsub.f32 0.0, %v563
    %v606 = vsub.f32 0.0, %v564
    %v607 = vsub.f32 0.0, %v565
    %v608 = vsub.f32 0.0, %v566
    %v609 = vsub.f32 0.0, %v567
    %v610 = vsub.f32 0.0, %v568
    %v611 = vsub.f32 0.0, %v569
    %v612 = vsub.f32 0.0, %v570
    %v613 = vsub.f32 0.0, %v571
    %v614 = vsub.f32 0.0, %v572
    %v615 = vsub.f32 0.0, %v573
    %v616 = vsub.f32 0.0, %v574
    %v617 = vsub.f32 0.0, %v575
    %v618 = vsub.f32 0.0, %v576
    %v619 = vsub.f32 0.0, %v577
    %v620 = vsub.f32 0.0, %v578
    %v621 = vsub.f32 0.0, %v579
    %v622 = vsub.f32 0.0, %v580
    %v623 = vsub.f32 0.0, %v581
    %v624 = vsub.f32 0.0, %v582
    %v625 = vsub.f32 0.0, %v583
    %v626 = vsub.f32 0.0, %v584
    %v627 = vsub.f32 0.0, %v585
    %v628 = vmul.f32 %v586, 1.442695
    %v629 = vpow.pop %v628
    %v630 = vmul.f32 %v587, 1.442695
    %v631 = vpow.pop %v630
    %v632 = vmul.f32 %v588, 1.442695
    %v633 = vpow.pop %v632
    %v634 = vmul.f32 %v589, 1.442695
    %v635 = vpow.pop %v634
    %v636 = vmul.f32 %v590, 1.442695
    %v637 = vpow.pop %v636
    %v638 = vmul.f32 %v591, 1.442695
    %v639 = vpow.pop %v638
    %v640 = vmul.f32 %v592, 1.442695
    %v641 = vpow.pop %v640
    %v642 = vmul.f32 %v593, 1.442695
    %v643 = vpow.pop %v642
    %v644 = vmul.f32 %v594, 1.442695
    %v645 = vpow.pop %v644
    %v646 = vmul.f32 %v595, 1.442695
    %v647 = vpow.pop %v646
    %v648 = vmul.f32 %v596, 1.442695
    %v649 = vpow.pop %v648
    %v650 = vmul.f32 %v597, 1.442695
    %v651 = vpow.pop %v650
    %v652 = vmul.f32 %v598, 1.442695
    %v653 = vpow.pop %v652
    %v654 = vmul.f32 %v599, 1.442695
    %v655 = vpow.pop %v654
    %v656 = vmul.f32 %v600, 1.442695
    %v657 = vpow.pop %v656
    %v658 = vmul.f32 %v601, 1.442695
    %v659 = vpow.pop %v658
    %v660 = vmul.f32 %v602, 1.442695
    %v661 = vpow.pop %v660
    %v662 = vmul.f32 %v603, 1.442695
    %v663 = vpow.pop %v662
    %v664 = vmul.f32 %v604, 1.442695
    %v665 = vpow.pop %v664
    %v666 = vmul.f32 %v605, 1.442695
    %v667 = vpow.pop %v666
    %v668 = vmul.f32 %v606, 1.442695
    %v669 = vpow.pop %v668
    %v670 = vmul.f32 %v607, 1.442695
    %v671 = vpow.pop %v670
    %v672 = vmul.f32 %v608, 1.442695
    %v673 = vpow.pop %v672
    %v674 = vmul.f32 %v609, 1.442695
    %v675 = vpow.pop %v674
    %v676 = vmul.f32 %v610, 1.442695
    %v677 = vpow.pop %v676
    %v678 = vmul.f32 %v611, 1.442695
    %v679 = vpow.pop %v678
    %v680 = vmul.f32 %v612, 1.442695
    %v681 = vpow.pop %v680
    %v682 = vmul.f32 %v613, 1.442695
    %v683 = vpow.pop %v682
    %v684 = vmul.f32 %v614, 1.442695
    %v685 = vpow.pop %v684
    %v686 = vmul.f32 %v615, 1.442695
    %v687 = vpow.pop %v686
    %v688 = vmul.f32 %v616, 1.442695
    %v689 = vpow.pop %v688
    %v690 = vmul.f32 %v617, 1.442695
    %v691 = vpow.pop %v690
    %v692 = vmul.f32 %v618, 1.442695
    %v693 = vpow.pop %v692
    %v694 = vmul.f32 %v619, 1.442695
    %v695 = vpow.pop %v694
    %v696 = vmul.f32 %v620, 1.442695
    %v697 = vpow.pop %v696
    %v698 = vmul.f32 %v621, 1.442695
    %v699 = vpow.pop %v698
    %v700 = vmul.f32 %v622, 1.442695
    %v701 = vpow.pop %v700
    %v702 = vmul.f32 %v623, 1.442695
    %v703 = vpow.pop %v702
    %v704 = vmul.f32 %v624, 1.442695
    %v705 = vpow.pop %v704
    %v706 = vmul.f32 %v625, 1.442695
    %v707 = vpow.pop %v706
    %v708 = vmul.f32 %v626, 1.442695
    %v709 = vpow.pop %v708
    %v710 = vmul.f32 %v627, 1.442695
    %v711 = vpow.pop %v710
    %v712 = vadd.f32 %v629, 1.0
    %v713 = vadd.f32 %v631, 1.0
    %v714 = vadd.f32 %v633, 1.0
    %v715 = vadd.f32 %v635, 1.0
    %v716 = vadd.f32 %v637, 1.0
    %v717 = vadd.f32 %v639, 1.0
    %v718 = vadd.f32 %v641, 1.0
    %v719 = vadd.f32 %v643, 1.0
    %v720 = vadd.f32 %v645, 1.0
    %v721 = vadd.f32 %v647, 1.0
    %v722 = vadd.f32 %v649, 1.0
    %v723 = vadd.f32 %v651, 1.0
    %v724 = vadd.f32 %v653, 1.0
    %v725 = vadd.f32 %v655, 1.0
    %v726 = vadd.f32 %v657, 1.0
    %v727 = vadd.f32 %v659, 1.0
    %v728 = vadd.f32 %v661, 1.0
    %v729 = vadd.f32 %v663, 1.0
    %v730 = vadd.f32 %v665, 1.0
    %v731 = vadd.f32 %v667, 1.0
    %v732 = vadd.f32 %v669, 1.0
    %v733 = vadd.f32 %v671, 1.0
    %v734 = vadd.f32 %v673, 1.0
    %v735 = vadd.f32 %v675, 1.0
    %v736 = vadd.f32 %v677, 1.0
    %v737 = vadd.f32 %v679, 1.0
    %v738 = vadd.f32 %v681, 1.0
    %v739 = vadd.f32 %v683, 1.0
    %v740 = vadd.f32 %v685, 1.0
    %v741 = vadd.f32 %v687, 1.0
    %v742 = vadd.f32 %v689, 1.0
    %v743 = vadd.f32 %v691, 1.0
    %v744 = vadd.f32 %v693, 1.0
    %v745 = vadd.f32 %v695, 1.0
    %v746 = vadd.f32 %v697, 1.0
    %v747 = vadd.f32 %v699, 1.0
    %v748 = vadd.f32 %v701, 1.0
    %v749 = vadd.f32 %v703, 1.0
    %v750 = vadd.f32 %v705, 1.0
    %v751 = vadd.f32 %v707, 1.0
    %v752 = vadd.f32 %v709, 1.0
    %v753 = vadd.f32 %v711, 1.0
    %v754 = vlog2.pop %v712
    %v755 = vmul.f32 %v754, 0.6931472
    %v756 = vlog2.pop %v713
    %v757 = vmul.f32 %v756, 0.6931472
    %v758 = vlog2.pop %v714
    %v759 = vmul.f32 %v758, 0.6931472
    %v760 = vlog2.pop %v715
    %v761 = vmul.f32 %v760, 0.6931472
    %v762 = vlog2.pop %v716
    %v763 = vmul.f32 %v762, 0.6931472
    %v764 = vlog2.pop %v717
    %v765 = vmul.f32 %v764, 0.6931472
    %v766 = vlog2.pop %v718
    %v767 = vmul.f32 %v766, 0.6931472
    %v768 = vlog2.pop %v719
    %v769 = vmul.f32 %v768, 0.6931472
    %v770 = vlog2.pop %v720
    %v771 = vmul.f32 %v770, 0.6931472
    %v772 = vlog2.pop %v721
    %v773 = vmul.f32 %v772, 0.6931472
    %v774 = vlog2.pop %v722
    %v775 = vmul.f32 %v774, 0.6931472
    %v776 = vlog2.pop %v723
    %v777 = vmul.f32 %v776, 0.6931472
    %v778 = vlog2.pop %v724
    %v779 = vmul.f32 %v778, 0.6931472
    %v780 = vlog2.pop %v725
    %v781 = vmul.f32 %v780, 0.6931472
    %v782 = vlog2.pop %v726
    %v783 = vmul.f32 %v782, 0.6931472
    %v784 = vlog2.pop %v727
    %v785 = vmul.f32 %v784, 0.6931472
    %v786 = vlog2.pop %v728
    %v787 = vmul.f32 %v786, 0.6931472
    %v788 = vlog2.pop %v729
    %v789 = vmul.f32 %v788, 0.6931472
    %v790 = vlog2.pop %v730
    %v791 = vmul.f32 %v790, 0.6931472
    %v792 = vlog2.pop %v731
    %v793 = vmul.f32 %v792, 0.6931472
    %v794 = vlog2.pop %v732
    %v795 = vmul.f32 %v794, 0.6931472
    %v796 = vlog2.pop %v733
    %v797 = vmul.f32 %v796, 0.6931472
    %v798 = vlog2.pop %v734
    %v799 = vmul.f32 %v798, 0.6931472
    %v800 = vlog2.pop %v735
    %v801 = vmul.f32 %v800, 0.6931472
    %v802 = vlog2.pop %v736
    %v803 = vmul.f32 %v802, 0.6931472
    %v804 = vlog2.pop %v737
    %v805 = vmul.f32 %v804, 0.6931472
    %v806 = vlog2.pop %v738
    %v807 = vmul.f32 %v806, 0.6931472
    %v808 = vlog2.pop %v739
    %v809 = vmul.f32 %v808, 0.6931472
    %v810 = vlog2.pop %v740
    %v811 = vmul.f32 %v810, 0.6931472
    %v812 = vlog2.pop %v741
    %v813 = vmul.f32 %v812, 0.6931472
    %v814 = vlog2.pop %v742
    %v815 = vmul.f32 %v814, 0.6931472
    %v816 = vlog2.pop %v743
    %v817 = vmul.f32 %v816, 0.6931472
    %v818 = vlog2.pop %v744
    %v819 = vmul.f32 %v818, 0.6931472
    %v820 = vlog2.pop %v745
    %v821 = vmul.f32 %v820, 0.6931472
    %v822 = vlog2.pop %v746
    %v823 = vmul.f32 %v822, 0.6931472
    %v824 = vlog2.pop %v747
    %v825 = vmul.f32 %v824, 0.6931472
    %v826 = vlog2.pop %v748
    %v827 = vmul.f32 %v826, 0.6931472
    %v828 = vlog2.pop %v749
    %v829 = vmul.f32 %v828, 0.6931472
    %v830 = vlog2.pop %v750
    %v831 = vmul.f32 %v830, 0.6931472
    %v832 = vlog2.pop %v751
    %v833 = vmul.f32 %v832, 0.6931472
    %v834 = vlog2.pop %v752
    %v835 = vmul.f32 %v834, 0.6931472
    %v836 = vlog2.pop %v753
    %v837 = vmul.f32 %v836, 0.6931472
    %v838 = vmax.f32 %v418, 0.0
    %v839 = vmax.f32 %v419, 0.0
    %v840 = vmax.f32 %v420, 0.0
    %v841 = vmax.f32 %v421, 0.0
    %v842 = vmax.f32 %v422, 0.0
    %v843 = vmax.f32 %v423, 0.0
    %v844 = vmax.f32 %v424, 0.0
    %v845 = vmax.f32 %v425, 0.0
    %v846 = vmax.f32 %v426, 0.0
    %v847 = vmax.f32 %v427, 0.0
    %v848 = vmax.f32 %v428, 0.0
    %v849 = vmax.f32 %v429, 0.0
    %v850 = vmax.f32 %v430, 0.0
    %v851 = vmax.f32 %v431, 0.0
    %v852 = vmax.f32 %v432, 0.0
    %v853 = vmax.f32 %v433, 0.0
    %v854 = vmax.f32 %v434, 0.0
    %v855 = vmax.f32 %v435, 0.0
    %v856 = vmax.f32 %v436, 0.0
    %v857 = vmax.f32 %v437, 0.0
    %v858 = vmax.f32 %v438, 0.0
    %v859 = vmax.f32 %v439, 0.0
    %v860 = vmax.f32 %v440, 0.0
    %v861 = vmax.f32 %v441, 0.0
    %v862 = vmax.f32 %v442, 0.0
    %v863 = vmax.f32 %v443, 0.0
    %v864 = vmax.f32 %v444, 0.0
    %v865 = vmax.f32 %v445, 0.0
    %v866 = vmax.f32 %v446, 0.0
    %v867 = vmax.f32 %v447, 0.0
    %v868 = vmax.f32 %v448, 0.0
    %v869 = vmax.f32 %v449, 0.0
    %v870 = vmax.f32 %v450, 0.0
    %v871 = vmax.f32 %v451, 0.0
    %v872 = vmax.f32 %v452, 0.0
    %v873 = vmax.f32 %v453, 0.0
    %v874 = vmax.f32 %v454, 0.0
    %v875 = vmax.f32 %v455, 0.0
    %v876 = vmax.f32 %v456, 0.0
    %v877 = vmax.f32 %v457, 0.0
    %v878 = vmax.f32 %v458, 0.0
    %v879 = vmax.f32 %v459, 0.0
    %v880 = vmul.f32 %v418, %v460
    %v881 = vmul.f32 %v419, %v461
    %v882 = vmul.f32 %v420, %v462
    %v883 = vmul.f32 %v421, %v463
    %v884 = vmul.f32 %v422, %v464
    %v885 = vmul.f32 %v423, %v465
    %v886 = vmul.f32 %v424, %v466
    %v887 = vmul.f32 %v425, %v467
    %v888 = vmul.f32 %v426, %v468
    %v889 = vmul.f32 %v427, %v469
    %v890 = vmul.f32 %v428, %v470
    %v891 = vmul.f32 %v429, %v471
    %v892 = vmul.f32 %v430, %v472
    %v893 = vmul.f32 %v431, %v473
    %v894 = vmul.f32 %v432, %v474
    %v895 = vmul.f32 %v433, %v475
    %v896 = vmul.f32 %v434, %v476
    %v897 = vmul.f32 %v435, %v477
    %v898 = vmul.f32 %v436, %v478
    %v899 = vmul.f32 %v437, %v479
    %v900 = vmul.f32 %v438, %v480
    %v901 = vmul.f32 %v439, %v481
    %v902 = vmul.f32 %v440, %v482
    %v903 = vmul.f32 %v441, %v483
    %v904 = vmul.f32 %v442, %v484
    %v905 = vmul.f32 %v443, %v485
    %v906 = vmul.f32 %v444, %v486
    %v907 = vmul.f32 %v445, %v487
    %v908 = vmul.f32 %v446, %v488
    %v909 = vmul.f32 %v447, %v489
    %v910 = vmul.f32 %v448, %v490
    %v911 = vmul.f32 %v449, %v491
    %v912 = vmul.f32 %v450, %v492
    %v913 = vmul.f32 %v451, %v493
    %v914 = vmul.f32 %v452, %v494
    %v915 = vmul.f32 %v453, %v495
    %v916 = vmul.f32 %v454, %v496
    %v917 = vmul.f32 %v455, %v497
    %v918 = vmul.f32 %v456, %v498
    %v919 = vmul.f32 %v457, %v499
    %v920 = vmul.f32 %v458, %v500
    %v921 = vmul.f32 %v459, %v501
    %v922 = vsub.f32 %v838, %v880
    %v923 = vsub.f32 %v839, %v881
    %v924 = vsub.f32 %v840, %v882
    %v925 = vsub.f32 %v841, %v883
    %v926 = vsub.f32 %v842, %v884
    %v927 = vsub.f32 %v843, %v885
    %v928 = vsub.f32 %v844, %v886
    %v929 = vsub.f32 %v845, %v887
    %v930 = vsub.f32 %v846, %v888
    %v931 = vsub.f32 %v847, %v889
    %v932 = vsub.f32 %v848, %v890
    %v933 = vsub.f32 %v849, %v891
    %v934 = vsub.f32 %v850, %v892
    %v935 = vsub.f32 %v851, %v893
    %v936 = vsub.f32 %v852, %v894
    %v937 = vsub.f32 %v853, %v895
    %v938 = vsub.f32 %v854, %v896
    %v939 = vsub.f32 %v855, %v897
    %v940 = vsub.f32 %v856, %v898
    %v941 = vsub.f32 %v857, %v899
    %v942 = vsub.f32 %v858, %v900
    %v943 = vsub.f32 %v859, %v901
    %v944 = vsub.f32 %v860, %v902
    %v945 = vsub.f32 %v861, %v903
    %v946 = vsub.f32 %v862, %v904
    %v947 = vsub.f32 %v863, %v905
    %v948 = vsub.f32 %v864, %v906
    %v949 = vsub.f32 %v865, %v907
    %v950 = vsub.f32 %v866, %v908
    %v951 = vsub.f32 %v867, %v909
    %v952 = vsub.f32 %v868, %v910
    %v953 = vsub.f32 %v869, %v911
    %v954 = vsub.f32 %v870, %v912
    %v955 = vsub.f32 %v871, %v913
    %v956 = vsub.f32 %v872, %v914
    %v957 = vsub.f32 %v873, %v915
    %v958 = vsub.f32 %v874, %v916
    %v959 = vsub.f32 %v875, %v917
    %v960 = vsub.f32 %v876, %v918
    %v961 = vsub.f32 %v877, %v919
    %v962 = vsub.f32 %v878, %v920
    %v963 = vsub.f32 %v879, %v921
    %v964 = vadd.f32 %v922, %v755
    %v965 = vadd.f32 %v923, %v757
    %v966 = vadd.f32 %v924, %v759
    %v967 = vadd.f32 %v925, %v761
    %v968 = vadd.f32 %v926, %v763
    %v969 = vadd.f32 %v927, %v765
    %v970 = vadd.f32 %v928, %v767
    %v971 = vadd.f32 %v929, %v769
    %v972 = vadd.f32 %v930, %v771
    %v973 = vadd.f32 %v931, %v773
    %v974 = vadd.f32 %v932, %v775
    %v975 = vadd.f32 %v933, %v777
    %v976 = vadd.f32 %v934, %v779
    %v977 = vadd.f32 %v935, %v781
    %v978 = vadd.f32 %v936, %v783
    %v979 = vadd.f32 %v937, %v785
    %v980 = vadd.f32 %v938, %v787
    %v981 = vadd.f32 %v939, %v789
    %v982 = vadd.f32 %v940, %v791
    %v983 = vadd.f32 %v941, %v793
    %v984 = vadd.f32 %v942, %v795
    %v985 = vadd.f32 %v943, %v797
    %v986 = vadd.f32 %v944, %v799
    %v987 = vadd.f32 %v945, %v801
    %v988 = vadd.f32 %v946, %v803
    %v989 = vadd.f32 %v947, %v805
    %v990 = vadd.f32 %v948, %v807
    %v991 = vadd.f32 %v949, %v809
    %v992 = vadd.f32 %v950, %v811
    %v993 = vadd.f32 %v951, %v813
    %v994 = vadd.f32 %v952, %v815
    %v995 = vadd.f32 %v953, %v817
    %v996 = vadd.f32 %v954, %v819
    %v997 = vadd.f32 %v955, %v821
    %v998 = vadd.f32 %v956, %v823
    %v999 = vadd.f32 %v957, %v825
    %v1000 = vadd.f32 %v958, %v827
    %v1001 = vadd.f32 %v959, %v829
    %v1002 = vadd.f32 %v960, %v831
    %v1003 = vadd.f32 %v961, %v833
    %v1004 = vadd.f32 %v962, %v835
    %v1005 = vadd.f32 %v963, %v837
    %v1006 = vsel %vm502, %v964, 0.0
    %v1007 = vsel %vm503, %v965, 0.0
    %v1008 = vsel %vm504, %v966, 0.0
    %v1009 = vsel %vm505, %v967, 0.0
    %v1010 = vsel %vm506, %v968, 0.0
    %v1011 = vsel %vm507, %v969, 0.0
    %v1012 = vsel %vm508, %v970, 0.0
    %v1013 = vsel %vm509, %v971, 0.0
    %v1014 = vsel %vm510, %v972, 0.0
    %v1015 = vsel %vm511, %v973, 0.0
    %v1016 = vsel %vm512, %v974, 0.0
    %v1017 = vsel %vm513, %v975, 0.0
    %v1018 = vsel %vm514, %v976, 0.0
    %v1019 = vsel %vm515, %v977, 0.0
    %v1020 = vsel %vm516, %v978, 0.0
    %v1021 = vsel %vm517, %v979, 0.0
    %v1022 = vsel %vm518, %v980, 0.0
    %v1023 = vsel %vm519, %v981, 0.0
    %v1024 = vsel %vm520, %v982, 0.0
    %v1025 = vsel %vm521, %v983, 0.0
    %v1026 = vsel %vm522, %v984, 0.0
    %v1027 = vsel %vm523, %v985, 0.0
    %v1028 = vsel %vm524, %v986, 0.0
    %v1029 = vsel %vm525, %v987, 0.0
    %v1030 = vsel %vm526, %v988, 0.0
    %v1031 = vsel %vm527, %v989, 0.0
    %v1032 = vsel %vm528, %v990, 0.0
    %v1033 = vsel %vm529, %v991, 0.0
    %v1034 = vsel %vm530, %v992, 0.0
    %v1035 = vsel %vm531, %v993, 0.0
    %v1036 = vsel %vm532, %v994, 0.0
    %v1037 = vsel %vm533, %v995, 0.0
    %v1038 = vsel %vm534, %v996, 0.0
    %v1039 = vsel %vm535, %v997, 0.0
    %v1040 = vsel %vm536, %v998, 0.0
    %v1041 = vsel %vm537, %v999, 0.0
    %v1042 = vsel %vm538, %v1000, 0.0
    %v1043 = vsel %vm539, %v1001, 0.0
    %v1044 = vsel %vm540, %v1002, 0.0
    %v1045 = vsel %vm541, %v1003, 0.0
    %v1046 = vsel %vm542, %v1004, 0.0
    %v1047 = vsel %vm543, %v1005, 0.0
    %v1048 = vsub.f32 %v418, %v460
    %v1049 = vsub.f32 %v419, %v461
    %v1050 = vsub.f32 %v420, %v462
    %v1051 = vsub.f32 %v421, %v463
    %v1052 = vsub.f32 %v422, %v464
    %v1053 = vsub.f32 %v423, %v465
    %v1054 = vsub.f32 %v424, %v466
    %v1055 = vsub.f32 %v425, %v467
    %v1056 = vsub.f32 %v426, %v468
    %v1057 = vsub.f32 %v427, %v469
    %v1058 = vsub.f32 %v428, %v470
    %v1059 = vsub.f32 %v429, %v471
    %v1060 = vsub.f32 %v430, %v472
    %v1061 = vsub.f32 %v431, %v473
    %v1062 = vsub.f32 %v432, %v474
    %v1063 = vsub.f32 %v433, %v475
    %v1064 = vsub.f32 %v434, %v476
    %v1065 = vsub.f32 %v435, %v477
    %v1066 = vsub.f32 %v436, %v478
    %v1067 = vsub.f32 %v437, %v479
    %v1068 = vsub.f32 %v438, %v480
    %v1069 = vsub.f32 %v439, %v481
    %v1070 = vsub.f32 %v440, %v482
    %v1071 = vsub.f32 %v441, %v483
    %v1072 = vsub.f32 %v442, %v484
    %v1073 = vsub.f32 %v443, %v485
    %v1074 = vsub.f32 %v444, %v486
    %v1075 = vsub.f32 %v445, %v487
    %v1076 = vsub.f32 %v446, %v488
    %v1077 = vsub.f32 %v447, %v489
    %v1078 = vsub.f32 %v448, %v490
    %v1079 = vsub.f32 %v449, %v491
    %v1080 = vsub.f32 %v450, %v492
    %v1081 = vsub.f32 %v451, %v493
    %v1082 = vsub.f32 %v452, %v494
    %v1083 = vsub.f32 %v453, %v495
    %v1084 = vsub.f32 %v454, %v496
    %v1085 = vsub.f32 %v455, %v497
    %v1086 = vsub.f32 %v456, %v498
    %v1087 = vsub.f32 %v457, %v499
    %v1088 = vsub.f32 %v458, %v500
    %v1089 = vsub.f32 %v459, %v501
    %v1090 = vadd.f32 %v1006, %v1007
    %v1091 = vadd.f32 %v1090, %v1008
    %v1092 = vadd.f32 %v1091, %v1009
    %v1093 = vadd.f32 %v1092, %v1010
    %vm1094 = vcmask 293888
    %v1095 = vsel %vm1094, %v1011, 0.0
    %v1096 = vadd.f32 %v1093, %v1095
    %1097 = vadd.xlane.f32.xlu0 %v1096
    %v1098 = vpop.xlane.xlu0 %1097
    %v1099 = vadd.f32 %v1012, %v1013
    %v1100 = vadd.f32 %v1099, %v1014
    %v1101 = vadd.f32 %v1100, %v1015
    %v1102 = vadd.f32 %v1101, %v1016
    %v1103 = vsel %vm1094, %v1017, 0.0
    %v1104 = vadd.f32 %v1102, %v1103
    %1105 = vadd.xlane.f32.xlu0 %v1104
    %v1106 = vpop.xlane.xlu0 %1105
    %v1107 = vadd.f32 %v1018, %v1019
    %v1108 = vadd.f32 %v1107, %v1020
    %v1109 = vadd.f32 %v1108, %v1021
    %v1110 = vadd.f32 %v1109, %v1022
    %v1111 = vsel %vm1094, %v1023, 0.0
    %v1112 = vadd.f32 %v1110, %v1111
    %1113 = vadd.xlane.f32.xlu0 %v1112
    %v1114 = vpop.xlane.xlu0 %1113
    %v1115 = vadd.f32 %v1024, %v1025
    %v1116 = vadd.f32 %v1115, %v1026
    %v1117 = vadd.f32 %v1116, %v1027
    %v1118 = vadd.f32 %v1117, %v1028
    %v1119 = vsel %vm1094, %v1029, 0.0
    %v1120 = vadd.f32 %v1118, %v1119
    %1121 = vadd.xlane.f32.xlu0 %v1120
    %v1122 = vpop.xlane.xlu0 %1121
    %v1123 = vadd.f32 %v1030, %v1031
    %v1124 = vadd.f32 %v1123, %v1032
    %v1125 = vadd.f32 %v1124, %v1033
    %v1126 = vadd.f32 %v1125, %v1034
    %v1127 = vsel %vm1094, %v1035, 0.0
    %v1128 = vadd.f32 %v1126, %v1127
    %1129 = vadd.xlane.f32.xlu0 %v1128
    %v1130 = vpop.xlane.xlu0 %1129
    %v1131 = vadd.f32 %v1036, %v1037
    %v1132 = vadd.f32 %v1131, %v1038
    %v1133 = vadd.f32 %v1132, %v1039
    %v1134 = vadd.f32 %v1133, %v1040
    %v1135 = vsel %vm1094, %v1041, 0.0
    %v1136 = vadd.f32 %v1134, %v1135
    %1137 = vadd.xlane.f32.xlu0 %v1136
    %v1138 = vpop.xlane.xlu0 %1137
    %v1139 = vsel %vm352, %v1042, 0.0
    %v1140 = vsel %vm352, %v1043, 0.0
    %v1141 = vadd.f32 %v1139, %v1140
    %v1142 = vsel %vm352, %v1044, 0.0
    %v1143 = vadd.f32 %v1141, %v1142
    %v1144 = vsel %vm352, %v1045, 0.0
    %v1145 = vadd.f32 %v1143, %v1144
    %v1146 = vsel %vm352, %v1046, 0.0
    %v1147 = vadd.f32 %v1145, %v1146
    %vm1148 = vcmask 291840
    %v1149 = vsel %vm1148, %v1047, 0.0
    %v1150 = vadd.f32 %v1147, %v1149
    %1151 = vadd.xlane.f32.xlu0 %v1150
    %v1152 = vpop.xlane.xlu0 %1151
    %v1153 = vmul.f32 %v1048, %v1048
    %v1154 = vmul.f32 %v1049, %v1049
    %v1155 = vmul.f32 %v1050, %v1050
    %v1156 = vmul.f32 %v1051, %v1051
    %v1157 = vmul.f32 %v1052, %v1052
    %v1158 = vmul.f32 %v1053, %v1053
    %v1159 = vmul.f32 %v1054, %v1054
    %v1160 = vmul.f32 %v1055, %v1055
    %v1161 = vmul.f32 %v1056, %v1056
    %v1162 = vmul.f32 %v1057, %v1057
    %v1163 = vmul.f32 %v1058, %v1058
    %v1164 = vmul.f32 %v1059, %v1059
    %v1165 = vmul.f32 %v1060, %v1060
    %v1166 = vmul.f32 %v1061, %v1061
    %v1167 = vmul.f32 %v1062, %v1062
    %v1168 = vmul.f32 %v1063, %v1063
    %v1169 = vmul.f32 %v1064, %v1064
    %v1170 = vmul.f32 %v1065, %v1065
    %v1171 = vmul.f32 %v1066, %v1066
    %v1172 = vmul.f32 %v1067, %v1067
    %v1173 = vmul.f32 %v1068, %v1068
    %v1174 = vmul.f32 %v1069, %v1069
    %v1175 = vmul.f32 %v1070, %v1070
    %v1176 = vmul.f32 %v1071, %v1071
    %v1177 = vmul.f32 %v1072, %v1072
    %v1178 = vmul.f32 %v1073, %v1073
    %v1179 = vmul.f32 %v1074, %v1074
    %v1180 = vmul.f32 %v1075, %v1075
    %v1181 = vmul.f32 %v1076, %v1076
    %v1182 = vmul.f32 %v1077, %v1077
    %v1183 = vmul.f32 %v1078, %v1078
    %v1184 = vmul.f32 %v1079, %v1079
    %v1185 = vmul.f32 %v1080, %v1080
    %v1186 = vmul.f32 %v1081, %v1081
    %v1187 = vmul.f32 %v1082, %v1082
    %v1188 = vmul.f32 %v1083, %v1083
    %v1189 = vmul.f32 %v1084, %v1084
    %v1190 = vmul.f32 %v1085, %v1085
    %v1191 = vmul.f32 %v1086, %v1086
    %v1192 = vmul.f32 %v1087, %v1087
    %v1193 = vmul.f32 %v1088, %v1088
    %v1194 = vmul.f32 %v1089, %v1089
    %v1195 = vadd.f32 %v1153, %v1154
    %v1196 = vadd.f32 %v1195, %v1155
    %v1197 = vadd.f32 %v1196, %v1156
    %v1198 = vadd.f32 %v1197, %v1157
    %v1199 = vsel %vm1094, %v1158, 0.0
    %v1200 = vadd.f32 %v1198, %v1199
    %1201 = vadd.xlane.f32.xlu0 %v1200
    %v1202 = vpop.xlane.xlu0 %1201
    %v1203 = vadd.f32 %v1159, %v1160
    %v1204 = vadd.f32 %v1203, %v1161
    %v1205 = vadd.f32 %v1204, %v1162
    %v1206 = vadd.f32 %v1205, %v1163
    %v1207 = vsel %vm1094, %v1164, 0.0
    %v1208 = vadd.f32 %v1206, %v1207
    %1209 = vadd.xlane.f32.xlu0 %v1208
    %v1210 = vpop.xlane.xlu0 %1209
    %v1211 = vadd.f32 %v1165, %v1166
    %v1212 = vadd.f32 %v1211, %v1167
    %v1213 = vadd.f32 %v1212, %v1168
    %v1214 = vadd.f32 %v1213, %v1169
    %v1215 = vsel %vm1094, %v1170, 0.0
    %v1216 = vadd.f32 %v1214, %v1215
    %1217 = vadd.xlane.f32.xlu0 %v1216
    %v1218 = vpop.xlane.xlu0 %1217
    %v1219 = vadd.f32 %v1171, %v1172
    %v1220 = vadd.f32 %v1219, %v1173
    %v1221 = vadd.f32 %v1220, %v1174
    %v1222 = vadd.f32 %v1221, %v1175
    %v1223 = vsel %vm1094, %v1176, 0.0
    %v1224 = vadd.f32 %v1222, %v1223
    %1225 = vadd.xlane.f32.xlu0 %v1224
    %v1226 = vpop.xlane.xlu0 %1225
    %v1227 = vadd.f32 %v1177, %v1178
    %v1228 = vadd.f32 %v1227, %v1179
    %v1229 = vadd.f32 %v1228, %v1180
    %v1230 = vadd.f32 %v1229, %v1181
    %v1231 = vsel %vm1094, %v1182, 0.0
    %v1232 = vadd.f32 %v1230, %v1231
    %1233 = vadd.xlane.f32.xlu0 %v1232
    %v1234 = vpop.xlane.xlu0 %1233
    %v1235 = vadd.f32 %v1183, %v1184
    %v1236 = vadd.f32 %v1235, %v1185
    %v1237 = vadd.f32 %v1236, %v1186
    %v1238 = vadd.f32 %v1237, %v1187
    %v1239 = vsel %vm1094, %v1188, 0.0
    %v1240 = vadd.f32 %v1238, %v1239
    %1241 = vadd.xlane.f32.xlu0 %v1240
    %v1242 = vpop.xlane.xlu0 %1241
    %v1243 = vsel %vm352, %v1189, 0.0
    %v1244 = vsel %vm352, %v1190, 0.0
    %v1245 = vadd.f32 %v1243, %v1244
    %v1246 = vsel %vm352, %v1191, 0.0
    %v1247 = vadd.f32 %v1245, %v1246
    %v1248 = vsel %vm352, %v1192, 0.0
    %v1249 = vadd.f32 %v1247, %v1248
    %v1250 = vsel %vm352, %v1193, 0.0
    %v1251 = vadd.f32 %v1249, %v1250
    %v1252 = vsel %vm1148, %v1194, 0.0
    %v1253 = vadd.f32 %v1251, %v1252
    %1254 = vadd.xlane.f32.xlu0 %v1253
    %v1255 = vpop.xlane.xlu0 %1254
    %1256 = vst.msk [vmem:[%s8] sm:$0xff] %vm402, %v1098
    %1257 = vst.msk [vmem:[%s8 + $0x8] sm:$0xff] %vm402, %v1106
    %1258 = vst.msk [vmem:[%s8 + $0x10] sm:$0xff] %vm402, %v1114
    %1259 = vst.msk [vmem:[%s8 + $0x18] sm:$0xff] %vm402, %v1122
    %1260 = vst.msk [vmem:[%s8 + $0x20] sm:$0xff] %vm402, %v1130
    %1261 = vst.msk [vmem:[%s8 + $0x28] sm:$0xff] %vm402, %v1138
    %1262 = vst.msk [vmem:[%s8 + $0x30] sm:$0x3f] %vm409, %v1152
    %1263 = vst.msk [vmem:[%s9] sm:$0xff] %vm402, %v1202
    %1264 = vst.msk [vmem:[%s9 + $0x8] sm:$0xff] %vm402, %v1210
    %1265 = vst.msk [vmem:[%s9 + $0x10] sm:$0xff] %vm402, %v1218
    %1266 = vst.msk [vmem:[%s9 + $0x18] sm:$0xff] %vm402, %v1226
    %1267 = vst.msk [vmem:[%s9 + $0x20] sm:$0xff] %vm402, %v1234
    %1268 = vst.msk [vmem:[%s9 + $0x28] sm:$0xff] %vm402, %v1242
    %1269 = vst.msk [vmem:[%s9 + $0x30] sm:$0x3f] %vm409, %v1255
    %s1270 = smul.u32 8, 7
    %s1271 = smul.u32 %s1270, 22
    %s1272 = sshll.u32 %s1271, 4
    %1273 = dma.done [#allocation4], %s1272
    %s1274 = sshll.u32 %s1271, 4
    %1275 = dma.done %s91, %s1274
    %v1276 = vld [vmem:[#allocation2] sm:$0xff]
    %v1277 = vld [vmem:[#allocation2 + $0x8] sm:$0xff]
    %v1278 = vld [vmem:[#allocation2 + $0x10] sm:$0xff]
    %v1279 = vld [vmem:[#allocation2 + $0x18] sm:$0xff]
    %v1280 = vld [vmem:[#allocation2 + $0x20] sm:$0xff]
    %v1281 = vld [vmem:[#allocation2 + $0x28] sm:$0xff]
    %v1282 = vld [vmem:[#allocation2 + $0x30] sm:$0xff]
    %v1283 = vld [vmem:[#allocation2 + $0x38] sm:$0xff]
    %v1284 = vld [vmem:[#allocation2 + $0x40] sm:$0xff]
    %v1285 = vld [vmem:[#allocation2 + $0x48] sm:$0xff]
    %v1286 = vld [vmem:[#allocation2 + $0x50] sm:$0xff]
    %v1287 = vld [vmem:[#allocation2 + $0x58] sm:$0xff]
    %v1288 = vld [vmem:[#allocation2 + $0x60] sm:$0xff]
    %v1289 = vld [vmem:[#allocation2 + $0x68] sm:$0xff]
    %v1290 = vld [vmem:[#allocation2 + $0x70] sm:$0xff]
    %v1291 = vld [vmem:[#allocation2 + $0x78] sm:$0xff]
    %v1292 = vld [vmem:[#allocation2 + $0x80] sm:$0xff]
    %v1293 = vld [vmem:[#allocation2 + $0x88] sm:$0xff]
    %v1294 = vld [vmem:[#allocation2 + $0x90] sm:$0xff]
    %v1295 = vld [vmem:[#allocation2 + $0x98] sm:$0xff]
    %v1296 = vld [vmem:[#allocation2 + $0xa0] sm:$0xff]
    %v1297 = vld [vmem:[#allocation2 + $0xa8] sm:$0xff]
    %v1298 = vld [vmem:[#allocation2 + $0xb0] sm:$0xff]
    %v1299 = vld [vmem:[#allocation2 + $0xb8] sm:$0xff]
    %v1300 = vld [vmem:[#allocation2 + $0xc0] sm:$0xff]
    %v1301 = vld [vmem:[#allocation2 + $0xc8] sm:$0xff]
    %v1302 = vld [vmem:[#allocation2 + $0xd0] sm:$0xff]
    %v1303 = vld [vmem:[#allocation2 + $0xd8] sm:$0xff]
    %v1304 = vld [vmem:[#allocation2 + $0xe0] sm:$0xff]
    %v1305 = vld [vmem:[#allocation2 + $0xe8] sm:$0xff]
    %v1306 = vld [vmem:[#allocation2 + $0xf0] sm:$0xff]
    %v1307 = vld [vmem:[#allocation2 + $0xf8] sm:$0xff]
    %v1308 = vld [vmem:[#allocation2 + $0x100] sm:$0xff]
    %v1309 = vld [vmem:[#allocation2 + $0x108] sm:$0xff]
    %v1310 = vld [vmem:[#allocation2 + $0x110] sm:$0xff]
    %v1311 = vld [vmem:[#allocation2 + $0x118] sm:$0xff]
    %v1312 = vld [vmem:[#allocation2 + $0x120] sm:$0xff]
    %v1313 = vld [vmem:[#allocation2 + $0x128] sm:$0xff]
    %v1314 = vld [vmem:[#allocation2 + $0x130] sm:$0xff]
    %v1315 = vld [vmem:[#allocation2 + $0x138] sm:$0xff]
    %v1316 = vld [vmem:[#allocation2 + $0x140] sm:$0xff]
    %v1317 = vld [vmem:[#allocation2 + $0x148] sm:$0xff]
    %v1318 = vld [vmem:[#allocation2 + $0x150] sm:$0xff]
    %v1319 = vld [vmem:[#allocation2 + $0x158] sm:$0xff]
    %v1320 = vld [vmem:[#allocation2 + $0x160] sm:$0xff]
    %v1321 = vld [vmem:[#allocation2 + $0x168] sm:$0xff]
    %v1322 = vld [vmem:[#allocation2 + $0x170] sm:$0xff]
    %v1323 = vld [vmem:[#allocation2 + $0x178] sm:$0xff]
    %v1324 = vld [vmem:[#allocation2 + $0x180] sm:$0xff]
    %v1325 = vld [vmem:[#allocation2 + $0x188] sm:$0xff]
    %v1326 = vld [vmem:[#allocation2 + $0x190] sm:$0xff]
    %v1327 = vld [vmem:[#allocation2 + $0x198] sm:$0xff]
    %v1328 = vld [vmem:[#allocation2 + $0x1a0] sm:$0xff]
    %v1329 = vld [vmem:[#allocation2 + $0x1a8] sm:$0xff]
    %v1330 = vld [vmem:[#allocation2 + $0x1b0] sm:$0xff]
    %v1331 = vld [vmem:[#allocation2 + $0x1b8] sm:$0xff]
    %v1332 = vld [vmem:[#allocation2 + $0x1c0] sm:$0xff]
    %v1333 = vld [vmem:[#allocation2 + $0x1c8] sm:$0xff]
    %v1334 = vld [vmem:[#allocation2 + $0x1d0] sm:$0xff]
    %v1335 = vld [vmem:[#allocation2 + $0x1d8] sm:$0xff]
    %v1336 = vld [vmem:[#allocation2 + $0x1e0] sm:$0xff]
    %v1337 = vld [vmem:[#allocation2 + $0x1e8] sm:$0xff]
    %v1338 = vld [vmem:[#allocation2 + $0x1f0] sm:$0xff]
    %v1339 = vld [vmem:[#allocation2 + $0x1f8] sm:$0xff]
    %v1340 = vld [vmem:[#allocation2 + $0x200] sm:$0xff]
    %v1341 = vld [vmem:[#allocation2 + $0x208] sm:$0xff]
    %v1342 = vld [vmem:[#allocation2 + $0x210] sm:$0xff]
    %v1343 = vld [vmem:[#allocation2 + $0x218] sm:$0xff]
    %v1344 = vld [vmem:[#allocation2 + $0x220] sm:$0xff]
    %v1345 = vld [vmem:[#allocation2 + $0x228] sm:$0xff]
    %v1346 = vld [vmem:[#allocation2 + $0x230] sm:$0xff]
    %v1347 = vld [vmem:[#allocation2 + $0x238] sm:$0xff]
    %v1348 = vld [vmem:[#allocation2 + $0x240] sm:$0xff]
    %v1349 = vld [vmem:[#allocation2 + $0x248] sm:$0xff]
    %v1350 = vld [vmem:[#allocation2 + $0x250] sm:$0xff]
    %v1351 = vld [vmem:[#allocation2 + $0x258] sm:$0xff]
    %v1352 = vld [vmem:[#allocation2 + $0x260] sm:$0xff]
    %v1353 = vld [vmem:[#allocation2 + $0x268] sm:$0xff]
    %v1354 = vld [vmem:[#allocation2 + $0x270] sm:$0xff]
    %v1355 = vld [vmem:[#allocation2 + $0x278] sm:$0xff]
    %v1356 = vld [vmem:[#allocation2 + $0x280] sm:$0xff]
    %v1357 = vld [vmem:[#allocation2 + $0x288] sm:$0xff]
    %v1358 = vld [vmem:[#allocation2 + $0x290] sm:$0xff]
    %v1359 = vld [vmem:[#allocation2 + $0x298] sm:$0xff]
    %v1360 = vld [vmem:[#allocation2 + $0x2a0] sm:$0xff]
    %v1361 = vld [vmem:[#allocation2 + $0x2a8] sm:$0xff]
    %v1362 = vld [vmem:[#allocation2 + $0x2b0] sm:$0xff]
    %v1363 = vld [vmem:[#allocation2 + $0x2b8] sm:$0xff]
    %v1364 = vld [vmem:[#allocation2 + $0x2c0] sm:$0xff]
    %v1365 = vld [vmem:[#allocation2 + $0x2c8] sm:$0xff]
    %v1366 = vld [vmem:[#allocation2 + $0x2d0] sm:$0xff]
    %v1367 = vld [vmem:[#allocation2 + $0x2d8] sm:$0xff]
    %v1368 = vld [vmem:[#allocation2 + $0x2e0] sm:$0xff]
    %v1369 = vld [vmem:[#allocation2 + $0x2e8] sm:$0xff]
    %v1370 = vld [vmem:[#allocation2 + $0x2f0] sm:$0xff]
    %v1371 = vld [vmem:[#allocation2 + $0x2f8] sm:$0xff]
    %v1372 = vld [vmem:[#allocation2 + $0x300] sm:$0xff]
    %v1373 = vld [vmem:[#allocation2 + $0x308] sm:$0xff]
    %v1374 = vld [vmem:[#allocation2 + $0x310] sm:$0xff]
    %v1375 = vld [vmem:[#allocation2 + $0x318] sm:$0xff]
    %v1376 = vld [vmem:[#allocation2 + $0x320] sm:$0xff]
    %v1377 = vld [vmem:[#allocation2 + $0x328] sm:$0xff]
    %v1378 = vld [vmem:[#allocation2 + $0x330] sm:$0xff]
    %v1379 = vld [vmem:[#allocation2 + $0x338] sm:$0xff]
    %v1380 = vld [vmem:[#allocation2 + $0x340] sm:$0xff]
    %v1381 = vld [vmem:[#allocation2 + $0x348] sm:$0xff]
    %v1382 = vld [vmem:[#allocation2 + $0x350] sm:$0xff]
    %v1383 = vld [vmem:[#allocation2 + $0x358] sm:$0xff]
    %v1384 = vld [vmem:[#allocation2 + $0x360] sm:$0xff]
    %v1385 = vld [vmem:[#allocation2 + $0x368] sm:$0xff]
    %v1386 = vld [vmem:[#allocation2 + $0x370] sm:$0xff]
    %v1387 = vld [vmem:[#allocation2 + $0x378] sm:$0xff]
    %v1388 = vld [vmem:[#allocation2 + $0x380] sm:$0xff]
    %v1389 = vld [vmem:[#allocation2 + $0x388] sm:$0xff]
    %v1390 = vld [vmem:[#allocation2 + $0x390] sm:$0xff]
    %v1391 = vld [vmem:[#allocation2 + $0x398] sm:$0xff]
    %v1392 = vld [vmem:[#allocation2 + $0x3a0] sm:$0xff]
    %v1393 = vld [vmem:[#allocation2 + $0x3a8] sm:$0xff]
    %v1394 = vld [vmem:[#allocation2 + $0x3b0] sm:$0xff]
    %v1395 = vld [vmem:[#allocation2 + $0x3b8] sm:$0xff]
    %v1396 = vld [vmem:[#allocation2 + $0x3c0] sm:$0xff]
    %v1397 = vld [vmem:[#allocation2 + $0x3c8] sm:$0xff]
    %v1398 = vld [vmem:[#allocation2 + $0x3d0] sm:$0xff]
    %v1399 = vld [vmem:[#allocation2 + $0x3d8] sm:$0xff]
    %v1400 = vld [vmem:[#allocation2 + $0x3e0] sm:$0xff]
    %v1401 = vld [vmem:[#allocation2 + $0x3e8] sm:$0xff]
    %v1402 = vld [vmem:[#allocation2 + $0x3f0] sm:$0xff]
    %v1403 = vld [vmem:[#allocation2 + $0x3f8] sm:$0xff]
    %v1404 = vld [vmem:[#allocation2 + $0x400] sm:$0xff]
    %v1405 = vld [vmem:[#allocation2 + $0x408] sm:$0xff]
    %v1406 = vld [vmem:[#allocation2 + $0x410] sm:$0xff]
    %v1407 = vld [vmem:[#allocation2 + $0x418] sm:$0xff]
    %v1408 = vld [vmem:[#allocation2 + $0x420] sm:$0x3f]
    %v1409 = vld [vmem:[#allocation2 + $0x428] sm:$0x3f]
    %v1410 = vld [vmem:[#allocation2 + $0x430] sm:$0x3f]
    %v1411 = vld [vmem:[#allocation2 + $0x438] sm:$0x3f]
    %v1412 = vld [vmem:[#allocation2 + $0x440] sm:$0x3f]
    %v1413 = vld [vmem:[#allocation2 + $0x448] sm:$0x3f]
    %v1414 = vld [vmem:[#allocation2 + $0x450] sm:$0x3f]
    %v1415 = vld [vmem:[#allocation2 + $0x458] sm:$0x3f]
    %v1416 = vld [vmem:[#allocation2 + $0x460] sm:$0x3f]
    %v1417 = vld [vmem:[#allocation2 + $0x468] sm:$0x3f]
    %v1418 = vld [vmem:[#allocation2 + $0x470] sm:$0x3f]
    %v1419 = vld [vmem:[#allocation2 + $0x478] sm:$0x3f]
    %v1420 = vld [vmem:[#allocation2 + $0x480] sm:$0x3f]
    %v1421 = vld [vmem:[#allocation2 + $0x488] sm:$0x3f]
    %v1422 = vld [vmem:[#allocation2 + $0x490] sm:$0x3f]
    %v1423 = vld [vmem:[#allocation2 + $0x498] sm:$0x3f]
    %v1424 = vld [vmem:[#allocation2 + $0x4a0] sm:$0x3f]
    %v1425 = vld [vmem:[#allocation2 + $0x4a8] sm:$0x3f]
    %v1426 = vld [vmem:[#allocation2 + $0x4b0] sm:$0x3f]
    %v1427 = vld [vmem:[#allocation2 + $0x4b8] sm:$0x3f]
    %v1428 = vld [vmem:[#allocation2 + $0x4c0] sm:$0x3f]
    %v1429 = vld [vmem:[#allocation2 + $0x4c8] sm:$0x3f]
    %v1430 = vld [vmem:[#allocation3] sm:$0xff]
    %v1431 = vld [vmem:[#allocation3 + $0x8] sm:$0xff]
    %v1432 = vld [vmem:[#allocation3 + $0x10] sm:$0xff]
    %v1433 = vld [vmem:[#allocation3 + $0x18] sm:$0xff]
    %v1434 = vld [vmem:[#allocation3 + $0x20] sm:$0xff]
    %v1435 = vld [vmem:[#allocation3 + $0x28] sm:$0xff]
    %v1436 = vld [vmem:[#allocation3 + $0x30] sm:$0xff]
    %v1437 = vld [vmem:[#allocation3 + $0x38] sm:$0xff]
    %v1438 = vld [vmem:[#allocation3 + $0x40] sm:$0xff]
    %v1439 = vld [vmem:[#allocation3 + $0x48] sm:$0xff]
    %v1440 = vld [vmem:[#allocation3 + $0x50] sm:$0xff]
    %v1441 = vld [vmem:[#allocation3 + $0x58] sm:$0xff]
    %v1442 = vld [vmem:[#allocation3 + $0x60] sm:$0xff]
    %v1443 = vld [vmem:[#allocation3 + $0x68] sm:$0xff]
    %v1444 = vld [vmem:[#allocation3 + $0x70] sm:$0xff]
    %v1445 = vld [vmem:[#allocation3 + $0x78] sm:$0xff]
    %v1446 = vld [vmem:[#allocation3 + $0x80] sm:$0xff]
    %v1447 = vld [vmem:[#allocation3 + $0x88] sm:$0xff]
    %v1448 = vld [vmem:[#allocation3 + $0x90] sm:$0xff]
    %v1449 = vld [vmem:[#allocation3 + $0x98] sm:$0xff]
    %v1450 = vld [vmem:[#allocation3 + $0xa0] sm:$0xff]
    %v1451 = vld [vmem:[#allocation3 + $0xa8] sm:$0xff]
    %v1452 = vld [vmem:[#allocation3 + $0xb0] sm:$0xff]
    %v1453 = vld [vmem:[#allocation3 + $0xb8] sm:$0xff]
    %v1454 = vld [vmem:[#allocation3 + $0xc0] sm:$0xff]
    %v1455 = vld [vmem:[#allocation3 + $0xc8] sm:$0xff]
    %v1456 = vld [vmem:[#allocation3 + $0xd0] sm:$0xff]
    %v1457 = vld [vmem:[#allocation3 + $0xd8] sm:$0xff]
    %v1458 = vld [vmem:[#allocation3 + $0xe0] sm:$0xff]
    %v1459 = vld [vmem:[#allocation3 + $0xe8] sm:$0xff]
    %v1460 = vld [vmem:[#allocation3 + $0xf0] sm:$0xff]
    %v1461 = vld [vmem:[#allocation3 + $0xf8] sm:$0xff]
    %v1462 = vld [vmem:[#allocation3 + $0x100] sm:$0xff]
    %v1463 = vld [vmem:[#allocation3 + $0x108] sm:$0xff]
    %v1464 = vld [vmem:[#allocation3 + $0x110] sm:$0xff]
    %v1465 = vld [vmem:[#allocation3 + $0x118] sm:$0xff]
    %v1466 = vld [vmem:[#allocation3 + $0x120] sm:$0xff]
    %v1467 = vld [vmem:[#allocation3 + $0x128] sm:$0xff]
    %v1468 = vld [vmem:[#allocation3 + $0x130] sm:$0xff]
    %v1469 = vld [vmem:[#allocation3 + $0x138] sm:$0xff]
    %v1470 = vld [vmem:[#allocation3 + $0x140] sm:$0xff]
    %v1471 = vld [vmem:[#allocation3 + $0x148] sm:$0xff]
    %v1472 = vld [vmem:[#allocation3 + $0x150] sm:$0xff]
    %v1473 = vld [vmem:[#allocation3 + $0x158] sm:$0xff]
    %v1474 = vld [vmem:[#allocation3 + $0x160] sm:$0xff]
    %v1475 = vld [vmem:[#allocation3 + $0x168] sm:$0xff]
    %v1476 = vld [vmem:[#allocation3 + $0x170] sm:$0xff]
    %v1477 = vld [vmem:[#allocation3 + $0x178] sm:$0xff]
    %v1478 = vld [vmem:[#allocation3 + $0x180] sm:$0xff]
    %v1479 = vld [vmem:[#allocation3 + $0x188] sm:$0xff]
    %v1480 = vld [vmem:[#allocation3 + $0x190] sm:$0xff]
    %v1481 = vld [vmem:[#allocation3 + $0x198] sm:$0xff]
    %v1482 = vld [vmem:[#allocation3 + $0x1a0] sm:$0xff]
    %v1483 = vld [vmem:[#allocation3 + $0x1a8] sm:$0xff]
    %v1484 = vld [vmem:[#allocation3 + $0x1b0] sm:$0xff]
    %v1485 = vld [vmem:[#allocation3 + $0x1b8] sm:$0xff]
    %v1486 = vld [vmem:[#allocation3 + $0x1c0] sm:$0xff]
    %v1487 = vld [vmem:[#allocation3 + $0x1c8] sm:$0xff]
    %v1488 = vld [vmem:[#allocation3 + $0x1d0] sm:$0xff]
    %v1489 = vld [vmem:[#allocation3 + $0x1d8] sm:$0xff]
    %v1490 = vld [vmem:[#allocation3 + $0x1e0] sm:$0xff]
    %v1491 = vld [vmem:[#allocation3 + $0x1e8] sm:$0xff]
    %v1492 = vld [vmem:[#allocation3 + $0x1f0] sm:$0xff]
    %v1493 = vld [vmem:[#allocation3 + $0x1f8] sm:$0xff]
    %v1494 = vld [vmem:[#allocation3 + $0x200] sm:$0xff]
    %v1495 = vld [vmem:[#allocation3 + $0x208] sm:$0xff]
    %v1496 = vld [vmem:[#allocation3 + $0x210] sm:$0xff]
    %v1497 = vld [vmem:[#allocation3 + $0x218] sm:$0xff]
    %v1498 = vld [vmem:[#allocation3 + $0x220] sm:$0xff]
    %v1499 = vld [vmem:[#allocation3 + $0x228] sm:$0xff]
    %v1500 = vld [vmem:[#allocation3 + $0x230] sm:$0xff]
    %v1501 = vld [vmem:[#allocation3 + $0x238] sm:$0xff]
    %v1502 = vld [vmem:[#allocation3 + $0x240] sm:$0xff]
    %v1503 = vld [vmem:[#allocation3 + $0x248] sm:$0xff]
    %v1504 = vld [vmem:[#allocation3 + $0x250] sm:$0xff]
    %v1505 = vld [vmem:[#allocation3 + $0x258] sm:$0xff]
    %v1506 = vld [vmem:[#allocation3 + $0x260] sm:$0xff]
    %v1507 = vld [vmem:[#allocation3 + $0x268] sm:$0xff]
    %v1508 = vld [vmem:[#allocation3 + $0x270] sm:$0xff]
    %v1509 = vld [vmem:[#allocation3 + $0x278] sm:$0xff]
    %v1510 = vld [vmem:[#allocation3 + $0x280] sm:$0xff]
    %v1511 = vld [vmem:[#allocation3 + $0x288] sm:$0xff]
    %v1512 = vld [vmem:[#allocation3 + $0x290] sm:$0xff]
    %v1513 = vld [vmem:[#allocation3 + $0x298] sm:$0xff]
    %v1514 = vld [vmem:[#allocation3 + $0x2a0] sm:$0xff]
    %v1515 = vld [vmem:[#allocation3 + $0x2a8] sm:$0xff]
    %v1516 = vld [vmem:[#allocation3 + $0x2b0] sm:$0xff]
    %v1517 = vld [vmem:[#allocation3 + $0x2b8] sm:$0xff]
    %v1518 = vld [vmem:[#allocation3 + $0x2c0] sm:$0xff]
    %v1519 = vld [vmem:[#allocation3 + $0x2c8] sm:$0xff]
    %v1520 = vld [vmem:[#allocation3 + $0x2d0] sm:$0xff]
    %v1521 = vld [vmem:[#allocation3 + $0x2d8] sm:$0xff]
    %v1522 = vld [vmem:[#allocation3 + $0x2e0] sm:$0xff]
    %v1523 = vld [vmem:[#allocation3 + $0x2e8] sm:$0xff]
    %v1524 = vld [vmem:[#allocation3 + $0x2f0] sm:$0xff]
    %v1525 = vld [vmem:[#allocation3 + $0x2f8] sm:$0xff]
    %v1526 = vld [vmem:[#allocation3 + $0x300] sm:$0xff]
    %v1527 = vld [vmem:[#allocation3 + $0x308] sm:$0xff]
    %v1528 = vld [vmem:[#allocation3 + $0x310] sm:$0xff]
    %v1529 = vld [vmem:[#allocation3 + $0x318] sm:$0xff]
    %v1530 = vld [vmem:[#allocation3 + $0x320] sm:$0xff]
    %v1531 = vld [vmem:[#allocation3 + $0x328] sm:$0xff]
    %v1532 = vld [vmem:[#allocation3 + $0x330] sm:$0xff]
    %v1533 = vld [vmem:[#allocation3 + $0x338] sm:$0xff]
    %v1534 = vld [vmem:[#allocation3 + $0x340] sm:$0xff]
    %v1535 = vld [vmem:[#allocation3 + $0x348] sm:$0xff]
    %v1536 = vld [vmem:[#allocation3 + $0x350] sm:$0xff]
    %v1537 = vld [vmem:[#allocation3 + $0x358] sm:$0xff]
    %v1538 = vld [vmem:[#allocation3 + $0x360] sm:$0xff]
    %v1539 = vld [vmem:[#allocation3 + $0x368] sm:$0xff]
    %v1540 = vld [vmem:[#allocation3 + $0x370] sm:$0xff]
    %v1541 = vld [vmem:[#allocation3 + $0x378] sm:$0xff]
    %v1542 = vld [vmem:[#allocation3 + $0x380] sm:$0xff]
    %v1543 = vld [vmem:[#allocation3 + $0x388] sm:$0xff]
    %v1544 = vld [vmem:[#allocation3 + $0x390] sm:$0xff]
    %v1545 = vld [vmem:[#allocation3 + $0x398] sm:$0xff]
    %v1546 = vld [vmem:[#allocation3 + $0x3a0] sm:$0xff]
    %v1547 = vld [vmem:[#allocation3 + $0x3a8] sm:$0xff]
    %v1548 = vld [vmem:[#allocation3 + $0x3b0] sm:$0xff]
    %v1549 = vld [vmem:[#allocation3 + $0x3b8] sm:$0xff]
    %v1550 = vld [vmem:[#allocation3 + $0x3c0] sm:$0xff]
    %v1551 = vld [vmem:[#allocation3 + $0x3c8] sm:$0xff]
    %v1552 = vld [vmem:[#allocation3 + $0x3d0] sm:$0xff]
    %v1553 = vld [vmem:[#allocation3 + $0x3d8] sm:$0xff]
    %v1554 = vld [vmem:[#allocation3 + $0x3e0] sm:$0xff]
    %v1555 = vld [vmem:[#allocation3 + $0x3e8] sm:$0xff]
    %v1556 = vld [vmem:[#allocation3 + $0x3f0] sm:$0xff]
    %v1557 = vld [vmem:[#allocation3 + $0x3f8] sm:$0xff]
    %v1558 = vld [vmem:[#allocation3 + $0x400] sm:$0xff]
    %v1559 = vld [vmem:[#allocation3 + $0x408] sm:$0xff]
    %v1560 = vld [vmem:[#allocation3 + $0x410] sm:$0xff]
    %v1561 = vld [vmem:[#allocation3 + $0x418] sm:$0xff]
    %v1562 = vld [vmem:[#allocation3 + $0x420] sm:$0x3f]
    %v1563 = vld [vmem:[#allocation3 + $0x428] sm:$0x3f]
    %v1564 = vld [vmem:[#allocation3 + $0x430] sm:$0x3f]
    %v1565 = vld [vmem:[#allocation3 + $0x438] sm:$0x3f]
    %v1566 = vld [vmem:[#allocation3 + $0x440] sm:$0x3f]
    %v1567 = vld [vmem:[#allocation3 + $0x448] sm:$0x3f]
    %v1568 = vld [vmem:[#allocation3 + $0x450] sm:$0x3f]
    %v1569 = vld [vmem:[#allocation3 + $0x458] sm:$0x3f]
    %v1570 = vld [vmem:[#allocation3 + $0x460] sm:$0x3f]
    %v1571 = vld [vmem:[#allocation3 + $0x468] sm:$0x3f]
    %v1572 = vld [vmem:[#allocation3 + $0x470] sm:$0x3f]
    %v1573 = vld [vmem:[#allocation3 + $0x478] sm:$0x3f]
    %v1574 = vld [vmem:[#allocation3 + $0x480] sm:$0x3f]
    %v1575 = vld [vmem:[#allocation3 + $0x488] sm:$0x3f]
    %v1576 = vld [vmem:[#allocation3 + $0x490] sm:$0x3f]
    %v1577 = vld [vmem:[#allocation3 + $0x498] sm:$0x3f]
    %v1578 = vld [vmem:[#allocation3 + $0x4a0] sm:$0x3f]
    %v1579 = vld [vmem:[#allocation3 + $0x4a8] sm:$0x3f]
    %v1580 = vld [vmem:[#allocation3 + $0x4b0] sm:$0x3f]
    %v1581 = vld [vmem:[#allocation3 + $0x4b8] sm:$0x3f]
    %v1582 = vld [vmem:[#allocation3 + $0x4c0] sm:$0x3f]
    %v1583 = vld [vmem:[#allocation3 + $0x4c8] sm:$0x3f]
    %vm1584 = vcmp.ge.f32.partialorder %v1430, 0.0
    %vm1585 = vcmp.ge.f32.partialorder %v1431, 0.0
    %vm1586 = vcmp.ge.f32.partialorder %v1432, 0.0
    %vm1587 = vcmp.ge.f32.partialorder %v1433, 0.0
    %vm1588 = vcmp.ge.f32.partialorder %v1434, 0.0
    %vm1589 = vcmp.ge.f32.partialorder %v1435, 0.0
    %vm1590 = vcmp.ge.f32.partialorder %v1436, 0.0
    %vm1591 = vcmp.ge.f32.partialorder %v1437, 0.0
    %vm1592 = vcmp.ge.f32.partialorder %v1438, 0.0
    %vm1593 = vcmp.ge.f32.partialorder %v1439, 0.0
    %vm1594 = vcmp.ge.f32.partialorder %v1440, 0.0
    %vm1595 = vcmp.ge.f32.partialorder %v1441, 0.0
    %vm1596 = vcmp.ge.f32.partialorder %v1442, 0.0
    %vm1597 = vcmp.ge.f32.partialorder %v1443, 0.0
    %vm1598 = vcmp.ge.f32.partialorder %v1444, 0.0
    %vm1599 = vcmp.ge.f32.partialorder %v1445, 0.0
    %vm1600 = vcmp.ge.f32.partialorder %v1446, 0.0
    %vm1601 = vcmp.ge.f32.partialorder %v1447, 0.0
    %vm1602 = vcmp.ge.f32.partialorder %v1448, 0.0
    %vm1603 = vcmp.ge.f32.partialorder %v1449, 0.0
    %vm1604 = vcmp.ge.f32.partialorder %v1450, 0.0
    %vm1605 = vcmp.ge.f32.partialorder %v1451, 0.0
    %vm1606 = vcmp.ge.f32.partialorder %v1452, 0.0
    %vm1607 = vcmp.ge.f32.partialorder %v1453, 0.0
    %vm1608 = vcmp.ge.f32.partialorder %v1454, 0.0
    %vm1609 = vcmp.ge.f32.partialorder %v1455, 0.0
    %vm1610 = vcmp.ge.f32.partialorder %v1456, 0.0
    %vm1611 = vcmp.ge.f32.partialorder %v1457, 0.0
    %vm1612 = vcmp.ge.f32.partialorder %v1458, 0.0
    %vm1613 = vcmp.ge.f32.partialorder %v1459, 0.0
    %vm1614 = vcmp.ge.f32.partialorder %v1460, 0.0
    %vm1615 = vcmp.ge.f32.partialorder %v1461, 0.0
    %vm1616 = vcmp.ge.f32.partialorder %v1462, 0.0
    %vm1617 = vcmp.ge.f32.partialorder %v1463, 0.0
    %vm1618 = vcmp.ge.f32.partialorder %v1464, 0.0
    %vm1619 = vcmp.ge.f32.partialorder %v1465, 0.0
    %vm1620 = vcmp.ge.f32.partialorder %v1466, 0.0
    %vm1621 = vcmp.ge.f32.partialorder %v1467, 0.0
    %vm1622 = vcmp.ge.f32.partialorder %v1468, 0.0
    %vm1623 = vcmp.ge.f32.partialorder %v1469, 0.0
    %vm1624 = vcmp.ge.f32.partialorder %v1470, 0.0
    %vm1625 = vcmp.ge.f32.partialorder %v1471, 0.0
    %vm1626 = vcmp.ge.f32.partialorder %v1472, 0.0
    %vm1627 = vcmp.ge.f32.partialorder %v1473, 0.0
    %vm1628 = vcmp.ge.f32.partialorder %v1474, 0.0
    %vm1629 = vcmp.ge.f32.partialorder %v1475, 0.0
    %vm1630 = vcmp.ge.f32.partialorder %v1476, 0.0
    %vm1631 = vcmp.ge.f32.partialorder %v1477, 0.0
    %vm1632 = vcmp.ge.f32.partialorder %v1478, 0.0
    %vm1633 = vcmp.ge.f32.partialorder %v1479, 0.0
    %vm1634 = vcmp.ge.f32.partialorder %v1480, 0.0
    %vm1635 = vcmp.ge.f32.partialorder %v1481, 0.0
    %vm1636 = vcmp.ge.f32.partialorder %v1482, 0.0
    %vm1637 = vcmp.ge.f32.partialorder %v1483, 0.0
    %vm1638 = vcmp.ge.f32.partialorder %v1484, 0.0
    %vm1639 = vcmp.ge.f32.partialorder %v1485, 0.0
    %vm1640 = vcmp.ge.f32.partialorder %v1486, 0.0
    %vm1641 = vcmp.ge.f32.partialorder %v1487, 0.0
    %vm1642 = vcmp.ge.f32.partialorder %v1488, 0.0
    %vm1643 = vcmp.ge.f32.partialorder %v1489, 0.0
    %vm1644 = vcmp.ge.f32.partialorder %v1490, 0.0
    %vm1645 = vcmp.ge.f32.partialorder %v1491, 0.0
    %vm1646 = vcmp.ge.f32.partialorder %v1492, 0.0
    %vm1647 = vcmp.ge.f32.partialorder %v1493, 0.0
    %vm1648 = vcmp.ge.f32.partialorder %v1494, 0.0
    %vm1649 = vcmp.ge.f32.partialorder %v1495, 0.0
    %vm1650 = vcmp.ge.f32.partialorder %v1496, 0.0
    %vm1651 = vcmp.ge.f32.partialorder %v1497, 0.0
    %vm1652 = vcmp.ge.f32.partialorder %v1498, 0.0
    %vm1653 = vcmp.ge.f32.partialorder %v1499, 0.0
    %vm1654 = vcmp.ge.f32.partialorder %v1500, 0.0
    %vm1655 = vcmp.ge.f32.partialorder %v1501, 0.0
    %vm1656 = vcmp.ge.f32.partialorder %v1502, 0.0
    %vm1657 = vcmp.ge.f32.partialorder %v1503, 0.0
    %vm1658 = vcmp.ge.f32.partialorder %v1504, 0.0
    %vm1659 = vcmp.ge.f32.partialorder %v1505, 0.0
    %vm1660 = vcmp.ge.f32.partialorder %v1506, 0.0
    %vm1661 = vcmp.ge.f32.partialorder %v1507, 0.0
    %vm1662 = vcmp.ge.f32.partialorder %v1508, 0.0
    %vm1663 = vcmp.ge.f32.partialorder %v1509, 0.0
    %vm1664 = vcmp.ge.f32.partialorder %v1510, 0.0
    %vm1665 = vcmp.ge.f32.partialorder %v1511, 0.0
    %vm1666 = vcmp.ge.f32.partialorder %v1512, 0.0
    %vm1667 = vcmp.ge.f32.partialorder %v1513, 0.0
    %vm1668 = vcmp.ge.f32.partialorder %v1514, 0.0
    %vm1669 = vcmp.ge.f32.partialorder %v1515, 0.0
    %vm1670 = vcmp.ge.f32.partialorder %v1516, 0.0
    %vm1671 = vcmp.ge.f32.partialorder %v1517, 0.0
    %vm1672 = vcmp.ge.f32.partialorder %v1518, 0.0
    %vm1673 = vcmp.ge.f32.partialorder %v1519, 0.0
    %vm1674 = vcmp.ge.f32.partialorder %v1520, 0.0
    %vm1675 = vcmp.ge.f32.partialorder %v1521, 0.0
    %vm1676 = vcmp.ge.f32.partialorder %v1522, 0.0
    %vm1677 = vcmp.ge.f32.partialorder %v1523, 0.0
    %vm1678 = vcmp.ge.f32.partialorder %v1524, 0.0
    %vm1679 = vcmp.ge.f32.partialorder %v1525, 0.0
    %vm1680 = vcmp.ge.f32.partialorder %v1526, 0.0
    %vm1681 = vcmp.ge.f32.partialorder %v1527, 0.0
    %vm1682 = vcmp.ge.f32.partialorder %v1528, 0.0
    %vm1683 = vcmp.ge.f32.partialorder %v1529, 0.0
    %vm1684 = vcmp.ge.f32.partialorder %v1530, 0.0
    %vm1685 = vcmp.ge.f32.partialorder %v1531, 0.0
    %vm1686 = vcmp.ge.f32.partialorder %v1532, 0.0
    %vm1687 = vcmp.ge.f32.partialorder %v1533, 0.0
    %vm1688 = vcmp.ge.f32.partialorder %v1534, 0.0
    %vm1689 = vcmp.ge.f32.partialorder %v1535, 0.0
    %vm1690 = vcmp.ge.f32.partialorder %v1536, 0.0
    %vm1691 = vcmp.ge.f32.partialorder %v1537, 0.0
    %vm1692 = vcmp.ge.f32.partialorder %v1538, 0.0
    %vm1693 = vcmp.ge.f32.partialorder %v1539, 0.0
    %vm1694 = vcmp.ge.f32.partialorder %v1540, 0.0
    %vm1695 = vcmp.ge.f32.partialorder %v1541, 0.0
    %vm1696 = vcmp.ge.f32.partialorder %v1542, 0.0
    %vm1697 = vcmp.ge.f32.partialorder %v1543, 0.0
    %vm1698 = vcmp.ge.f32.partialorder %v1544, 0.0
    %vm1699 = vcmp.ge.f32.partialorder %v1545, 0.0
    %vm1700 = vcmp.ge.f32.partialorder %v1546, 0.0
    %vm1701 = vcmp.ge.f32.partialorder %v1547, 0.0
    %vm1702 = vcmp.ge.f32.partialorder %v1548, 0.0
    %vm1703 = vcmp.ge.f32.partialorder %v1549, 0.0
    %vm1704 = vcmp.ge.f32.partialorder %v1550, 0.0
    %vm1705 = vcmp.ge.f32.partialorder %v1551, 0.0
    %vm1706 = vcmp.ge.f32.partialorder %v1552, 0.0
    %vm1707 = vcmp.ge.f32.partialorder %v1553, 0.0
    %vm1708 = vcmp.ge.f32.partialorder %v1554, 0.0
    %vm1709 = vcmp.ge.f32.partialorder %v1555, 0.0
    %vm1710 = vcmp.ge.f32.partialorder %v1556, 0.0
    %vm1711 = vcmp.ge.f32.partialorder %v1557, 0.0
    %vm1712 = vcmp.ge.f32.partialorder %v1558, 0.0
    %vm1713 = vcmp.ge.f32.partialorder %v1559, 0.0
    %vm1714 = vcmp.ge.f32.partialorder %v1560, 0.0
    %vm1715 = vcmp.ge.f32.partialorder %v1561, 0.0
    %vm1716 = vcmp.ge.f32.partialorder %v1562, 0.0
    %vm1717 = vcmp.ge.f32.partialorder %v1563, 0.0
    %vm1718 = vcmp.ge.f32.partialorder %v1564, 0.0
    %vm1719 = vcmp.ge.f32.partialorder %v1565, 0.0
    %vm1720 = vcmp.ge.f32.partialorder %v1566, 0.0
    %vm1721 = vcmp.ge.f32.partialorder %v1567, 0.0
    %vm1722 = vcmp.ge.f32.partialorder %v1568, 0.0
    %vm1723 = vcmp.ge.f32.partialorder %v1569, 0.0
    %vm1724 = vcmp.ge.f32.partialorder %v1570, 0.0
    %vm1725 = vcmp.ge.f32.partialorder %v1571, 0.0
    %vm1726 = vcmp.ge.f32.partialorder %v1572, 0.0
    %vm1727 = vcmp.ge.f32.partialorder %v1573, 0.0
    %vm1728 = vcmp.ge.f32.partialorder %v1574, 0.0
    %vm1729 = vcmp.ge.f32.partialorder %v1575, 0.0
    %vm1730 = vcmp.ge.f32.partialorder %v1576, 0.0
    %vm1731 = vcmp.ge.f32.partialorder %v1577, 0.0
    %vm1732 = vcmp.ge.f32.partialorder %v1578, 0.0
    %vm1733 = vcmp.ge.f32.partialorder %v1579, 0.0
    %vm1734 = vcmp.ge.f32.partialorder %v1580, 0.0
    %vm1735 = vcmp.ge.f32.partialorder %v1581, 0.0
    %vm1736 = vcmp.ge.f32.partialorder %v1582, 0.0
    %vm1737 = vcmp.ge.f32.partialorder %v1583, 0.0
    %v1738 = vand.u32 2147483647, %v1276
    %v1739 = vand.u32 2147483647, %v1277
    %v1740 = vand.u32 2147483647, %v1278
    %v1741 = vand.u32 2147483647, %v1279
    %v1742 = vand.u32 2147483647, %v1280
    %v1743 = vand.u32 2147483647, %v1281
    %v1744 = vand.u32 2147483647, %v1282
    %v1745 = vand.u32 2147483647, %v1283
    %v1746 = vand.u32 2147483647, %v1284
    %v1747 = vand.u32 2147483647, %v1285
    %v1748 = vand.u32 2147483647, %v1286
    %v1749 = vand.u32 2147483647, %v1287
    %v1750 = vand.u32 2147483647, %v1288
    %v1751 = vand.u32 2147483647, %v1289
    %v1752 = vand.u32 2147483647, %v1290
    %v1753 = vand.u32 2147483647, %v1291
    %v1754 = vand.u32 2147483647, %v1292
    %v1755 = vand.u32 2147483647, %v1293
    %v1756 = vand.u32 2147483647, %v1294
    %v1757 = vand.u32 2147483647, %v1295
    %v1758 = vand.u32 2147483647, %v1296
    %v1759 = vand.u32 2147483647, %v1297
    %v1760 = vand.u32 2147483647, %v1298
    %v1761 = vand.u32 2147483647, %v1299
    %v1762 = vand.u32 2147483647, %v1300
    %v1763 = vand.u32 2147483647, %v1301
    %v1764 = vand.u32 2147483647, %v1302
    %v1765 = vand.u32 2147483647, %v1303
    %v1766 = vand.u32 2147483647, %v1304
    %v1767 = vand.u32 2147483647, %v1305
    %v1768 = vand.u32 2147483647, %v1306
    %v1769 = vand.u32 2147483647, %v1307
    %v1770 = vand.u32 2147483647, %v1308
    %v1771 = vand.u32 2147483647, %v1309
    %v1772 = vand.u32 2147483647, %v1310
    %v1773 = vand.u32 2147483647, %v1311
    %v1774 = vand.u32 2147483647, %v1312
    %v1775 = vand.u32 2147483647, %v1313
    %v1776 = vand.u32 2147483647, %v1314
    %v1777 = vand.u32 2147483647, %v1315
    %v1778 = vand.u32 2147483647, %v1316
    %v1779 = vand.u32 2147483647, %v1317
    %v1780 = vand.u32 2147483647, %v1318
    %v1781 = vand.u32 2147483647, %v1319
    %v1782 = vand.u32 2147483647, %v1320
    %v1783 = vand.u32 2147483647, %v1321
    %v1784 = vand.u32 2147483647, %v1322
    %v1785 = vand.u32 2147483647, %v1323
    %v1786 = vand.u32 2147483647, %v1324
    %v1787 = vand.u32 2147483647, %v1325
    %v1788 = vand.u32 2147483647, %v1326
    %v1789 = vand.u32 2147483647, %v1327
    %v1790 = vand.u32 2147483647, %v1328
    %v1791 = vand.u32 2147483647, %v1329
    %v1792 = vand.u32 2147483647, %v1330
    %v1793 = vand.u32 2147483647, %v1331
    %v1794 = vand.u32 2147483647, %v1332
    %v1795 = vand.u32 2147483647, %v1333
    %v1796 = vand.u32 2147483647, %v1334
    %v1797 = vand.u32 2147483647, %v1335
    %v1798 = vand.u32 2147483647, %v1336
    %v1799 = vand.u32 2147483647, %v1337
    %v1800 = vand.u32 2147483647, %v1338
    %v1801 = vand.u32 2147483647, %v1339
    %v1802 = vand.u32 2147483647, %v1340
    %v1803 = vand.u32 2147483647, %v1341
    %v1804 = vand.u32 2147483647, %v1342
    %v1805 = vand.u32 2147483647, %v1343
    %v1806 = vand.u32 2147483647, %v1344
    %v1807 = vand.u32 2147483647, %v1345
    %v1808 = vand.u32 2147483647, %v1346
    %v1809 = vand.u32 2147483647, %v1347
    %v1810 = vand.u32 2147483647, %v1348
    %v1811 = vand.u32 2147483647, %v1349
    %v1812 = vand.u32 2147483647, %v1350
    %v1813 = vand.u32 2147483647, %v1351
    %v1814 = vand.u32 2147483647, %v1352
    %v1815 = vand.u32 2147483647, %v1353
    %v1816 = vand.u32 2147483647, %v1354
    %v1817 = vand.u32 2147483647, %v1355
    %v1818 = vand.u32 2147483647, %v1356
    %v1819 = vand.u32 2147483647, %v1357
    %v1820 = vand.u32 2147483647, %v1358
    %v1821 = vand.u32 2147483647, %v1359
    %v1822 = vand.u32 2147483647, %v1360
    %v1823 = vand.u32 2147483647, %v1361
    %v1824 = vand.u32 2147483647, %v1362
    %v1825 = vand.u32 2147483647, %v1363
    %v1826 = vand.u32 2147483647, %v1364
    %v1827 = vand.u32 2147483647, %v1365
    %v1828 = vand.u32 2147483647, %v1366
    %v1829 = vand.u32 2147483647, %v1367
    %v1830 = vand.u32 2147483647, %v1368
    %v1831 = vand.u32 2147483647, %v1369
    %v1832 = vand.u32 2147483647, %v1370
    %v1833 = vand.u32 2147483647, %v1371
    %v1834 = vand.u32 2147483647, %v1372
    %v1835 = vand.u32 2147483647, %v1373
    %v1836 = vand.u32 2147483647, %v1374
    %v1837 = vand.u32 2147483647, %v1375
    %v1838 = vand.u32 2147483647, %v1376
    %v1839 = vand.u32 2147483647, %v1377
    %v1840 = vand.u32 2147483647, %v1378
    %v1841 = vand.u32 2147483647, %v1379
    %v1842 = vand.u32 2147483647, %v1380
    %v1843 = vand.u32 2147483647, %v1381
    %v1844 = vand.u32 2147483647, %v1382
    %v1845 = vand.u32 2147483647, %v1383
    %v1846 = vand.u32 2147483647, %v1384
    %v1847 = vand.u32 2147483647, %v1385
    %v1848 = vand.u32 2147483647, %v1386
    %v1849 = vand.u32 2147483647, %v1387
    %v1850 = vand.u32 2147483647, %v1388
    %v1851 = vand.u32 2147483647, %v1389
    %v1852 = vand.u32 2147483647, %v1390
    %v1853 = vand.u32 2147483647, %v1391
    %v1854 = vand.u32 2147483647, %v1392
    %v1855 = vand.u32 2147483647, %v1393
    %v1856 = vand.u32 2147483647, %v1394
    %v1857 = vand.u32 2147483647, %v1395
    %v1858 = vand.u32 2147483647, %v1396
    %v1859 = vand.u32 2147483647, %v1397
    %v1860 = vand.u32 2147483647, %v1398
    %v1861 = vand.u32 2147483647, %v1399
    %v1862 = vand.u32 2147483647, %v1400
    %v1863 = vand.u32 2147483647, %v1401
    %v1864 = vand.u32 2147483647, %v1402
    %v1865 = vand.u32 2147483647, %v1403
    %v1866 = vand.u32 2147483647, %v1404
    %v1867 = vand.u32 2147483647, %v1405
    %v1868 = vand.u32 2147483647, %v1406
    %v1869 = vand.u32 2147483647, %v1407
    %v1870 = vand.u32 2147483647, %v1408
    %v1871 = vand.u32 2147483647, %v1409
    %v1872 = vand.u32 2147483647, %v1410
    %v1873 = vand.u32 2147483647, %v1411
    %v1874 = vand.u32 2147483647, %v1412
    %v1875 = vand.u32 2147483647, %v1413
    %v1876 = vand.u32 2147483647, %v1414
    %v1877 = vand.u32 2147483647, %v1415
    %v1878 = vand.u32 2147483647, %v1416
    %v1879 = vand.u32 2147483647, %v1417
    %v1880 = vand.u32 2147483647, %v1418
    %v1881 = vand.u32 2147483647, %v1419
    %v1882 = vand.u32 2147483647, %v1420
    %v1883 = vand.u32 2147483647, %v1421
    %v1884 = vand.u32 2147483647, %v1422
    %v1885 = vand.u32 2147483647, %v1423
    %v1886 = vand.u32 2147483647, %v1424
    %v1887 = vand.u32 2147483647, %v1425
    %v1888 = vand.u32 2147483647, %v1426
    %v1889 = vand.u32 2147483647, %v1427
    %v1890 = vand.u32 2147483647, %v1428
    %v1891 = vand.u32 2147483647, %v1429
    %v1892 = vsub.f32 0.0, %v1738
    %v1893 = vsub.f32 0.0, %v1739
    %v1894 = vsub.f32 0.0, %v1740
    %v1895 = vsub.f32 0.0, %v1741
    %v1896 = vsub.f32 0.0, %v1742
    %v1897 = vsub.f32 0.0, %v1743
    %v1898 = vsub.f32 0.0, %v1744
    %v1899 = vsub.f32 0.0, %v1745
    %v1900 = vsub.f32 0.0, %v1746
    %v1901 = vsub.f32 0.0, %v1747
    %v1902 = vsub.f32 0.0, %v1748
    %v1903 = vsub.f32 0.0, %v1749
    %v1904 = vsub.f32 0.0, %v1750
    %v1905 = vsub.f32 0.0, %v1751
    %v1906 = vsub.f32 0.0, %v1752
    %v1907 = vsub.f32 0.0, %v1753
    %v1908 = vsub.f32 0.0, %v1754
    %v1909 = vsub.f32 0.0, %v1755
    %v1910 = vsub.f32 0.0, %v1756
    %v1911 = vsub.f32 0.0, %v1757
    %v1912 = vsub.f32 0.0, %v1758
    %v1913 = vsub.f32 0.0, %v1759
    %v1914 = vsub.f32 0.0, %v1760
    %v1915 = vsub.f32 0.0, %v1761
    %v1916 = vsub.f32 0.0, %v1762
    %v1917 = vsub.f32 0.0, %v1763
    %v1918 = vsub.f32 0.0, %v1764
    %v1919 = vsub.f32 0.0, %v1765
    %v1920 = vsub.f32 0.0, %v1766
    %v1921 = vsub.f32 0.0, %v1767
    %v1922 = vsub.f32 0.0, %v1768
    %v1923 = vsub.f32 0.0, %v1769
    %v1924 = vsub.f32 0.0, %v1770
    %v1925 = vsub.f32 0.0, %v1771
    %v1926 = vsub.f32 0.0, %v1772
    %v1927 = vsub.f32 0.0, %v1773
    %v1928 = vsub.f32 0.0, %v1774
    %v1929 = vsub.f32 0.0, %v1775
    %v1930 = vsub.f32 0.0, %v1776
    %v1931 = vsub.f32 0.0, %v1777
    %v1932 = vsub.f32 0.0, %v1778
    %v1933 = vsub.f32 0.0, %v1779
    %v1934 = vsub.f32 0.0, %v1780
    %v1935 = vsub.f32 0.0, %v1781
    %v1936 = vsub.f32 0.0, %v1782
    %v1937 = vsub.f32 0.0, %v1783
    %v1938 = vsub.f32 0.0, %v1784
    %v1939 = vsub.f32 0.0, %v1785
    %v1940 = vsub.f32 0.0, %v1786
    %v1941 = vsub.f32 0.0, %v1787
    %v1942 = vsub.f32 0.0, %v1788
    %v1943 = vsub.f32 0.0, %v1789
    %v1944 = vsub.f32 0.0, %v1790
    %v1945 = vsub.f32 0.0, %v1791
    %v1946 = vsub.f32 0.0, %v1792
    %v1947 = vsub.f32 0.0, %v1793
    %v1948 = vsub.f32 0.0, %v1794
    %v1949 = vsub.f32 0.0, %v1795
    %v1950 = vsub.f32 0.0, %v1796
    %v1951 = vsub.f32 0.0, %v1797
    %v1952 = vsub.f32 0.0, %v1798
    %v1953 = vsub.f32 0.0, %v1799
    %v1954 = vsub.f32 0.0, %v1800
    %v1955 = vsub.f32 0.0, %v1801
    %v1956 = vsub.f32 0.0, %v1802
    %v1957 = vsub.f32 0.0, %v1803
    %v1958 = vsub.f32 0.0, %v1804
    %v1959 = vsub.f32 0.0, %v1805
    %v1960 = vsub.f32 0.0, %v1806
    %v1961 = vsub.f32 0.0, %v1807
    %v1962 = vsub.f32 0.0, %v1808
    %v1963 = vsub.f32 0.0, %v1809
    %v1964 = vsub.f32 0.0, %v1810
    %v1965 = vsub.f32 0.0, %v1811
    %v1966 = vsub.f32 0.0, %v1812
    %v1967 = vsub.f32 0.0, %v1813
    %v1968 = vsub.f32 0.0, %v1814
    %v1969 = vsub.f32 0.0, %v1815
    %v1970 = vsub.f32 0.0, %v1816
    %v1971 = vsub.f32 0.0, %v1817
    %v1972 = vsub.f32 0.0, %v1818
    %v1973 = vsub.f32 0.0, %v1819
    %v1974 = vsub.f32 0.0, %v1820
    %v1975 = vsub.f32 0.0, %v1821
    %v1976 = vsub.f32 0.0, %v1822
    %v1977 = vsub.f32 0.0, %v1823
    %v1978 = vsub.f32 0.0, %v1824
    %v1979 = vsub.f32 0.0, %v1825
    %v1980 = vsub.f32 0.0, %v1826
    %v1981 = vsub.f32 0.0, %v1827
    %v1982 = vsub.f32 0.0, %v1828
    %v1983 = vsub.f32 0.0, %v1829
    %v1984 = vsub.f32 0.0, %v1830
    %v1985 = vsub.f32 0.0, %v1831
    %v1986 = vsub.f32 0.0, %v1832
    %v1987 = vsub.f32 0.0, %v1833
    %v1988 = vsub.f32 0.0, %v1834
    %v1989 = vsub.f32 0.0, %v1835
    %v1990 = vsub.f32 0.0, %v1836
    %v1991 = vsub.f32 0.0, %v1837
    %v1992 = vsub.f32 0.0, %v1838
    %v1993 = vsub.f32 0.0, %v1839
    %v1994 = vsub.f32 0.0, %v1840
    %v1995 = vsub.f32 0.0, %v1841
    %v1996 = vsub.f32 0.0, %v1842
    %v1997 = vsub.f32 0.0, %v1843
    %v1998 = vsub.f32 0.0, %v1844
    %v1999 = vsub.f32 0.0, %v1845
    %v2000 = vsub.f32 0.0, %v1846
    %v2001 = vsub.f32 0.0, %v1847
    %v2002 = vsub.f32 0.0, %v1848
    %v2003 = vsub.f32 0.0, %v1849
    %v2004 = vsub.f32 0.0, %v1850
    %v2005 = vsub.f32 0.0, %v1851
    %v2006 = vsub.f32 0.0, %v1852
    %v2007 = vsub.f32 0.0, %v1853
    %v2008 = vsub.f32 0.0, %v1854
    %v2009 = vsub.f32 0.0, %v1855
    %v2010 = vsub.f32 0.0, %v1856
    %v2011 = vsub.f32 0.0, %v1857
    %v2012 = vsub.f32 0.0, %v1858
    %v2013 = vsub.f32 0.0, %v1859
    %v2014 = vsub.f32 0.0, %v1860
    %v2015 = vsub.f32 0.0, %v1861
    %v2016 = vsub.f32 0.0, %v1862
    %v2017 = vsub.f32 0.0, %v1863
    %v2018 = vsub.f32 0.0, %v1864
    %v2019 = vsub.f32 0.0, %v1865
    %v2020 = vsub.f32 0.0, %v1866
    %v2021 = vsub.f32 0.0, %v1867
    %v2022 = vsub.f32 0.0, %v1868
    %v2023 = vsub.f32 0.0, %v1869
    %v2024 = vsub.f32 0.0, %v1870
    %v2025 = vsub.f32 0.0, %v1871
    %v2026 = vsub.f32 0.0, %v1872
    %v2027 = vsub.f32 0.0, %v1873
    %v2028 = vsub.f32 0.0, %v1874
    %v2029 = vsub.f32 0.0, %v1875
    %v2030 = vsub.f32 0.0, %v1876
    %v2031 = vsub.f32 0.0, %v1877
    %v2032 = vsub.f32 0.0, %v1878
    %v2033 = vsub.f32 0.0, %v1879
    %v2034 = vsub.f32 0.0, %v1880
    %v2035 = vsub.f32 0.0, %v1881
    %v2036 = vsub.f32 0.0, %v1882
    %v2037 = vsub.f32 0.0, %v1883
    %v2038 = vsub.f32 0.0, %v1884
    %v2039 = vsub.f32 0.0, %v1885
    %v2040 = vsub.f32 0.0, %v1886
    %v2041 = vsub.f32 0.0, %v1887
    %v2042 = vsub.f32 0.0, %v1888
    %v2043 = vsub.f32 0.0, %v1889
    %v2044 = vsub.f32 0.0, %v1890
    %v2045 = vsub.f32 0.0, %v1891
    %v2046 = vmul.f32 %v1892, 1.442695
    %v2047 = vpow.pop %v2046
    %v2048 = vmul.f32 %v1893, 1.442695
    %v2049 = vpow.pop %v2048
    %v2050 = vmul.f32 %v1894, 1.442695
    %v2051 = vpow.pop %v2050
    %v2052 = vmul.f32 %v1895, 1.442695
    %v2053 = vpow.pop %v2052
    %v2054 = vmul.f32 %v1896, 1.442695
    %v2055 = vpow.pop %v2054
    %v2056 = vmul.f32 %v1897, 1.442695
    %v2057 = vpow.pop %v2056
    %v2058 = vmul.f32 %v1898, 1.442695
    %v2059 = vpow.pop %v2058
    %v2060 = vmul.f32 %v1899, 1.442695
    %v2061 = vpow.pop %v2060
    %v2062 = vmul.f32 %v1900, 1.442695
    %v2063 = vpow.pop %v2062
    %v2064 = vmul.f32 %v1901, 1.442695
    %v2065 = vpow.pop %v2064
    %v2066 = vmul.f32 %v1902, 1.442695
    %v2067 = vpow.pop %v2066
    %v2068 = vmul.f32 %v1903, 1.442695
    %v2069 = vpow.pop %v2068
    %v2070 = vmul.f32 %v1904, 1.442695
    %v2071 = vpow.pop %v2070
    %v2072 = vmul.f32 %v1905, 1.442695
    %v2073 = vpow.pop %v2072
    %v2074 = vmul.f32 %v1906, 1.442695
    %v2075 = vpow.pop %v2074
    %v2076 = vmul.f32 %v1907, 1.442695
    %v2077 = vpow.pop %v2076
    %v2078 = vmul.f32 %v1908, 1.442695
    %v2079 = vpow.pop %v2078
    %v2080 = vmul.f32 %v1909, 1.442695
    %v2081 = vpow.pop %v2080
    %v2082 = vmul.f32 %v1910, 1.442695
    %v2083 = vpow.pop %v2082
    %v2084 = vmul.f32 %v1911, 1.442695
    %v2085 = vpow.pop %v2084
    %v2086 = vmul.f32 %v1912, 1.442695
    %v2087 = vpow.pop %v2086
    %v2088 = vmul.f32 %v1913, 1.442695
    %v2089 = vpow.pop %v2088
    %v2090 = vmul.f32 %v1914, 1.442695
    %v2091 = vpow.pop %v2090
    %v2092 = vmul.f32 %v1915, 1.442695
    %v2093 = vpow.pop %v2092
    %v2094 = vmul.f32 %v1916, 1.442695
    %v2095 = vpow.pop %v2094
    %v2096 = vmul.f32 %v1917, 1.442695
    %v2097 = vpow.pop %v2096
    %v2098 = vmul.f32 %v1918, 1.442695
    %v2099 = vpow.pop %v2098
    %v2100 = vmul.f32 %v1919, 1.442695
    %v2101 = vpow.pop %v2100
    %v2102 = vmul.f32 %v1920, 1.442695
    %v2103 = vpow.pop %v2102
    %v2104 = vmul.f32 %v1921, 1.442695
    %v2105 = vpow.pop %v2104
    %v2106 = vmul.f32 %v1922, 1.442695
    %v2107 = vpow.pop %v2106
    %v2108 = vmul.f32 %v1923, 1.442695
    %v2109 = vpow.pop %v2108
    %v2110 = vmul.f32 %v1924, 1.442695
    %v2111 = vpow.pop %v2110
    %v2112 = vmul.f32 %v1925, 1.442695
    %v2113 = vpow.pop %v2112
    %v2114 = vmul.f32 %v1926, 1.442695
    %v2115 = vpow.pop %v2114
    %v2116 = vmul.f32 %v1927, 1.442695
    %v2117 = vpow.pop %v2116
    %v2118 = vmul.f32 %v1928, 1.442695
    %v2119 = vpow.pop %v2118
    %v2120 = vmul.f32 %v1929, 1.442695
    %v2121 = vpow.pop %v2120
    %v2122 = vmul.f32 %v1930, 1.442695
    %v2123 = vpow.pop %v2122
    %v2124 = vmul.f32 %v1931, 1.442695
    %v2125 = vpow.pop %v2124
    %v2126 = vmul.f32 %v1932, 1.442695
    %v2127 = vpow.pop %v2126
    %v2128 = vmul.f32 %v1933, 1.442695
    %v2129 = vpow.pop %v2128
    %v2130 = vmul.f32 %v1934, 1.442695
    %v2131 = vpow.pop %v2130
    %v2132 = vmul.f32 %v1935, 1.442695
    %v2133 = vpow.pop %v2132
    %v2134 = vmul.f32 %v1936, 1.442695
    %v2135 = vpow.pop %v2134
    %v2136 = vmul.f32 %v1937, 1.442695
    %v2137 = vpow.pop %v2136
    %v2138 = vmul.f32 %v1938, 1.442695
    %v2139 = vpow.pop %v2138
    %v2140 = vmul.f32 %v1939, 1.442695
    %v2141 = vpow.pop %v2140
    %v2142 = vmul.f32 %v1940, 1.442695
    %v2143 = vpow.pop %v2142
    %v2144 = vmul.f32 %v1941, 1.442695
    %v2145 = vpow.pop %v2144
    %v2146 = vmul.f32 %v1942, 1.442695
    %v2147 = vpow.pop %v2146
    %v2148 = vmul.f32 %v1943, 1.442695
    %v2149 = vpow.pop %v2148
    %v2150 = vmul.f32 %v1944, 1.442695
    %v2151 = vpow.pop %v2150
    %v2152 = vmul.f32 %v1945, 1.442695
    %v2153 = vpow.pop %v2152
    %v2154 = vmul.f32 %v1946, 1.442695
    %v2155 = vpow.pop %v2154
    %v2156 = vmul.f32 %v1947, 1.442695
    %v2157 = vpow.pop %v2156
    %v2158 = vmul.f32 %v1948, 1.442695
    %v2159 = vpow.pop %v2158
    %v2160 = vmul.f32 %v1949, 1.442695
    %v2161 = vpow.pop %v2160
    %v2162 = vmul.f32 %v1950, 1.442695
    %v2163 = vpow.pop %v2162
    %v2164 = vmul.f32 %v1951, 1.442695
    %v2165 = vpow.pop %v2164
    %v2166 = vmul.f32 %v1952, 1.442695
    %v2167 = vpow.pop %v2166
    %v2168 = vmul.f32 %v1953, 1.442695
    %v2169 = vpow.pop %v2168
    %v2170 = vmul.f32 %v1954, 1.442695
    %v2171 = vpow.pop %v2170
    %v2172 = vmul.f32 %v1955, 1.442695
    %v2173 = vpow.pop %v2172
    %v2174 = vmul.f32 %v1956, 1.442695
    %v2175 = vpow.pop %v2174
    %v2176 = vmul.f32 %v1957, 1.442695
    %v2177 = vpow.pop %v2176
    %v2178 = vmul.f32 %v1958, 1.442695
    %v2179 = vpow.pop %v2178
    %v2180 = vmul.f32 %v1959, 1.442695
    %v2181 = vpow.pop %v2180
    %v2182 = vmul.f32 %v1960, 1.442695
    %v2183 = vpow.pop %v2182
    %v2184 = vmul.f32 %v1961, 1.442695
    %v2185 = vpow.pop %v2184
    %v2186 = vmul.f32 %v1962, 1.442695
    %v2187 = vpow.pop %v2186
    %v2188 = vmul.f32 %v1963, 1.442695
    %v2189 = vpow.pop %v2188
    %v2190 = vmul.f32 %v1964, 1.442695
    %v2191 = vpow.pop %v2190
    %v2192 = vmul.f32 %v1965, 1.442695
    %v2193 = vpow.pop %v2192
    %v2194 = vmul.f32 %v1966, 1.442695
    %v2195 = vpow.pop %v2194
    %v2196 = vmul.f32 %v1967, 1.442695
    %v2197 = vpow.pop %v2196
    %v2198 = vmul.f32 %v1968, 1.442695
    %v2199 = vpow.pop %v2198
    %v2200 = vmul.f32 %v1969, 1.442695
    %v2201 = vpow.pop %v2200
    %v2202 = vmul.f32 %v1970, 1.442695
    %v2203 = vpow.pop %v2202
    %v2204 = vmul.f32 %v1971, 1.442695
    %v2205 = vpow.pop %v2204
    %v2206 = vmul.f32 %v1972, 1.442695
    %v2207 = vpow.pop %v2206
    %v2208 = vmul.f32 %v1973, 1.442695
    %v2209 = vpow.pop %v2208
    %v2210 = vmul.f32 %v1974, 1.442695
    %v2211 = vpow.pop %v2210
    %v2212 = vmul.f32 %v1975, 1.442695
    %v2213 = vpow.pop %v2212
    %v2214 = vmul.f32 %v1976, 1.442695
    %v2215 = vpow.pop %v2214
    %v2216 = vmul.f32 %v1977, 1.442695
    %v2217 = vpow.pop %v2216
    %v2218 = vmul.f32 %v1978, 1.442695
    %v2219 = vpow.pop %v2218
    %v2220 = vmul.f32 %v1979, 1.442695
    %v2221 = vpow.pop %v2220
    %v2222 = vmul.f32 %v1980, 1.442695
    %v2223 = vpow.pop %v2222
    %v2224 = vmul.f32 %v1981, 1.442695
    %v2225 = vpow.pop %v2224
    %v2226 = vmul.f32 %v1982, 1.442695
    %v2227 = vpow.pop %v2226
    %v2228 = vmul.f32 %v1983, 1.442695
    %v2229 = vpow.pop %v2228
    %v2230 = vmul.f32 %v1984, 1.442695
    %v2231 = vpow.pop %v2230
    %v2232 = vmul.f32 %v1985, 1.442695
    %v2233 = vpow.pop %v2232
    %v2234 = vmul.f32 %v1986, 1.442695
    %v2235 = vpow.pop %v2234
    %v2236 = vmul.f32 %v1987, 1.442695
    %v2237 = vpow.pop %v2236
    %v2238 = vmul.f32 %v1988, 1.442695
    %v2239 = vpow.pop %v2238
    %v2240 = vmul.f32 %v1989, 1.442695
    %v2241 = vpow.pop %v2240
    %v2242 = vmul.f32 %v1990, 1.442695
    %v2243 = vpow.pop %v2242
    %v2244 = vmul.f32 %v1991, 1.442695
    %v2245 = vpow.pop %v2244
    %v2246 = vmul.f32 %v1992, 1.442695
    %v2247 = vpow.pop %v2246
    %v2248 = vmul.f32 %v1993, 1.442695
    %v2249 = vpow.pop %v2248
    %v2250 = vmul.f32 %v1994, 1.442695
    %v2251 = vpow.pop %v2250
    %v2252 = vmul.f32 %v1995, 1.442695
    %v2253 = vpow.pop %v2252
    %v2254 = vmul.f32 %v1996, 1.442695
    %v2255 = vpow.pop %v2254
    %v2256 = vmul.f32 %v1997, 1.442695
    %v2257 = vpow.pop %v2256
    %v2258 = vmul.f32 %v1998, 1.442695
    %v2259 = vpow.pop %v2258
    %v2260 = vmul.f32 %v1999, 1.442695
    %v2261 = vpow.pop %v2260
    %v2262 = vmul.f32 %v2000, 1.442695
    %v2263 = vpow.pop %v2262
    %v2264 = vmul.f32 %v2001, 1.442695
    %v2265 = vpow.pop %v2264
    %v2266 = vmul.f32 %v2002, 1.442695
    %v2267 = vpow.pop %v2266
    %v2268 = vmul.f32 %v2003, 1.442695
    %v2269 = vpow.pop %v2268
    %v2270 = vmul.f32 %v2004, 1.442695
    %v2271 = vpow.pop %v2270
    %v2272 = vmul.f32 %v2005, 1.442695
    %v2273 = vpow.pop %v2272
    %v2274 = vmul.f32 %v2006, 1.442695
    %v2275 = vpow.pop %v2274
    %v2276 = vmul.f32 %v2007, 1.442695
    %v2277 = vpow.pop %v2276
    %v2278 = vmul.f32 %v2008, 1.442695
    %v2279 = vpow.pop %v2278
    %v2280 = vmul.f32 %v2009, 1.442695
    %v2281 = vpow.pop %v2280
    %v2282 = vmul.f32 %v2010, 1.442695
    %v2283 = vpow.pop %v2282
    %v2284 = vmul.f32 %v2011, 1.442695
    %v2285 = vpow.pop %v2284
    %v2286 = vmul.f32 %v2012, 1.442695
    %v2287 = vpow.pop %v2286
    %v2288 = vmul.f32 %v2013, 1.442695
    %v2289 = vpow.pop %v2288
    %v2290 = vmul.f32 %v2014, 1.442695
    %v2291 = vpow.pop %v2290
    %v2292 = vmul.f32 %v2015, 1.442695
    %v2293 = vpow.pop %v2292
    %v2294 = vmul.f32 %v2016, 1.442695
    %v2295 = vpow.pop %v2294
    %v2296 = vmul.f32 %v2017, 1.442695
    %v2297 = vpow.pop %v2296
    %v2298 = vmul.f32 %v2018, 1.442695
    %v2299 = vpow.pop %v2298
    %v2300 = vmul.f32 %v2019, 1.442695
    %v2301 = vpow.pop %v2300
    %v2302 = vmul.f32 %v2020, 1.442695
    %v2303 = vpow.pop %v2302
    %v2304 = vmul.f32 %v2021, 1.442695
    %v2305 = vpow.pop %v2304
    %v2306 = vmul.f32 %v2022, 1.442695
    %v2307 = vpow.pop %v2306
    %v2308 = vmul.f32 %v2023, 1.442695
    %v2309 = vpow.pop %v2308
    %v2310 = vmul.f32 %v2024, 1.442695
    %v2311 = vpow.pop %v2310
    %v2312 = vmul.f32 %v2025, 1.442695
    %v2313 = vpow.pop %v2312
    %v2314 = vmul.f32 %v2026, 1.442695
    %v2315 = vpow.pop %v2314
    %v2316 = vmul.f32 %v2027, 1.442695
    %v2317 = vpow.pop %v2316
    %v2318 = vmul.f32 %v2028, 1.442695
    %v2319 = vpow.pop %v2318
    %v2320 = vmul.f32 %v2029, 1.442695
    %v2321 = vpow.pop %v2320
    %v2322 = vmul.f32 %v2030, 1.442695
    %v2323 = vpow.pop %v2322
    %v2324 = vmul.f32 %v2031, 1.442695
    %v2325 = vpow.pop %v2324
    %v2326 = vmul.f32 %v2032, 1.442695
    %v2327 = vpow.pop %v2326
    %v2328 = vmul.f32 %v2033, 1.442695
    %v2329 = vpow.pop %v2328
    %v2330 = vmul.f32 %v2034, 1.442695
    %v2331 = vpow.pop %v2330
    %v2332 = vmul.f32 %v2035, 1.442695
    %v2333 = vpow.pop %v2332
    %v2334 = vmul.f32 %v2036, 1.442695
    %v2335 = vpow.pop %v2334
    %v2336 = vmul.f32 %v2037, 1.442695
    %v2337 = vpow.pop %v2336
    %v2338 = vmul.f32 %v2038, 1.442695
    %v2339 = vpow.pop %v2338
    %v2340 = vmul.f32 %v2039, 1.442695
    %v2341 = vpow.pop %v2340
    %v2342 = vmul.f32 %v2040, 1.442695
    %v2343 = vpow.pop %v2342
    %v2344 = vmul.f32 %v2041, 1.442695
    %v2345 = vpow.pop %v2344
    %v2346 = vmul.f32 %v2042, 1.442695
    %v2347 = vpow.pop %v2346
    %v2348 = vmul.f32 %v2043, 1.442695
    %v2349 = vpow.pop %v2348
    %v2350 = vmul.f32 %v2044, 1.442695
    %v2351 = vpow.pop %v2350
    %v2352 = vmul.f32 %v2045, 1.442695
    %v2353 = vpow.pop %v2352
    %v2354 = vadd.f32 %v2047, 1.0
    %v2355 = vadd.f32 %v2049, 1.0
    %v2356 = vadd.f32 %v2051, 1.0
    %v2357 = vadd.f32 %v2053, 1.0
    %v2358 = vadd.f32 %v2055, 1.0
    %v2359 = vadd.f32 %v2057, 1.0
    %v2360 = vadd.f32 %v2059, 1.0
    %v2361 = vadd.f32 %v2061, 1.0
    %v2362 = vadd.f32 %v2063, 1.0
    %v2363 = vadd.f32 %v2065, 1.0
    %v2364 = vadd.f32 %v2067, 1.0
    %v2365 = vadd.f32 %v2069, 1.0
    %v2366 = vadd.f32 %v2071, 1.0
    %v2367 = vadd.f32 %v2073, 1.0
    %v2368 = vadd.f32 %v2075, 1.0
    %v2369 = vadd.f32 %v2077, 1.0
    %v2370 = vadd.f32 %v2079, 1.0
    %v2371 = vadd.f32 %v2081, 1.0
    %v2372 = vadd.f32 %v2083, 1.0
    %v2373 = vadd.f32 %v2085, 1.0
    %v2374 = vadd.f32 %v2087, 1.0
    %v2375 = vadd.f32 %v2089, 1.0
    %v2376 = vadd.f32 %v2091, 1.0
    %v2377 = vadd.f32 %v2093, 1.0
    %v2378 = vadd.f32 %v2095, 1.0
    %v2379 = vadd.f32 %v2097, 1.0
    %v2380 = vadd.f32 %v2099, 1.0
    %v2381 = vadd.f32 %v2101, 1.0
    %v2382 = vadd.f32 %v2103, 1.0
    %v2383 = vadd.f32 %v2105, 1.0
    %v2384 = vadd.f32 %v2107, 1.0
    %v2385 = vadd.f32 %v2109, 1.0
    %v2386 = vadd.f32 %v2111, 1.0
    %v2387 = vadd.f32 %v2113, 1.0
    %v2388 = vadd.f32 %v2115, 1.0
    %v2389 = vadd.f32 %v2117, 1.0
    %v2390 = vadd.f32 %v2119, 1.0
    %v2391 = vadd.f32 %v2121, 1.0
    %v2392 = vadd.f32 %v2123, 1.0
    %v2393 = vadd.f32 %v2125, 1.0
    %v2394 = vadd.f32 %v2127, 1.0
    %v2395 = vadd.f32 %v2129, 1.0
    %v2396 = vadd.f32 %v2131, 1.0
    %v2397 = vadd.f32 %v2133, 1.0
    %v2398 = vadd.f32 %v2135, 1.0
    %v2399 = vadd.f32 %v2137, 1.0
    %v2400 = vadd.f32 %v2139, 1.0
    %v2401 = vadd.f32 %v2141, 1.0
    %v2402 = vadd.f32 %v2143, 1.0
    %v2403 = vadd.f32 %v2145, 1.0
    %v2404 = vadd.f32 %v2147, 1.0
    %v2405 = vadd.f32 %v2149, 1.0
    %v2406 = vadd.f32 %v2151, 1.0
    %v2407 = vadd.f32 %v2153, 1.0
    %v2408 = vadd.f32 %v2155, 1.0
    %v2409 = vadd.f32 %v2157, 1.0
    %v2410 = vadd.f32 %v2159, 1.0
    %v2411 = vadd.f32 %v2161, 1.0
    %v2412 = vadd.f32 %v2163, 1.0
    %v2413 = vadd.f32 %v2165, 1.0
    %v2414 = vadd.f32 %v2167, 1.0
    %v2415 = vadd.f32 %v2169, 1.0
    %v2416 = vadd.f32 %v2171, 1.0
    %v2417 = vadd.f32 %v2173, 1.0
    %v2418 = vadd.f32 %v2175, 1.0
    %v2419 = vadd.f32 %v2177, 1.0
    %v2420 = vadd.f32 %v2179, 1.0
    %v2421 = vadd.f32 %v2181, 1.0
    %v2422 = vadd.f32 %v2183, 1.0
    %v2423 = vadd.f32 %v2185, 1.0
    %v2424 = vadd.f32 %v2187, 1.0
    %v2425 = vadd.f32 %v2189, 1.0
    %v2426 = vadd.f32 %v2191, 1.0
    %v2427 = vadd.f32 %v2193, 1.0
    %v2428 = vadd.f32 %v2195, 1.0
    %v2429 = vadd.f32 %v2197, 1.0
    %v2430 = vadd.f32 %v2199, 1.0
    %v2431 = vadd.f32 %v2201, 1.0
    %v2432 = vadd.f32 %v2203, 1.0
    %v2433 = vadd.f32 %v2205, 1.0
    %v2434 = vadd.f32 %v2207, 1.0
    %v2435 = vadd.f32 %v2209, 1.0
    %v2436 = vadd.f32 %v2211, 1.0
    %v2437 = vadd.f32 %v2213, 1.0
    %v2438 = vadd.f32 %v2215, 1.0
    %v2439 = vadd.f32 %v2217, 1.0
    %v2440 = vadd.f32 %v2219, 1.0
    %v2441 = vadd.f32 %v2221, 1.0
    %v2442 = vadd.f32 %v2223, 1.0
    %v2443 = vadd.f32 %v2225, 1.0
    %v2444 = vadd.f32 %v2227, 1.0
    %v2445 = vadd.f32 %v2229, 1.0
    %v2446 = vadd.f32 %v2231, 1.0
    %v2447 = vadd.f32 %v2233, 1.0
    %v2448 = vadd.f32 %v2235, 1.0
    %v2449 = vadd.f32 %v2237, 1.0
    %v2450 = vadd.f32 %v2239, 1.0
    %v2451 = vadd.f32 %v2241, 1.0
    %v2452 = vadd.f32 %v2243, 1.0
    %v2453 = vadd.f32 %v2245, 1.0
    %v2454 = vadd.f32 %v2247, 1.0
    %v2455 = vadd.f32 %v2249, 1.0
    %v2456 = vadd.f32 %v2251, 1.0
    %v2457 = vadd.f32 %v2253, 1.0
    %v2458 = vadd.f32 %v2255, 1.0
    %v2459 = vadd.f32 %v2257, 1.0
    %v2460 = vadd.f32 %v2259, 1.0
    %v2461 = vadd.f32 %v2261, 1.0
    %v2462 = vadd.f32 %v2263, 1.0
    %v2463 = vadd.f32 %v2265, 1.0
    %v2464 = vadd.f32 %v2267, 1.0
    %v2465 = vadd.f32 %v2269, 1.0
    %v2466 = vadd.f32 %v2271, 1.0
    %v2467 = vadd.f32 %v2273, 1.0
    %v2468 = vadd.f32 %v2275, 1.0
    %v2469 = vadd.f32 %v2277, 1.0
    %v2470 = vadd.f32 %v2279, 1.0
    %v2471 = vadd.f32 %v2281, 1.0
    %v2472 = vadd.f32 %v2283, 1.0
    %v2473 = vadd.f32 %v2285, 1.0
    %v2474 = vadd.f32 %v2287, 1.0
    %v2475 = vadd.f32 %v2289, 1.0
    %v2476 = vadd.f32 %v2291, 1.0
    %v2477 = vadd.f32 %v2293, 1.0
    %v2478 = vadd.f32 %v2295, 1.0
    %v2479 = vadd.f32 %v2297, 1.0
    %v2480 = vadd.f32 %v2299, 1.0
    %v2481 = vadd.f32 %v2301, 1.0
    %v2482 = vadd.f32 %v2303, 1.0
    %v2483 = vadd.f32 %v2305, 1.0
    %v2484 = vadd.f32 %v2307, 1.0
    %v2485 = vadd.f32 %v2309, 1.0
    %v2486 = vadd.f32 %v2311, 1.0
    %v2487 = vadd.f32 %v2313, 1.0
    %v2488 = vadd.f32 %v2315, 1.0
    %v2489 = vadd.f32 %v2317, 1.0
    %v2490 = vadd.f32 %v2319, 1.0
    %v2491 = vadd.f32 %v2321, 1.0
    %v2492 = vadd.f32 %v2323, 1.0
    %v2493 = vadd.f32 %v2325, 1.0
    %v2494 = vadd.f32 %v2327, 1.0
    %v2495 = vadd.f32 %v2329, 1.0
    %v2496 = vadd.f32 %v2331, 1.0
    %v2497 = vadd.f32 %v2333, 1.0
    %v2498 = vadd.f32 %v2335, 1.0
    %v2499 = vadd.f32 %v2337, 1.0
    %v2500 = vadd.f32 %v2339, 1.0
    %v2501 = vadd.f32 %v2341, 1.0
    %v2502 = vadd.f32 %v2343, 1.0
    %v2503 = vadd.f32 %v2345, 1.0
    %v2504 = vadd.f32 %v2347, 1.0
    %v2505 = vadd.f32 %v2349, 1.0
    %v2506 = vadd.f32 %v2351, 1.0
    %v2507 = vadd.f32 %v2353, 1.0
    %v2508 = vlog2.pop %v2354
    %v2509 = vmul.f32 %v2508, 0.6931472
    %v2510 = vlog2.pop %v2355
    %v2511 = vmul.f32 %v2510, 0.6931472
    %v2512 = vlog2.pop %v2356
    %v2513 = vmul.f32 %v2512, 0.6931472
    %v2514 = vlog2.pop %v2357
    %v2515 = vmul.f32 %v2514, 0.6931472
    %v2516 = vlog2.pop %v2358
    %v2517 = vmul.f32 %v2516, 0.6931472
    %v2518 = vlog2.pop %v2359
    %v2519 = vmul.f32 %v2518, 0.6931472
    %v2520 = vlog2.pop %v2360
    %v2521 = vmul.f32 %v2520, 0.6931472
    %v2522 = vlog2.pop %v2361
    %v2523 = vmul.f32 %v2522, 0.6931472
    %v2524 = vlog2.pop %v2362
    %v2525 = vmul.f32 %v2524, 0.6931472
    %v2526 = vlog2.pop %v2363
    %v2527 = vmul.f32 %v2526, 0.6931472
    %v2528 = vlog2.pop %v2364
    %v2529 = vmul.f32 %v2528, 0.6931472
    %v2530 = vlog2.pop %v2365
    %v2531 = vmul.f32 %v2530, 0.6931472
    %v2532 = vlog2.pop %v2366
    %v2533 = vmul.f32 %v2532, 0.6931472
    %v2534 = vlog2.pop %v2367
    %v2535 = vmul.f32 %v2534, 0.6931472
    %v2536 = vlog2.pop %v2368
    %v2537 = vmul.f32 %v2536, 0.6931472
    %v2538 = vlog2.pop %v2369
    %v2539 = vmul.f32 %v2538, 0.6931472
    %v2540 = vlog2.pop %v2370
    %v2541 = vmul.f32 %v2540, 0.6931472
    %v2542 = vlog2.pop %v2371
    %v2543 = vmul.f32 %v2542, 0.6931472
    %v2544 = vlog2.pop %v2372
    %v2545 = vmul.f32 %v2544, 0.6931472
    %v2546 = vlog2.pop %v2373
    %v2547 = vmul.f32 %v2546, 0.6931472
    %v2548 = vlog2.pop %v2374
    %v2549 = vmul.f32 %v2548, 0.6931472
    %v2550 = vlog2.pop %v2375
    %v2551 = vmul.f32 %v2550, 0.6931472
    %v2552 = vlog2.pop %v2376
    %v2553 = vmul.f32 %v2552, 0.6931472
    %v2554 = vlog2.pop %v2377
    %v2555 = vmul.f32 %v2554, 0.6931472
    %v2556 = vlog2.pop %v2378
    %v2557 = vmul.f32 %v2556, 0.6931472
    %v2558 = vlog2.pop %v2379
    %v2559 = vmul.f32 %v2558, 0.6931472
    %v2560 = vlog2.pop %v2380
    %v2561 = vmul.f32 %v2560, 0.6931472
    %v2562 = vlog2.pop %v2381
    %v2563 = vmul.f32 %v2562, 0.6931472
    %v2564 = vlog2.pop %v2382
    %v2565 = vmul.f32 %v2564, 0.6931472
    %v2566 = vlog2.pop %v2383
    %v2567 = vmul.f32 %v2566, 0.6931472
    %v2568 = vlog2.pop %v2384
    %v2569 = vmul.f32 %v2568, 0.6931472
    %v2570 = vlog2.pop %v2385
    %v2571 = vmul.f32 %v2570, 0.6931472
    %v2572 = vlog2.pop %v2386
    %v2573 = vmul.f32 %v2572, 0.6931472
    %v2574 = vlog2.pop %v2387
    %v2575 = vmul.f32 %v2574, 0.6931472
    %v2576 = vlog2.pop %v2388
    %v2577 = vmul.f32 %v2576, 0.6931472
    %v2578 = vlog2.pop %v2389
    %v2579 = vmul.f32 %v2578, 0.6931472
    %v2580 = vlog2.pop %v2390
    %v2581 = vmul.f32 %v2580, 0.6931472
    %v2582 = vlog2.pop %v2391
    %v2583 = vmul.f32 %v2582, 0.6931472
    %v2584 = vlog2.pop %v2392
    %v2585 = vmul.f32 %v2584, 0.6931472
    %v2586 = vlog2.pop %v2393
    %v2587 = vmul.f32 %v2586, 0.6931472
    %v2588 = vlog2.pop %v2394
    %v2589 = vmul.f32 %v2588, 0.6931472
    %v2590 = vlog2.pop %v2395
    %v2591 = vmul.f32 %v2590, 0.6931472
    %v2592 = vlog2.pop %v2396
    %v2593 = vmul.f32 %v2592, 0.6931472
    %v2594 = vlog2.pop %v2397
    %v2595 = vmul.f32 %v2594, 0.6931472
    %v2596 = vlog2.pop %v2398
    %v2597 = vmul.f32 %v2596, 0.6931472
    %v2598 = vlog2.pop %v2399
    %v2599 = vmul.f32 %v2598, 0.6931472
    %v2600 = vlog2.pop %v2400
    %v2601 = vmul.f32 %v2600, 0.6931472
    %v2602 = vlog2.pop %v2401
    %v2603 = vmul.f32 %v2602, 0.6931472
    %v2604 = vlog2.pop %v2402
    %v2605 = vmul.f32 %v2604, 0.6931472
    %v2606 = vlog2.pop %v2403
    %v2607 = vmul.f32 %v2606, 0.6931472
    %v2608 = vlog2.pop %v2404
    %v2609 = vmul.f32 %v2608, 0.6931472
    %v2610 = vlog2.pop %v2405
    %v2611 = vmul.f32 %v2610, 0.6931472
    %v2612 = vlog2.pop %v2406
    %v2613 = vmul.f32 %v2612, 0.6931472
    %v2614 = vlog2.pop %v2407
    %v2615 = vmul.f32 %v2614, 0.6931472
    %v2616 = vlog2.pop %v2408
    %v2617 = vmul.f32 %v2616, 0.6931472
    %v2618 = vlog2.pop %v2409
    %v2619 = vmul.f32 %v2618, 0.6931472
    %v2620 = vlog2.pop %v2410
    %v2621 = vmul.f32 %v2620, 0.6931472
    %v2622 = vlog2.pop %v2411
    %v2623 = vmul.f32 %v2622, 0.6931472
    %v2624 = vlog2.pop %v2412
    %v2625 = vmul.f32 %v2624, 0.6931472
    %v2626 = vlog2.pop %v2413
    %v2627 = vmul.f32 %v2626, 0.6931472
    %v2628 = vlog2.pop %v2414
    %v2629 = vmul.f32 %v2628, 0.6931472
    %v2630 = vlog2.pop %v2415
    %v2631 = vmul.f32 %v2630, 0.6931472
    %v2632 = vlog2.pop %v2416
    %v2633 = vmul.f32 %v2632, 0.6931472
    %v2634 = vlog2.pop %v2417
    %v2635 = vmul.f32 %v2634, 0.6931472
    %v2636 = vlog2.pop %v2418
    %v2637 = vmul.f32 %v2636, 0.6931472
    %v2638 = vlog2.pop %v2419
    %v2639 = vmul.f32 %v2638, 0.6931472
    %v2640 = vlog2.pop %v2420
    %v2641 = vmul.f32 %v2640, 0.6931472
    %v2642 = vlog2.pop %v2421
    %v2643 = vmul.f32 %v2642, 0.6931472
    %v2644 = vlog2.pop %v2422
    %v2645 = vmul.f32 %v2644, 0.6931472
    %v2646 = vlog2.pop %v2423
    %v2647 = vmul.f32 %v2646, 0.6931472
    %v2648 = vlog2.pop %v2424
    %v2649 = vmul.f32 %v2648, 0.6931472
    %v2650 = vlog2.pop %v2425
    %v2651 = vmul.f32 %v2650, 0.6931472
    %v2652 = vlog2.pop %v2426
    %v2653 = vmul.f32 %v2652, 0.6931472
    %v2654 = vlog2.pop %v2427
    %v2655 = vmul.f32 %v2654, 0.6931472
    %v2656 = vlog2.pop %v2428
    %v2657 = vmul.f32 %v2656, 0.6931472
    %v2658 = vlog2.pop %v2429
    %v2659 = vmul.f32 %v2658, 0.6931472
    %v2660 = vlog2.pop %v2430
    %v2661 = vmul.f32 %v2660, 0.6931472
    %v2662 = vlog2.pop %v2431
    %v2663 = vmul.f32 %v2662, 0.6931472
    %v2664 = vlog2.pop %v2432
    %v2665 = vmul.f32 %v2664, 0.6931472
    %v2666 = vlog2.pop %v2433
    %v2667 = vmul.f32 %v2666, 0.6931472
    %v2668 = vlog2.pop %v2434
    %v2669 = vmul.f32 %v2668, 0.6931472
    %v2670 = vlog2.pop %v2435
    %v2671 = vmul.f32 %v2670, 0.6931472
    %v2672 = vlog2.pop %v2436
    %v2673 = vmul.f32 %v2672, 0.6931472
    %v2674 = vlog2.pop %v2437
    %v2675 = vmul.f32 %v2674, 0.6931472
    %v2676 = vlog2.pop %v2438
    %v2677 = vmul.f32 %v2676, 0.6931472
    %v2678 = vlog2.pop %v2439
    %v2679 = vmul.f32 %v2678, 0.6931472
    %v2680 = vlog2.pop %v2440
    %v2681 = vmul.f32 %v2680, 0.6931472
    %v2682 = vlog2.pop %v2441
    %v2683 = vmul.f32 %v2682, 0.6931472
    %v2684 = vlog2.pop %v2442
    %v2685 = vmul.f32 %v2684, 0.6931472
    %v2686 = vlog2.pop %v2443
    %v2687 = vmul.f32 %v2686, 0.6931472
    %v2688 = vlog2.pop %v2444
    %v2689 = vmul.f32 %v2688, 0.6931472
    %v2690 = vlog2.pop %v2445
    %v2691 = vmul.f32 %v2690, 0.6931472
    %v2692 = vlog2.pop %v2446
    %v2693 = vmul.f32 %v2692, 0.6931472
    %v2694 = vlog2.pop %v2447
    %v2695 = vmul.f32 %v2694, 0.6931472
    %v2696 = vlog2.pop %v2448
    %v2697 = vmul.f32 %v2696, 0.6931472
    %v2698 = vlog2.pop %v2449
    %v2699 = vmul.f32 %v2698, 0.6931472
    %v2700 = vlog2.pop %v2450
    %v2701 = vmul.f32 %v2700, 0.6931472
    %v2702 = vlog2.pop %v2451
    %v2703 = vmul.f32 %v2702, 0.6931472
    %v2704 = vlog2.pop %v2452
    %v2705 = vmul.f32 %v2704, 0.6931472
    %v2706 = vlog2.pop %v2453
    %v2707 = vmul.f32 %v2706, 0.6931472
    %v2708 = vlog2.pop %v2454
    %v2709 = vmul.f32 %v2708, 0.6931472
    %v2710 = vlog2.pop %v2455
    %v2711 = vmul.f32 %v2710, 0.6931472
    %v2712 = vlog2.pop %v2456
    %v2713 = vmul.f32 %v2712, 0.6931472
    %v2714 = vlog2.pop %v2457
    %v2715 = vmul.f32 %v2714, 0.6931472
    %v2716 = vlog2.pop %v2458
    %v2717 = vmul.f32 %v2716, 0.6931472
    %v2718 = vlog2.pop %v2459
    %v2719 = vmul.f32 %v2718, 0.6931472
    %v2720 = vlog2.pop %v2460
    %v2721 = vmul.f32 %v2720, 0.6931472
    %v2722 = vlog2.pop %v2461
    %v2723 = vmul.f32 %v2722, 0.6931472
    %v2724 = vlog2.pop %v2462
    %v2725 = vmul.f32 %v2724, 0.6931472
    %v2726 = vlog2.pop %v2463
    %v2727 = vmul.f32 %v2726, 0.6931472
    %v2728 = vlog2.pop %v2464
    %v2729 = vmul.f32 %v2728, 0.6931472
    %v2730 = vlog2.pop %v2465
    %v2731 = vmul.f32 %v2730, 0.6931472
    %v2732 = vlog2.pop %v2466
    %v2733 = vmul.f32 %v2732, 0.6931472
    %v2734 = vlog2.pop %v2467
    %v2735 = vmul.f32 %v2734, 0.6931472
    %v2736 = vlog2.pop %v2468
    %v2737 = vmul.f32 %v2736, 0.6931472
    %v2738 = vlog2.pop %v2469
    %v2739 = vmul.f32 %v2738, 0.6931472
    %v2740 = vlog2.pop %v2470
    %v2741 = vmul.f32 %v2740, 0.6931472
    %v2742 = vlog2.pop %v2471
    %v2743 = vmul.f32 %v2742, 0.6931472
    %v2744 = vlog2.pop %v2472
    %v2745 = vmul.f32 %v2744, 0.6931472
    %v2746 = vlog2.pop %v2473
    %v2747 = vmul.f32 %v2746, 0.6931472
    %v2748 = vlog2.pop %v2474
    %v2749 = vmul.f32 %v2748, 0.6931472
    %v2750 = vlog2.pop %v2475
    %v2751 = vmul.f32 %v2750, 0.6931472
    %v2752 = vlog2.pop %v2476
    %v2753 = vmul.f32 %v2752, 0.6931472
    %v2754 = vlog2.pop %v2477
    %v2755 = vmul.f32 %v2754, 0.6931472
    %v2756 = vlog2.pop %v2478
    %v2757 = vmul.f32 %v2756, 0.6931472
    %v2758 = vlog2.pop %v2479
    %v2759 = vmul.f32 %v2758, 0.6931472
    %v2760 = vlog2.pop %v2480
    %v2761 = vmul.f32 %v2760, 0.6931472
    %v2762 = vlog2.pop %v2481
    %v2763 = vmul.f32 %v2762, 0.6931472
    %v2764 = vlog2.pop %v2482
    %v2765 = vmul.f32 %v2764, 0.6931472
    %v2766 = vlog2.pop %v2483
    %v2767 = vmul.f32 %v2766, 0.6931472
    %v2768 = vlog2.pop %v2484
    %v2769 = vmul.f32 %v2768, 0.6931472
    %v2770 = vlog2.pop %v2485
    %v2771 = vmul.f32 %v2770, 0.6931472
    %v2772 = vlog2.pop %v2486
    %v2773 = vmul.f32 %v2772, 0.6931472
    %v2774 = vlog2.pop %v2487
    %v2775 = vmul.f32 %v2774, 0.6931472
    %v2776 = vlog2.pop %v2488
    %v2777 = vmul.f32 %v2776, 0.6931472
    %v2778 = vlog2.pop %v2489
    %v2779 = vmul.f32 %v2778, 0.6931472
    %v2780 = vlog2.pop %v2490
    %v2781 = vmul.f32 %v2780, 0.6931472
    %v2782 = vlog2.pop %v2491
    %v2783 = vmul.f32 %v2782, 0.6931472
    %v2784 = vlog2.pop %v2492
    %v2785 = vmul.f32 %v2784, 0.6931472
    %v2786 = vlog2.pop %v2493
    %v2787 = vmul.f32 %v2786, 0.6931472
    %v2788 = vlog2.pop %v2494
    %v2789 = vmul.f32 %v2788, 0.6931472
    %v2790 = vlog2.pop %v2495
    %v2791 = vmul.f32 %v2790, 0.6931472
    %v2792 = vlog2.pop %v2496
    %v2793 = vmul.f32 %v2792, 0.6931472
    %v2794 = vlog2.pop %v2497
    %v2795 = vmul.f32 %v2794, 0.6931472
    %v2796 = vlog2.pop %v2498
    %v2797 = vmul.f32 %v2796, 0.6931472
    %v2798 = vlog2.pop %v2499
    %v2799 = vmul.f32 %v2798, 0.6931472
    %v2800 = vlog2.pop %v2500
    %v2801 = vmul.f32 %v2800, 0.6931472
    %v2802 = vlog2.pop %v2501
    %v2803 = vmul.f32 %v2802, 0.6931472
    %v2804 = vlog2.pop %v2502
    %v2805 = vmul.f32 %v2804, 0.6931472
    %v2806 = vlog2.pop %v2503
    %v2807 = vmul.f32 %v2806, 0.6931472
    %v2808 = vlog2.pop %v2504
    %v2809 = vmul.f32 %v2808, 0.6931472
    %v2810 = vlog2.pop %v2505
    %v2811 = vmul.f32 %v2810, 0.6931472
    %v2812 = vlog2.pop %v2506
    %v2813 = vmul.f32 %v2812, 0.6931472
    %v2814 = vlog2.pop %v2507
    %v2815 = vmul.f32 %v2814, 0.6931472
    %v2816 = vmax.f32 %v1276, 0.0
    %v2817 = vmax.f32 %v1277, 0.0
    %v2818 = vmax.f32 %v1278, 0.0
    %v2819 = vmax.f32 %v1279, 0.0
    %v2820 = vmax.f32 %v1280, 0.0
    %v2821 = vmax.f32 %v1281, 0.0
    %v2822 = vmax.f32 %v1282, 0.0
    %v2823 = vmax.f32 %v1283, 0.0
    %v2824 = vmax.f32 %v1284, 0.0
    %v2825 = vmax.f32 %v1285, 0.0
    %v2826 = vmax.f32 %v1286, 0.0
    %v2827 = vmax.f32 %v1287, 0.0
    %v2828 = vmax.f32 %v1288, 0.0
    %v2829 = vmax.f32 %v1289, 0.0
    %v2830 = vmax.f32 %v1290, 0.0
    %v2831 = vmax.f32 %v1291, 0.0
    %v2832 = vmax.f32 %v1292, 0.0
    %v2833 = vmax.f32 %v1293, 0.0
    %v2834 = vmax.f32 %v1294, 0.0
    %v2835 = vmax.f32 %v1295, 0.0
    %v2836 = vmax.f32 %v1296, 0.0
    %v2837 = vmax.f32 %v1297, 0.0
    %v2838 = vmax.f32 %v1298, 0.0
    %v2839 = vmax.f32 %v1299, 0.0
    %v2840 = vmax.f32 %v1300, 0.0
    %v2841 = vmax.f32 %v1301, 0.0
    %v2842 = vmax.f32 %v1302, 0.0
    %v2843 = vmax.f32 %v1303, 0.0
    %v2844 = vmax.f32 %v1304, 0.0
    %v2845 = vmax.f32 %v1305, 0.0
    %v2846 = vmax.f32 %v1306, 0.0
    %v2847 = vmax.f32 %v1307, 0.0
    %v2848 = vmax.f32 %v1308, 0.0
    %v2849 = vmax.f32 %v1309, 0.0
    %v2850 = vmax.f32 %v1310, 0.0
    %v2851 = vmax.f32 %v1311, 0.0
    %v2852 = vmax.f32 %v1312, 0.0
    %v2853 = vmax.f32 %v1313, 0.0
    %v2854 = vmax.f32 %v1314, 0.0
    %v2855 = vmax.f32 %v1315, 0.0
    %v2856 = vmax.f32 %v1316, 0.0
    %v2857 = vmax.f32 %v1317, 0.0
    %v2858 = vmax.f32 %v1318, 0.0
    %v2859 = vmax.f32 %v1319, 0.0
    %v2860 = vmax.f32 %v1320, 0.0
    %v2861 = vmax.f32 %v1321, 0.0
    %v2862 = vmax.f32 %v1322, 0.0
    %v2863 = vmax.f32 %v1323, 0.0
    %v2864 = vmax.f32 %v1324, 0.0
    %v2865 = vmax.f32 %v1325, 0.0
    %v2866 = vmax.f32 %v1326, 0.0
    %v2867 = vmax.f32 %v1327, 0.0
    %v2868 = vmax.f32 %v1328, 0.0
    %v2869 = vmax.f32 %v1329, 0.0
    %v2870 = vmax.f32 %v1330, 0.0
    %v2871 = vmax.f32 %v1331, 0.0
    %v2872 = vmax.f32 %v1332, 0.0
    %v2873 = vmax.f32 %v1333, 0.0
    %v2874 = vmax.f32 %v1334, 0.0
    %v2875 = vmax.f32 %v1335, 0.0
    %v2876 = vmax.f32 %v1336, 0.0
    %v2877 = vmax.f32 %v1337, 0.0
    %v2878 = vmax.f32 %v1338, 0.0
    %v2879 = vmax.f32 %v1339, 0.0
    %v2880 = vmax.f32 %v1340, 0.0
    %v2881 = vmax.f32 %v1341, 0.0
    %v2882 = vmax.f32 %v1342, 0.0
    %v2883 = vmax.f32 %v1343, 0.0
    %v2884 = vmax.f32 %v1344, 0.0
    %v2885 = vmax.f32 %v1345, 0.0
    %v2886 = vmax.f32 %v1346, 0.0
    %v2887 = vmax.f32 %v1347, 0.0
    %v2888 = vmax.f32 %v1348, 0.0
    %v2889 = vmax.f32 %v1349, 0.0
    %v2890 = vmax.f32 %v1350, 0.0
    %v2891 = vmax.f32 %v1351, 0.0
    %v2892 = vmax.f32 %v1352, 0.0
    %v2893 = vmax.f32 %v1353, 0.0
    %v2894 = vmax.f32 %v1354, 0.0
    %v2895 = vmax.f32 %v1355, 0.0
    %v2896 = vmax.f32 %v1356, 0.0
    %v2897 = vmax.f32 %v1357, 0.0
    %v2898 = vmax.f32 %v1358, 0.0
    %v2899 = vmax.f32 %v1359, 0.0
    %v2900 = vmax.f32 %v1360, 0.0
    %v2901 = vmax.f32 %v1361, 0.0
    %v2902 = vmax.f32 %v1362, 0.0
    %v2903 = vmax.f32 %v1363, 0.0
    %v2904 = vmax.f32 %v1364, 0.0
    %v2905 = vmax.f32 %v1365, 0.0
    %v2906 = vmax.f32 %v1366, 0.0
    %v2907 = vmax.f32 %v1367, 0.0
    %v2908 = vmax.f32 %v1368, 0.0
    %v2909 = vmax.f32 %v1369, 0.0
    %v2910 = vmax.f32 %v1370, 0.0
    %v2911 = vmax.f32 %v1371, 0.0
    %v2912 = vmax.f32 %v1372, 0.0
    %v2913 = vmax.f32 %v1373, 0.0
    %v2914 = vmax.f32 %v1374, 0.0
    %v2915 = vmax.f32 %v1375, 0.0
    %v2916 = vmax.f32 %v1376, 0.0
    %v2917 = vmax.f32 %v1377, 0.0
    %v2918 = vmax.f32 %v1378, 0.0
    %v2919 = vmax.f32 %v1379, 0.0
    %v2920 = vmax.f32 %v1380, 0.0
    %v2921 = vmax.f32 %v1381, 0.0
    %v2922 = vmax.f32 %v1382, 0.0
    %v2923 = vmax.f32 %v1383, 0.0
    %v2924 = vmax.f32 %v1384, 0.0
    %v2925 = vmax.f32 %v1385, 0.0
    %v2926 = vmax.f32 %v1386, 0.0
    %v2927 = vmax.f32 %v1387, 0.0
    %v2928 = vmax.f32 %v1388, 0.0
    %v2929 = vmax.f32 %v1389, 0.0
    %v2930 = vmax.f32 %v1390, 0.0
    %v2931 = vmax.f32 %v1391, 0.0
    %v2932 = vmax.f32 %v1392, 0.0
    %v2933 = vmax.f32 %v1393, 0.0
    %v2934 = vmax.f32 %v1394, 0.0
    %v2935 = vmax.f32 %v1395, 0.0
    %v2936 = vmax.f32 %v1396, 0.0
    %v2937 = vmax.f32 %v1397, 0.0
    %v2938 = vmax.f32 %v1398, 0.0
    %v2939 = vmax.f32 %v1399, 0.0
    %v2940 = vmax.f32 %v1400, 0.0
    %v2941 = vmax.f32 %v1401, 0.0
    %v2942 = vmax.f32 %v1402, 0.0
    %v2943 = vmax.f32 %v1403, 0.0
    %v2944 = vmax.f32 %v1404, 0.0
    %v2945 = vmax.f32 %v1405, 0.0
    %v2946 = vmax.f32 %v1406, 0.0
    %v2947 = vmax.f32 %v1407, 0.0
    %v2948 = vmax.f32 %v1408, 0.0
    %v2949 = vmax.f32 %v1409, 0.0
    %v2950 = vmax.f32 %v1410, 0.0
    %v2951 = vmax.f32 %v1411, 0.0
    %v2952 = vmax.f32 %v1412, 0.0
    %v2953 = vmax.f32 %v1413, 0.0
    %v2954 = vmax.f32 %v1414, 0.0
    %v2955 = vmax.f32 %v1415, 0.0
    %v2956 = vmax.f32 %v1416, 0.0
    %v2957 = vmax.f32 %v1417, 0.0
    %v2958 = vmax.f32 %v1418, 0.0
    %v2959 = vmax.f32 %v1419, 0.0
    %v2960 = vmax.f32 %v1420, 0.0
    %v2961 = vmax.f32 %v1421, 0.0
    %v2962 = vmax.f32 %v1422, 0.0
    %v2963 = vmax.f32 %v1423, 0.0
    %v2964 = vmax.f32 %v1424, 0.0
    %v2965 = vmax.f32 %v1425, 0.0
    %v2966 = vmax.f32 %v1426, 0.0
    %v2967 = vmax.f32 %v1427, 0.0
    %v2968 = vmax.f32 %v1428, 0.0
    %v2969 = vmax.f32 %v1429, 0.0
    %v2970 = vmul.f32 %v1276, %v1430
    %v2971 = vmul.f32 %v1277, %v1431
    %v2972 = vmul.f32 %v1278, %v1432
    %v2973 = vmul.f32 %v1279, %v1433
    %v2974 = vmul.f32 %v1280, %v1434
    %v2975 = vmul.f32 %v1281, %v1435
    %v2976 = vmul.f32 %v1282, %v1436
    %v2977 = vmul.f32 %v1283, %v1437
    %v2978 = vmul.f32 %v1284, %v1438
    %v2979 = vmul.f32 %v1285, %v1439
    %v2980 = vmul.f32 %v1286, %v1440
    %v2981 = vmul.f32 %v1287, %v1441
    %v2982 = vmul.f32 %v1288, %v1442
    %v2983 = vmul.f32 %v1289, %v1443
    %v2984 = vmul.f32 %v1290, %v1444
    %v2985 = vmul.f32 %v1291, %v1445
    %v2986 = vmul.f32 %v1292, %v1446
    %v2987 = vmul.f32 %v1293, %v1447
    %v2988 = vmul.f32 %v1294, %v1448
    %v2989 = vmul.f32 %v1295, %v1449
    %v2990 = vmul.f32 %v1296, %v1450
    %v2991 = vmul.f32 %v1297, %v1451
    %v2992 = vmul.f32 %v1298, %v1452
    %v2993 = vmul.f32 %v1299, %v1453
    %v2994 = vmul.f32 %v1300, %v1454
    %v2995 = vmul.f32 %v1301, %v1455
    %v2996 = vmul.f32 %v1302, %v1456
    %v2997 = vmul.f32 %v1303, %v1457
    %v2998 = vmul.f32 %v1304, %v1458
    %v2999 = vmul.f32 %v1305, %v1459
    %v3000 = vmul.f32 %v1306, %v1460
    %v3001 = vmul.f32 %v1307, %v1461
    %v3002 = vmul.f32 %v1308, %v1462
    %v3003 = vmul.f32 %v1309, %v1463
    %v3004 = vmul.f32 %v1310, %v1464
    %v3005 = vmul.f32 %v1311, %v1465
    %v3006 = vmul.f32 %v1312, %v1466
    %v3007 = vmul.f32 %v1313, %v1467
    %v3008 = vmul.f32 %v1314, %v1468
    %v3009 = vmul.f32 %v1315, %v1469
    %v3010 = vmul.f32 %v1316, %v1470
    %v3011 = vmul.f32 %v1317, %v1471
    %v3012 = vmul.f32 %v1318, %v1472
    %v3013 = vmul.f32 %v1319, %v1473
    %v3014 = vmul.f32 %v1320, %v1474
    %v3015 = vmul.f32 %v1321, %v1475
    %v3016 = vmul.f32 %v1322, %v1476
    %v3017 = vmul.f32 %v1323, %v1477
    %v3018 = vmul.f32 %v1324, %v1478
    %v3019 = vmul.f32 %v1325, %v1479
    %v3020 = vmul.f32 %v1326, %v1480
    %v3021 = vmul.f32 %v1327, %v1481
    %v3022 = vmul.f32 %v1328, %v1482
    %v3023 = vmul.f32 %v1329, %v1483
    %v3024 = vmul.f32 %v1330, %v1484
    %v3025 = vmul.f32 %v1331, %v1485
    %v3026 = vmul.f32 %v1332, %v1486
    %v3027 = vmul.f32 %v1333, %v1487
    %v3028 = vmul.f32 %v1334, %v1488
    %v3029 = vmul.f32 %v1335, %v1489
    %v3030 = vmul.f32 %v1336, %v1490
    %v3031 = vmul.f32 %v1337, %v1491
    %v3032 = vmul.f32 %v1338, %v1492
    %v3033 = vmul.f32 %v1339, %v1493
    %v3034 = vmul.f32 %v1340, %v1494
    %v3035 = vmul.f32 %v1341, %v1495
    %v3036 = vmul.f32 %v1342, %v1496
    %v3037 = vmul.f32 %v1343, %v1497
    %v3038 = vmul.f32 %v1344, %v1498
    %v3039 = vmul.f32 %v1345, %v1499
    %v3040 = vmul.f32 %v1346, %v1500
    %v3041 = vmul.f32 %v1347, %v1501
    %v3042 = vmul.f32 %v1348, %v1502
    %v3043 = vmul.f32 %v1349, %v1503
    %v3044 = vmul.f32 %v1350, %v1504
    %v3045 = vmul.f32 %v1351, %v1505
    %v3046 = vmul.f32 %v1352, %v1506
    %v3047 = vmul.f32 %v1353, %v1507
    %v3048 = vmul.f32 %v1354, %v1508
    %v3049 = vmul.f32 %v1355, %v1509
    %v3050 = vmul.f32 %v1356, %v1510
    %v3051 = vmul.f32 %v1357, %v1511
    %v3052 = vmul.f32 %v1358, %v1512
    %v3053 = vmul.f32 %v1359, %v1513
    %v3054 = vmul.f32 %v1360, %v1514
    %v3055 = vmul.f32 %v1361, %v1515
    %v3056 = vmul.f32 %v1362, %v1516
    %v3057 = vmul.f32 %v1363, %v1517
    %v3058 = vmul.f32 %v1364, %v1518
    %v3059 = vmul.f32 %v1365, %v1519
    %v3060 = vmul.f32 %v1366, %v1520
    %v3061 = vmul.f32 %v1367, %v1521
    %v3062 = vmul.f32 %v1368, %v1522
    %v3063 = vmul.f32 %v1369, %v1523
    %v3064 = vmul.f32 %v1370, %v1524
    %v3065 = vmul.f32 %v1371, %v1525
    %v3066 = vmul.f32 %v1372, %v1526
    %v3067 = vmul.f32 %v1373, %v1527
    %v3068 = vmul.f32 %v1374, %v1528
    %v3069 = vmul.f32 %v1375, %v1529
    %v3070 = vmul.f32 %v1376, %v1530
    %v3071 = vmul.f32 %v1377, %v1531
    %v3072 = vmul.f32 %v1378, %v1532
    %v3073 = vmul.f32 %v1379, %v1533
    %v3074 = vmul.f32 %v1380, %v1534
    %v3075 = vmul.f32 %v1381, %v1535
    %v3076 = vmul.f32 %v1382, %v1536
    %v3077 = vmul.f32 %v1383, %v1537
    %v3078 = vmul.f32 %v1384, %v1538
    %v3079 = vmul.f32 %v1385, %v1539
    %v3080 = vmul.f32 %v1386, %v1540
    %v3081 = vmul.f32 %v1387, %v1541
    %v3082 = vmul.f32 %v1388, %v1542
    %v3083 = vmul.f32 %v1389, %v1543
    %v3084 = vmul.f32 %v1390, %v1544
    %v3085 = vmul.f32 %v1391, %v1545
    %v3086 = vmul.f32 %v1392, %v1546
    %v3087 = vmul.f32 %v1393, %v1547
    %v3088 = vmul.f32 %v1394, %v1548
    %v3089 = vmul.f32 %v1395, %v1549
    %v3090 = vmul.f32 %v1396, %v1550
    %v3091 = vmul.f32 %v1397, %v1551
    %v3092 = vmul.f32 %v1398, %v1552
    %v3093 = vmul.f32 %v1399, %v1553
    %v3094 = vmul.f32 %v1400, %v1554
    %v3095 = vmul.f32 %v1401, %v1555
    %v3096 = vmul.f32 %v1402, %v1556
    %v3097 = vmul.f32 %v1403, %v1557
    %v3098 = vmul.f32 %v1404, %v1558
    %v3099 = vmul.f32 %v1405, %v1559
    %v3100 = vmul.f32 %v1406, %v1560
    %v3101 = vmul.f32 %v1407, %v1561
    %v3102 = vmul.f32 %v1408, %v1562
    %v3103 = vmul.f32 %v1409, %v1563
    %v3104 = vmul.f32 %v1410, %v1564
    %v3105 = vmul.f32 %v1411, %v1565
    %v3106 = vmul.f32 %v1412, %v1566
    %v3107 = vmul.f32 %v1413, %v1567
    %v3108 = vmul.f32 %v1414, %v1568
    %v3109 = vmul.f32 %v1415, %v1569
    %v3110 = vmul.f32 %v1416, %v1570
    %v3111 = vmul.f32 %v1417, %v1571
    %v3112 = vmul.f32 %v1418, %v1572
    %v3113 = vmul.f32 %v1419, %v1573
    %v3114 = vmul.f32 %v1420, %v1574
    %v3115 = vmul.f32 %v1421, %v1575
    %v3116 = vmul.f32 %v1422, %v1576
    %v3117 = vmul.f32 %v1423, %v1577
    %v3118 = vmul.f32 %v1424, %v1578
    %v3119 = vmul.f32 %v1425, %v1579
    %v3120 = vmul.f32 %v1426, %v1580
    %v3121 = vmul.f32 %v1427, %v1581
    %v3122 = vmul.f32 %v1428, %v1582
    %v3123 = vmul.f32 %v1429, %v1583
    %v3124 = vsub.f32 %v2816, %v2970
    %v3125 = vsub.f32 %v2817, %v2971
    %v3126 = vsub.f32 %v2818, %v2972
    %v3127 = vsub.f32 %v2819, %v2973
    %v3128 = vsub.f32 %v2820, %v2974
    %v3129 = vsub.f32 %v2821, %v2975
    %v3130 = vsub.f32 %v2822, %v2976
    %v3131 = vsub.f32 %v2823, %v2977
    %v3132 = vsub.f32 %v2824, %v2978
    %v3133 = vsub.f32 %v2825, %v2979
    %v3134 = vsub.f32 %v2826, %v2980
    %v3135 = vsub.f32 %v2827, %v2981
    %v3136 = vsub.f32 %v2828, %v2982
    %v3137 = vsub.f32 %v2829, %v2983
    %v3138 = vsub.f32 %v2830, %v2984
    %v3139 = vsub.f32 %v2831, %v2985
    %v3140 = vsub.f32 %v2832, %v2986
    %v3141 = vsub.f32 %v2833, %v2987
    %v3142 = vsub.f32 %v2834, %v2988
    %v3143 = vsub.f32 %v2835, %v2989
    %v3144 = vsub.f32 %v2836, %v2990
    %v3145 = vsub.f32 %v2837, %v2991
    %v3146 = vsub.f32 %v2838, %v2992
    %v3147 = vsub.f32 %v2839, %v2993
    %v3148 = vsub.f32 %v2840, %v2994
    %v3149 = vsub.f32 %v2841, %v2995
    %v3150 = vsub.f32 %v2842, %v2996
    %v3151 = vsub.f32 %v2843, %v2997
    %v3152 = vsub.f32 %v2844, %v2998
    %v3153 = vsub.f32 %v2845, %v2999
    %v3154 = vsub.f32 %v2846, %v3000
    %v3155 = vsub.f32 %v2847, %v3001
    %v3156 = vsub.f32 %v2848, %v3002
    %v3157 = vsub.f32 %v2849, %v3003
    %v3158 = vsub.f32 %v2850, %v3004
    %v3159 = vsub.f32 %v2851, %v3005
    %v3160 = vsub.f32 %v2852, %v3006
    %v3161 = vsub.f32 %v2853, %v3007
    %v3162 = vsub.f32 %v2854, %v3008
    %v3163 = vsub.f32 %v2855, %v3009
    %v3164 = vsub.f32 %v2856, %v3010
    %v3165 = vsub.f32 %v2857, %v3011
    %v3166 = vsub.f32 %v2858, %v3012
    %v3167 = vsub.f32 %v2859, %v3013
    %v3168 = vsub.f32 %v2860, %v3014
    %v3169 = vsub.f32 %v2861, %v3015
    %v3170 = vsub.f32 %v2862, %v3016
    %v3171 = vsub.f32 %v2863, %v3017
    %v3172 = vsub.f32 %v2864, %v3018
    %v3173 = vsub.f32 %v2865, %v3019
    %v3174 = vsub.f32 %v2866, %v3020
    %v3175 = vsub.f32 %v2867, %v3021
    %v3176 = vsub.f32 %v2868, %v3022
    %v3177 = vsub.f32 %v2869, %v3023
    %v3178 = vsub.f32 %v2870, %v3024
    %v3179 = vsub.f32 %v2871, %v3025
    %v3180 = vsub.f32 %v2872, %v3026
    %v3181 = vsub.f32 %v2873, %v3027
    %v3182 = vsub.f32 %v2874, %v3028
    %v3183 = vsub.f32 %v2875, %v3029
    %v3184 = vsub.f32 %v2876, %v3030
    %v3185 = vsub.f32 %v2877, %v3031
    %v3186 = vsub.f32 %v2878, %v3032
    %v3187 = vsub.f32 %v2879, %v3033
    %v3188 = vsub.f32 %v2880, %v3034
    %v3189 = vsub.f32 %v2881, %v3035
    %v3190 = vsub.f32 %v2882, %v3036
    %v3191 = vsub.f32 %v2883, %v3037
    %v3192 = vsub.f32 %v2884, %v3038
    %v3193 = vsub.f32 %v2885, %v3039
    %v3194 = vsub.f32 %v2886, %v3040
    %v3195 = vsub.f32 %v2887, %v3041
    %v3196 = vsub.f32 %v2888, %v3042
    %v3197 = vsub.f32 %v2889, %v3043
    %v3198 = vsub.f32 %v2890, %v3044
    %v3199 = vsub.f32 %v2891, %v3045
    %v3200 = vsub.f32 %v2892, %v3046
    %v3201 = vsub.f32 %v2893, %v3047
    %v3202 = vsub.f32 %v2894, %v3048
    %v3203 = vsub.f32 %v2895, %v3049
    %v3204 = vsub.f32 %v2896, %v3050
    %v3205 = vsub.f32 %v2897, %v3051
    %v3206 = vsub.f32 %v2898, %v3052
    %v3207 = vsub.f32 %v2899, %v3053
    %v3208 = vsub.f32 %v2900, %v3054
    %v3209 = vsub.f32 %v2901, %v3055
    %v3210 = vsub.f32 %v2902, %v3056
    %v3211 = vsub.f32 %v2903, %v3057
    %v3212 = vsub.f32 %v2904, %v3058
    %v3213 = vsub.f32 %v2905, %v3059
    %v3214 = vsub.f32 %v2906, %v3060
    %v3215 = vsub.f32 %v2907, %v3061
    %v3216 = vsub.f32 %v2908, %v3062
    %v3217 = vsub.f32 %v2909, %v3063
    %v3218 = vsub.f32 %v2910, %v3064
    %v3219 = vsub.f32 %v2911, %v3065
    %v3220 = vsub.f32 %v2912, %v3066
    %v3221 = vsub.f32 %v2913, %v3067
    %v3222 = vsub.f32 %v2914, %v3068
    %v3223 = vsub.f32 %v2915, %v3069
    %v3224 = vsub.f32 %v2916, %v3070
    %v3225 = vsub.f32 %v2917, %v3071
    %v3226 = vsub.f32 %v2918, %v3072
    %v3227 = vsub.f32 %v2919, %v3073
    %v3228 = vsub.f32 %v2920, %v3074
    %v3229 = vsub.f32 %v2921, %v3075
    %v3230 = vsub.f32 %v2922, %v3076
    %v3231 = vsub.f32 %v2923, %v3077
    %v3232 = vsub.f32 %v2924, %v3078
    %v3233 = vsub.f32 %v2925, %v3079
    %v3234 = vsub.f32 %v2926, %v3080
    %v3235 = vsub.f32 %v2927, %v3081
    %v3236 = vsub.f32 %v2928, %v3082
    %v3237 = vsub.f32 %v2929, %v3083
    %v3238 = vsub.f32 %v2930, %v3084
    %v3239 = vsub.f32 %v2931, %v3085
    %v3240 = vsub.f32 %v2932, %v3086
    %v3241 = vsub.f32 %v2933, %v3087
    %v3242 = vsub.f32 %v2934, %v3088
    %v3243 = vsub.f32 %v2935, %v3089
    %v3244 = vsub.f32 %v2936, %v3090
    %v3245 = vsub.f32 %v2937, %v3091
    %v3246 = vsub.f32 %v2938, %v3092
    %v3247 = vsub.f32 %v2939, %v3093
    %v3248 = vsub.f32 %v2940, %v3094
    %v3249 = vsub.f32 %v2941, %v3095
    %v3250 = vsub.f32 %v2942, %v3096
    %v3251 = vsub.f32 %v2943, %v3097
    %v3252 = vsub.f32 %v2944, %v3098
    %v3253 = vsub.f32 %v2945, %v3099
    %v3254 = vsub.f32 %v2946, %v3100
    %v3255 = vsub.f32 %v2947, %v3101
    %v3256 = vsub.f32 %v2948, %v3102
    %v3257 = vsub.f32 %v2949, %v3103
    %v3258 = vsub.f32 %v2950, %v3104
    %v3259 = vsub.f32 %v2951, %v3105
    %v3260 = vsub.f32 %v2952, %v3106
    %v3261 = vsub.f32 %v2953, %v3107
    %v3262 = vsub.f32 %v2954, %v3108
    %v3263 = vsub.f32 %v2955, %v3109
    %v3264 = vsub.f32 %v2956, %v3110
    %v3265 = vsub.f32 %v2957, %v3111
    %v3266 = vsub.f32 %v2958, %v3112
    %v3267 = vsub.f32 %v2959, %v3113
    %v3268 = vsub.f32 %v2960, %v3114
    %v3269 = vsub.f32 %v2961, %v3115
    %v3270 = vsub.f32 %v2962, %v3116
    %v3271 = vsub.f32 %v2963, %v3117
    %v3272 = vsub.f32 %v2964, %v3118
    %v3273 = vsub.f32 %v2965, %v3119
    %v3274 = vsub.f32 %v2966, %v3120
    %v3275 = vsub.f32 %v2967, %v3121
    %v3276 = vsub.f32 %v2968, %v3122
    %v3277 = vsub.f32 %v2969, %v3123
    %v3278 = vadd.f32 %v3124, %v2509
    %v3279 = vadd.f32 %v3125, %v2511
    %v3280 = vadd.f32 %v3126, %v2513
    %v3281 = vadd.f32 %v3127, %v2515
    %v3282 = vadd.f32 %v3128, %v2517
    %v3283 = vadd.f32 %v3129, %v2519
    %v3284 = vadd.f32 %v3130, %v2521
    %v3285 = vadd.f32 %v3131, %v2523
    %v3286 = vadd.f32 %v3132, %v2525
    %v3287 = vadd.f32 %v3133, %v2527
    %v3288 = vadd.f32 %v3134, %v2529
    %v3289 = vadd.f32 %v3135, %v2531
    %v3290 = vadd.f32 %v3136, %v2533
    %v3291 = vadd.f32 %v3137, %v2535
    %v3292 = vadd.f32 %v3138, %v2537
    %v3293 = vadd.f32 %v3139, %v2539
    %v3294 = vadd.f32 %v3140, %v2541
    %v3295 = vadd.f32 %v3141, %v2543
    %v3296 = vadd.f32 %v3142, %v2545
    %v3297 = vadd.f32 %v3143, %v2547
    %v3298 = vadd.f32 %v3144, %v2549
    %v3299 = vadd.f32 %v3145, %v2551
    %v3300 = vadd.f32 %v3146, %v2553
    %v3301 = vadd.f32 %v3147, %v2555
    %v3302 = vadd.f32 %v3148, %v2557
    %v3303 = vadd.f32 %v3149, %v2559
    %v3304 = vadd.f32 %v3150, %v2561
    %v3305 = vadd.f32 %v3151, %v2563
    %v3306 = vadd.f32 %v3152, %v2565
    %v3307 = vadd.f32 %v3153, %v2567
    %v3308 = vadd.f32 %v3154, %v2569
    %v3309 = vadd.f32 %v3155, %v2571
    %v3310 = vadd.f32 %v3156, %v2573
    %v3311 = vadd.f32 %v3157, %v2575
    %v3312 = vadd.f32 %v3158, %v2577
    %v3313 = vadd.f32 %v3159, %v2579
    %v3314 = vadd.f32 %v3160, %v2581
    %v3315 = vadd.f32 %v3161, %v2583
    %v3316 = vadd.f32 %v3162, %v2585
    %v3317 = vadd.f32 %v3163, %v2587
    %v3318 = vadd.f32 %v3164, %v2589
    %v3319 = vadd.f32 %v3165, %v2591
    %v3320 = vadd.f32 %v3166, %v2593
    %v3321 = vadd.f32 %v3167, %v2595
    %v3322 = vadd.f32 %v3168, %v2597
    %v3323 = vadd.f32 %v3169, %v2599
    %v3324 = vadd.f32 %v3170, %v2601
    %v3325 = vadd.f32 %v3171, %v2603
    %v3326 = vadd.f32 %v3172, %v2605
    %v3327 = vadd.f32 %v3173, %v2607
    %v3328 = vadd.f32 %v3174, %v2609
    %v3329 = vadd.f32 %v3175, %v2611
    %v3330 = vadd.f32 %v3176, %v2613
    %v3331 = vadd.f32 %v3177, %v2615
    %v3332 = vadd.f32 %v3178, %v2617
    %v3333 = vadd.f32 %v3179, %v2619
    %v3334 = vadd.f32 %v3180, %v2621
    %v3335 = vadd.f32 %v3181, %v2623
    %v3336 = vadd.f32 %v3182, %v2625
    %v3337 = vadd.f32 %v3183, %v2627
    %v3338 = vadd.f32 %v3184, %v2629
    %v3339 = vadd.f32 %v3185, %v2631
    %v3340 = vadd.f32 %v3186, %v2633
    %v3341 = vadd.f32 %v3187, %v2635
    %v3342 = vadd.f32 %v3188, %v2637
    %v3343 = vadd.f32 %v3189, %v2639
    %v3344 = vadd.f32 %v3190, %v2641
    %v3345 = vadd.f32 %v3191, %v2643
    %v3346 = vadd.f32 %v3192, %v2645
    %v3347 = vadd.f32 %v3193, %v2647
    %v3348 = vadd.f32 %v3194, %v2649
    %v3349 = vadd.f32 %v3195, %v2651
    %v3350 = vadd.f32 %v3196, %v2653
    %v3351 = vadd.f32 %v3197, %v2655
    %v3352 = vadd.f32 %v3198, %v2657
    %v3353 = vadd.f32 %v3199, %v2659
    %v3354 = vadd.f32 %v3200, %v2661
    %v3355 = vadd.f32 %v3201, %v2663
    %v3356 = vadd.f32 %v3202, %v2665
    %v3357 = vadd.f32 %v3203, %v2667
    %v3358 = vadd.f32 %v3204, %v2669
    %v3359 = vadd.f32 %v3205, %v2671
    %v3360 = vadd.f32 %v3206, %v2673
    %v3361 = vadd.f32 %v3207, %v2675
    %v3362 = vadd.f32 %v3208, %v2677
    %v3363 = vadd.f32 %v3209, %v2679
    %v3364 = vadd.f32 %v3210, %v2681
    %v3365 = vadd.f32 %v3211, %v2683
    %v3366 = vadd.f32 %v3212, %v2685
    %v3367 = vadd.f32 %v3213, %v2687
    %v3368 = vadd.f32 %v3214, %v2689
    %v3369 = vadd.f32 %v3215, %v2691
    %v3370 = vadd.f32 %v3216, %v2693
    %v3371 = vadd.f32 %v3217, %v2695
    %v3372 = vadd.f32 %v3218, %v2697
    %v3373 = vadd.f32 %v3219, %v2699
    %v3374 = vadd.f32 %v3220, %v2701
    %v3375 = vadd.f32 %v3221, %v2703
    %v3376 = vadd.f32 %v3222, %v2705
    %v3377 = vadd.f32 %v3223, %v2707
    %v3378 = vadd.f32 %v3224, %v2709
    %v3379 = vadd.f32 %v3225, %v2711
    %v3380 = vadd.f32 %v3226, %v2713
    %v3381 = vadd.f32 %v3227, %v2715
    %v3382 = vadd.f32 %v3228, %v2717
    %v3383 = vadd.f32 %v3229, %v2719
    %v3384 = vadd.f32 %v3230, %v2721
    %v3385 = vadd.f32 %v3231, %v2723
    %v3386 = vadd.f32 %v3232, %v2725
    %v3387 = vadd.f32 %v3233, %v2727
    %v3388 = vadd.f32 %v3234, %v2729
    %v3389 = vadd.f32 %v3235, %v2731
    %v3390 = vadd.f32 %v3236, %v2733
    %v3391 = vadd.f32 %v3237, %v2735
    %v3392 = vadd.f32 %v3238, %v2737
    %v3393 = vadd.f32 %v3239, %v2739
    %v3394 = vadd.f32 %v3240, %v2741
    %v3395 = vadd.f32 %v3241, %v2743
    %v3396 = vadd.f32 %v3242, %v2745
    %v3397 = vadd.f32 %v3243, %v2747
    %v3398 = vadd.f32 %v3244, %v2749
    %v3399 = vadd.f32 %v3245, %v2751
    %v3400 = vadd.f32 %v3246, %v2753
    %v3401 = vadd.f32 %v3247, %v2755
    %v3402 = vadd.f32 %v3248, %v2757
    %v3403 = vadd.f32 %v3249, %v2759
    %v3404 = vadd.f32 %v3250, %v2761
    %v3405 = vadd.f32 %v3251, %v2763
    %v3406 = vadd.f32 %v3252, %v2765
    %v3407 = vadd.f32 %v3253, %v2767
    %v3408 = vadd.f32 %v3254, %v2769
    %v3409 = vadd.f32 %v3255, %v2771
    %v3410 = vadd.f32 %v3256, %v2773
    %v3411 = vadd.f32 %v3257, %v2775
    %v3412 = vadd.f32 %v3258, %v2777
    %v3413 = vadd.f32 %v3259, %v2779
    %v3414 = vadd.f32 %v3260, %v2781
    %v3415 = vadd.f32 %v3261, %v2783
    %v3416 = vadd.f32 %v3262, %v2785
    %v3417 = vadd.f32 %v3263, %v2787
    %v3418 = vadd.f32 %v3264, %v2789
    %v3419 = vadd.f32 %v3265, %v2791
    %v3420 = vadd.f32 %v3266, %v2793
    %v3421 = vadd.f32 %v3267, %v2795
    %v3422 = vadd.f32 %v3268, %v2797
    %v3423 = vadd.f32 %v3269, %v2799
    %v3424 = vadd.f32 %v3270, %v2801
    %v3425 = vadd.f32 %v3271, %v2803
    %v3426 = vadd.f32 %v3272, %v2805
    %v3427 = vadd.f32 %v3273, %v2807
    %v3428 = vadd.f32 %v3274, %v2809
    %v3429 = vadd.f32 %v3275, %v2811
    %v3430 = vadd.f32 %v3276, %v2813
    %v3431 = vadd.f32 %v3277, %v2815
    %v3432 = vsel %vm1584, %v3278, 0.0
    %v3433 = vsel %vm1585, %v3279, 0.0
    %v3434 = vsel %vm1586, %v3280, 0.0
    %v3435 = vsel %vm1587, %v3281, 0.0
    %v3436 = vsel %vm1588, %v3282, 0.0
    %v3437 = vsel %vm1589, %v3283, 0.0
    %v3438 = vsel %vm1590, %v3284, 0.0
    %v3439 = vsel %vm1591, %v3285, 0.0
    %v3440 = vsel %vm1592, %v3286, 0.0
    %v3441 = vsel %vm1593, %v3287, 0.0
    %v3442 = vsel %vm1594, %v3288, 0.0
    %v3443 = vsel %vm1595, %v3289, 0.0
    %v3444 = vsel %vm1596, %v3290, 0.0
    %v3445 = vsel %vm1597, %v3291, 0.0
    %v3446 = vsel %vm1598, %v3292, 0.0
    %v3447 = vsel %vm1599, %v3293, 0.0
    %v3448 = vsel %vm1600, %v3294, 0.0
    %v3449 = vsel %vm1601, %v3295, 0.0
    %v3450 = vsel %vm1602, %v3296, 0.0
    %v3451 = vsel %vm1603, %v3297, 0.0
    %v3452 = vsel %vm1604, %v3298, 0.0
    %v3453 = vsel %vm1605, %v3299, 0.0
    %v3454 = vsel %vm1606, %v3300, 0.0
    %v3455 = vsel %vm1607, %v3301, 0.0
    %v3456 = vsel %vm1608, %v3302, 0.0
    %v3457 = vsel %vm1609, %v3303, 0.0
    %v3458 = vsel %vm1610, %v3304, 0.0
    %v3459 = vsel %vm1611, %v3305, 0.0
    %v3460 = vsel %vm1612, %v3306, 0.0
    %v3461 = vsel %vm1613, %v3307, 0.0
    %v3462 = vsel %vm1614, %v3308, 0.0
    %v3463 = vsel %vm1615, %v3309, 0.0
    %v3464 = vsel %vm1616, %v3310, 0.0
    %v3465 = vsel %vm1617, %v3311, 0.0
    %v3466 = vsel %vm1618, %v3312, 0.0
    %v3467 = vsel %vm1619, %v3313, 0.0
    %v3468 = vsel %vm1620, %v3314, 0.0
    %v3469 = vsel %vm1621, %v3315, 0.0
    %v3470 = vsel %vm1622, %v3316, 0.0
    %v3471 = vsel %vm1623, %v3317, 0.0
    %v3472 = vsel %vm1624, %v3318, 0.0
    %v3473 = vsel %vm1625, %v3319, 0.0
    %v3474 = vsel %vm1626, %v3320, 0.0
    %v3475 = vsel %vm1627, %v3321, 0.0
    %v3476 = vsel %vm1628, %v3322, 0.0
    %v3477 = vsel %vm1629, %v3323, 0.0
    %v3478 = vsel %vm1630, %v3324, 0.0
    %v3479 = vsel %vm1631, %v3325, 0.0
    %v3480 = vsel %vm1632, %v3326, 0.0
    %v3481 = vsel %vm1633, %v3327, 0.0
    %v3482 = vsel %vm1634, %v3328, 0.0
    %v3483 = vsel %vm1635, %v3329, 0.0
    %v3484 = vsel %vm1636, %v3330, 0.0
    %v3485 = vsel %vm1637, %v3331, 0.0
    %v3486 = vsel %vm1638, %v3332, 0.0
    %v3487 = vsel %vm1639, %v3333, 0.0
    %v3488 = vsel %vm1640, %v3334, 0.0
    %v3489 = vsel %vm1641, %v3335, 0.0
    %v3490 = vsel %vm1642, %v3336, 0.0
    %v3491 = vsel %vm1643, %v3337, 0.0
    %v3492 = vsel %vm1644, %v3338, 0.0
    %v3493 = vsel %vm1645, %v3339, 0.0
    %v3494 = vsel %vm1646, %v3340, 0.0
    %v3495 = vsel %vm1647, %v3341, 0.0
    %v3496 = vsel %vm1648, %v3342, 0.0
    %v3497 = vsel %vm1649, %v3343, 0.0
    %v3498 = vsel %vm1650, %v3344, 0.0
    %v3499 = vsel %vm1651, %v3345, 0.0
    %v3500 = vsel %vm1652, %v3346, 0.0
    %v3501 = vsel %vm1653, %v3347, 0.0
    %v3502 = vsel %vm1654, %v3348, 0.0
    %v3503 = vsel %vm1655, %v3349, 0.0
    %v3504 = vsel %vm1656, %v3350, 0.0
    %v3505 = vsel %vm1657, %v3351, 0.0
    %v3506 = vsel %vm1658, %v3352, 0.0
    %v3507 = vsel %vm1659, %v3353, 0.0
    %v3508 = vsel %vm1660, %v3354, 0.0
    %v3509 = vsel %vm1661, %v3355, 0.0
    %v3510 = vsel %vm1662, %v3356, 0.0
    %v3511 = vsel %vm1663, %v3357, 0.0
    %v3512 = vsel %vm1664, %v3358, 0.0
    %v3513 = vsel %vm1665, %v3359, 0.0
    %v3514 = vsel %vm1666, %v3360, 0.0
    %v3515 = vsel %vm1667, %v3361, 0.0
    %v3516 = vsel %vm1668, %v3362, 0.0
    %v3517 = vsel %vm1669, %v3363, 0.0
    %v3518 = vsel %vm1670, %v3364, 0.0
    %v3519 = vsel %vm1671, %v3365, 0.0
    %v3520 = vsel %vm1672, %v3366, 0.0
    %v3521 = vsel %vm1673, %v3367, 0.0
    %v3522 = vsel %vm1674, %v3368, 0.0
    %v3523 = vsel %vm1675, %v3369, 0.0
    %v3524 = vsel %vm1676, %v3370, 0.0
    %v3525 = vsel %vm1677, %v3371, 0.0
    %v3526 = vsel %vm1678, %v3372, 0.0
    %v3527 = vsel %vm1679, %v3373, 0.0
    %v3528 = vsel %vm1680, %v3374, 0.0
    %v3529 = vsel %vm1681, %v3375, 0.0
    %v3530 = vsel %vm1682, %v3376, 0.0
    %v3531 = vsel %vm1683, %v3377, 0.0
    %v3532 = vsel %vm1684, %v3378, 0.0
    %v3533 = vsel %vm1685, %v3379, 0.0
    %v3534 = vsel %vm1686, %v3380, 0.0
    %v3535 = vsel %vm1687, %v3381, 0.0
    %v3536 = vsel %vm1688, %v3382, 0.0
    %v3537 = vsel %vm1689, %v3383, 0.0
    %v3538 = vsel %vm1690, %v3384, 0.0
    %v3539 = vsel %vm1691, %v3385, 0.0
    %v3540 = vsel %vm1692, %v3386, 0.0
    %v3541 = vsel %vm1693, %v3387, 0.0
    %v3542 = vsel %vm1694, %v3388, 0.0
    %v3543 = vsel %vm1695, %v3389, 0.0
    %v3544 = vsel %vm1696, %v3390, 0.0
    %v3545 = vsel %vm1697, %v3391, 0.0
    %v3546 = vsel %vm1698, %v3392, 0.0
    %v3547 = vsel %vm1699, %v3393, 0.0
    %v3548 = vsel %vm1700, %v3394, 0.0
    %v3549 = vsel %vm1701, %v3395, 0.0
    %v3550 = vsel %vm1702, %v3396, 0.0
    %v3551 = vsel %vm1703, %v3397, 0.0
    %v3552 = vsel %vm1704, %v3398, 0.0
    %v3553 = vsel %vm1705, %v3399, 0.0
    %v3554 = vsel %vm1706, %v3400, 0.0
    %v3555 = vsel %vm1707, %v3401, 0.0
    %v3556 = vsel %vm1708, %v3402, 0.0
    %v3557 = vsel %vm1709, %v3403, 0.0
    %v3558 = vsel %vm1710, %v3404, 0.0
    %v3559 = vsel %vm1711, %v3405, 0.0
    %v3560 = vsel %vm1712, %v3406, 0.0
    %v3561 = vsel %vm1713, %v3407, 0.0
    %v3562 = vsel %vm1714, %v3408, 0.0
    %v3563 = vsel %vm1715, %v3409, 0.0
    %v3564 = vsel %vm1716, %v3410, 0.0
    %v3565 = vsel %vm1717, %v3411, 0.0
    %v3566 = vsel %vm1718, %v3412, 0.0
    %v3567 = vsel %vm1719, %v3413, 0.0
    %v3568 = vsel %vm1720, %v3414, 0.0
    %v3569 = vsel %vm1721, %v3415, 0.0
    %v3570 = vsel %vm1722, %v3416, 0.0
    %v3571 = vsel %vm1723, %v3417, 0.0
    %v3572 = vsel %vm1724, %v3418, 0.0
    %v3573 = vsel %vm1725, %v3419, 0.0
    %v3574 = vsel %vm1726, %v3420, 0.0
    %v3575 = vsel %vm1727, %v3421, 0.0
    %v3576 = vsel %vm1728, %v3422, 0.0
    %v3577 = vsel %vm1729, %v3423, 0.0
    %v3578 = vsel %vm1730, %v3424, 0.0
    %v3579 = vsel %vm1731, %v3425, 0.0
    %v3580 = vsel %vm1732, %v3426, 0.0
    %v3581 = vsel %vm1733, %v3427, 0.0
    %v3582 = vsel %vm1734, %v3428, 0.0
    %v3583 = vsel %vm1735, %v3429, 0.0
    %v3584 = vsel %vm1736, %v3430, 0.0
    %v3585 = vsel %vm1737, %v3431, 0.0
    %v3586 = vsub.f32 %v1276, %v1430
    %v3587 = vsub.f32 %v1277, %v1431
    %v3588 = vsub.f32 %v1278, %v1432
    %v3589 = vsub.f32 %v1279, %v1433
    %v3590 = vsub.f32 %v1280, %v1434
    %v3591 = vsub.f32 %v1281, %v1435
    %v3592 = vsub.f32 %v1282, %v1436
    %v3593 = vsub.f32 %v1283, %v1437
    %v3594 = vsub.f32 %v1284, %v1438
    %v3595 = vsub.f32 %v1285, %v1439
    %v3596 = vsub.f32 %v1286, %v1440
    %v3597 = vsub.f32 %v1287, %v1441
    %v3598 = vsub.f32 %v1288, %v1442
    %v3599 = vsub.f32 %v1289, %v1443
    %v3600 = vsub.f32 %v1290, %v1444
    %v3601 = vsub.f32 %v1291, %v1445
    %v3602 = vsub.f32 %v1292, %v1446
    %v3603 = vsub.f32 %v1293, %v1447
    %v3604 = vsub.f32 %v1294, %v1448
    %v3605 = vsub.f32 %v1295, %v1449
    %v3606 = vsub.f32 %v1296, %v1450
    %v3607 = vsub.f32 %v1297, %v1451
    %v3608 = vsub.f32 %v1298, %v1452
    %v3609 = vsub.f32 %v1299, %v1453
    %v3610 = vsub.f32 %v1300, %v1454
    %v3611 = vsub.f32 %v1301, %v1455
    %v3612 = vsub.f32 %v1302, %v1456
    %v3613 = vsub.f32 %v1303, %v1457
    %v3614 = vsub.f32 %v1304, %v1458
    %v3615 = vsub.f32 %v1305, %v1459
    %v3616 = vsub.f32 %v1306, %v1460
    %v3617 = vsub.f32 %v1307, %v1461
    %v3618 = vsub.f32 %v1308, %v1462
    %v3619 = vsub.f32 %v1309, %v1463
    %v3620 = vsub.f32 %v1310, %v1464
    %v3621 = vsub.f32 %v1311, %v1465
    %v3622 = vsub.f32 %v1312, %v1466
    %v3623 = vsub.f32 %v1313, %v1467
    %v3624 = vsub.f32 %v1314, %v1468
    %v3625 = vsub.f32 %v1315, %v1469
    %v3626 = vsub.f32 %v1316, %v1470
    %v3627 = vsub.f32 %v1317, %v1471
    %v3628 = vsub.f32 %v1318, %v1472
    %v3629 = vsub.f32 %v1319, %v1473
    %v3630 = vsub.f32 %v1320, %v1474
    %v3631 = vsub.f32 %v1321, %v1475
    %v3632 = vsub.f32 %v1322, %v1476
    %v3633 = vsub.f32 %v1323, %v1477
    %v3634 = vsub.f32 %v1324, %v1478
    %v3635 = vsub.f32 %v1325, %v1479
    %v3636 = vsub.f32 %v1326, %v1480
    %v3637 = vsub.f32 %v1327, %v1481
    %v3638 = vsub.f32 %v1328, %v1482
    %v3639 = vsub.f32 %v1329, %v1483
    %v3640 = vsub.f32 %v1330, %v1484
    %v3641 = vsub.f32 %v1331, %v1485
    %v3642 = vsub.f32 %v1332, %v1486
    %v3643 = vsub.f32 %v1333, %v1487
    %v3644 = vsub.f32 %v1334, %v1488
    %v3645 = vsub.f32 %v1335, %v1489
    %v3646 = vsub.f32 %v1336, %v1490
    %v3647 = vsub.f32 %v1337, %v1491
    %v3648 = vsub.f32 %v1338, %v1492
    %v3649 = vsub.f32 %v1339, %v1493
    %v3650 = vsub.f32 %v1340, %v1494
    %v3651 = vsub.f32 %v1341, %v1495
    %v3652 = vsub.f32 %v1342, %v1496
    %v3653 = vsub.f32 %v1343, %v1497
    %v3654 = vsub.f32 %v1344, %v1498
    %v3655 = vsub.f32 %v1345, %v1499
    %v3656 = vsub.f32 %v1346, %v1500
    %v3657 = vsub.f32 %v1347, %v1501
    %v3658 = vsub.f32 %v1348, %v1502
    %v3659 = vsub.f32 %v1349, %v1503
    %v3660 = vsub.f32 %v1350, %v1504
    %v3661 = vsub.f32 %v1351, %v1505
    %v3662 = vsub.f32 %v1352, %v1506
    %v3663 = vsub.f32 %v1353, %v1507
    %v3664 = vsub.f32 %v1354, %v1508
    %v3665 = vsub.f32 %v1355, %v1509
    %v3666 = vsub.f32 %v1356, %v1510
    %v3667 = vsub.f32 %v1357, %v1511
    %v3668 = vsub.f32 %v1358, %v1512
    %v3669 = vsub.f32 %v1359, %v1513
    %v3670 = vsub.f32 %v1360, %v1514
    %v3671 = vsub.f32 %v1361, %v1515
    %v3672 = vsub.f32 %v1362, %v1516
    %v3673 = vsub.f32 %v1363, %v1517
    %v3674 = vsub.f32 %v1364, %v1518
    %v3675 = vsub.f32 %v1365, %v1519
    %v3676 = vsub.f32 %v1366, %v1520
    %v3677 = vsub.f32 %v1367, %v1521
    %v3678 = vsub.f32 %v1368, %v1522
    %v3679 = vsub.f32 %v1369, %v1523
    %v3680 = vsub.f32 %v1370, %v1524
    %v3681 = vsub.f32 %v1371, %v1525
    %v3682 = vsub.f32 %v1372, %v1526
    %v3683 = vsub.f32 %v1373, %v1527
    %v3684 = vsub.f32 %v1374, %v1528
    %v3685 = vsub.f32 %v1375, %v1529
    %v3686 = vsub.f32 %v1376, %v1530
    %v3687 = vsub.f32 %v1377, %v1531
    %v3688 = vsub.f32 %v1378, %v1532
    %v3689 = vsub.f32 %v1379, %v1533
    %v3690 = vsub.f32 %v1380, %v1534
    %v3691 = vsub.f32 %v1381, %v1535
    %v3692 = vsub.f32 %v1382, %v1536
    %v3693 = vsub.f32 %v1383, %v1537
    %v3694 = vsub.f32 %v1384, %v1538
    %v3695 = vsub.f32 %v1385, %v1539
    %v3696 = vsub.f32 %v1386, %v1540
    %v3697 = vsub.f32 %v1387, %v1541
    %v3698 = vsub.f32 %v1388, %v1542
    %v3699 = vsub.f32 %v1389, %v1543
    %v3700 = vsub.f32 %v1390, %v1544
    %v3701 = vsub.f32 %v1391, %v1545
    %v3702 = vsub.f32 %v1392, %v1546
    %v3703 = vsub.f32 %v1393, %v1547
    %v3704 = vsub.f32 %v1394, %v1548
    %v3705 = vsub.f32 %v1395, %v1549
    %v3706 = vsub.f32 %v1396, %v1550
    %v3707 = vsub.f32 %v1397, %v1551
    %v3708 = vsub.f32 %v1398, %v1552
    %v3709 = vsub.f32 %v1399, %v1553
    %v3710 = vsub.f32 %v1400, %v1554
    %v3711 = vsub.f32 %v1401, %v1555
    %v3712 = vsub.f32 %v1402, %v1556
    %v3713 = vsub.f32 %v1403, %v1557
    %v3714 = vsub.f32 %v1404, %v1558
    %v3715 = vsub.f32 %v1405, %v1559
    %v3716 = vsub.f32 %v1406, %v1560
    %v3717 = vsub.f32 %v1407, %v1561
    %v3718 = vsub.f32 %v1408, %v1562
    %v3719 = vsub.f32 %v1409, %v1563
    %v3720 = vsub.f32 %v1410, %v1564
    %v3721 = vsub.f32 %v1411, %v1565
    %v3722 = vsub.f32 %v1412, %v1566
    %v3723 = vsub.f32 %v1413, %v1567
    %v3724 = vsub.f32 %v1414, %v1568
    %v3725 = vsub.f32 %v1415, %v1569
    %v3726 = vsub.f32 %v1416, %v1570
    %v3727 = vsub.f32 %v1417, %v1571
    %v3728 = vsub.f32 %v1418, %v1572
    %v3729 = vsub.f32 %v1419, %v1573
    %v3730 = vsub.f32 %v1420, %v1574
    %v3731 = vsub.f32 %v1421, %v1575
    %v3732 = vsub.f32 %v1422, %v1576
    %v3733 = vsub.f32 %v1423, %v1577
    %v3734 = vsub.f32 %v1424, %v1578
    %v3735 = vsub.f32 %v1425, %v1579
    %v3736 = vsub.f32 %v1426, %v1580
    %v3737 = vsub.f32 %v1427, %v1581
    %v3738 = vsub.f32 %v1428, %v1582
    %v3739 = vsub.f32 %v1429, %v1583
    %v3740 = vadd.f32 %v3432, %v3433
    %v3741 = vadd.f32 %v3740, %v3434
    %v3742 = vadd.f32 %v3741, %v3435
    %v3743 = vadd.f32 %v3742, %v3436
    %v3744 = vadd.f32 %v3743, %v3437
    %v3745 = vadd.f32 %v3744, %v3438
    %v3746 = vadd.f32 %v3745, %v3439
    %v3747 = vadd.f32 %v3746, %v3440
    %v3748 = vadd.f32 %v3747, %v3441
    %v3749 = vadd.f32 %v3748, %v3442
    %v3750 = vadd.f32 %v3749, %v3443
    %v3751 = vadd.f32 %v3750, %v3444
    %v3752 = vadd.f32 %v3751, %v3445
    %v3753 = vadd.f32 %v3752, %v3446
    %v3754 = vadd.f32 %v3753, %v3447
    %v3755 = vadd.f32 %v3754, %v3448
    %v3756 = vadd.f32 %v3755, %v3449
    %v3757 = vadd.f32 %v3756, %v3450
    %v3758 = vadd.f32 %v3757, %v3451
    %v3759 = vadd.f32 %v3758, %v3452
    %vm3760 = vcmask 130048
    %v3761 = vsel %vm3760, %v3453, 0.0
    %v3762 = vadd.f32 %v3759, %v3761
    %3763 = vadd.xlane.f32.xlu0 %v3762
    %v3764 = vpop.xlane.xlu0 %3763
    %v3765 = vadd.f32 %v3454, %v3455
    %v3766 = vadd.f32 %v3765, %v3456
    %v3767 = vadd.f32 %v3766, %v3457
    %v3768 = vadd.f32 %v3767, %v3458
    %v3769 = vadd.f32 %v3768, %v3459
    %v3770 = vadd.f32 %v3769, %v3460
    %v3771 = vadd.f32 %v3770, %v3461
    %v3772 = vadd.f32 %v3771, %v3462
    %v3773 = vadd.f32 %v3772, %v3463
    %v3774 = vadd.f32 %v3773, %v3464
    %v3775 = vadd.f32 %v3774, %v3465
    %v3776 = vadd.f32 %v3775, %v3466
    %v3777 = vadd.f32 %v3776, %v3467
    %v3778 = vadd.f32 %v3777, %v3468
    %v3779 = vadd.f32 %v3778, %v3469
    %v3780 = vadd.f32 %v3779, %v3470
    %v3781 = vadd.f32 %v3780, %v3471
    %v3782 = vadd.f32 %v3781, %v3472
    %v3783 = vadd.f32 %v3782, %v3473
    %v3784 = vadd.f32 %v3783, %v3474
    %v3785 = vsel %vm3760, %v3475, 0.0
    %v3786 = vadd.f32 %v3784, %v3785
    %3787 = vadd.xlane.f32.xlu0 %v3786
    %v3788 = vpop.xlane.xlu0 %3787
    %v3789 = vadd.f32 %v3476, %v3477
    %v3790 = vadd.f32 %v3789, %v3478
    %v3791 = vadd.f32 %v3790, %v3479
    %v3792 = vadd.f32 %v3791, %v3480
    %v3793 = vadd.f32 %v3792, %v3481
    %v3794 = vadd.f32 %v3793, %v3482
    %v3795 = vadd.f32 %v3794, %v3483
    %v3796 = vadd.f32 %v3795, %v3484
    %v3797 = vadd.f32 %v3796, %v3485
    %v3798 = vadd.f32 %v3797, %v3486
    %v3799 = vadd.f32 %v3798, %v3487
    %v3800 = vadd.f32 %v3799, %v3488
    %v3801 = vadd.f32 %v3800, %v3489
    %v3802 = vadd.f32 %v3801, %v3490
    %v3803 = vadd.f32 %v3802, %v3491
    %v3804 = vadd.f32 %v3803, %v3492
    %v3805 = vadd.f32 %v3804, %v3493
    %v3806 = vadd.f32 %v3805, %v3494
    %v3807 = vadd.f32 %v3806, %v3495
    %v3808 = vadd.f32 %v3807, %v3496
    %v3809 = vsel %vm3760, %v3497, 0.0
    %v3810 = vadd.f32 %v3808, %v3809
    %3811 = vadd.xlane.f32.xlu0 %v3810
    %v3812 = vpop.xlane.xlu0 %3811
    %v3813 = vadd.f32 %v3498, %v3499
    %v3814 = vadd.f32 %v3813, %v3500
    %v3815 = vadd.f32 %v3814, %v3501
    %v3816 = vadd.f32 %v3815, %v3502
    %v3817 = vadd.f32 %v3816, %v3503
    %v3818 = vadd.f32 %v3817, %v3504
    %v3819 = vadd.f32 %v3818, %v3505
    %v3820 = vadd.f32 %v3819, %v3506
    %v3821 = vadd.f32 %v3820, %v3507
    %v3822 = vadd.f32 %v3821, %v3508
    %v3823 = vadd.f32 %v3822, %v3509
    %v3824 = vadd.f32 %v3823, %v3510
    %v3825 = vadd.f32 %v3824, %v3511
    %v3826 = vadd.f32 %v3825, %v3512
    %v3827 = vadd.f32 %v3826, %v3513
    %v3828 = vadd.f32 %v3827, %v3514
    %v3829 = vadd.f32 %v3828, %v3515
    %v3830 = vadd.f32 %v3829, %v3516
    %v3831 = vadd.f32 %v3830, %v3517
    %v3832 = vadd.f32 %v3831, %v3518
    %v3833 = vsel %vm3760, %v3519, 0.0
    %v3834 = vadd.f32 %v3832, %v3833
    %3835 = vadd.xlane.f32.xlu0 %v3834
    %v3836 = vpop.xlane.xlu0 %3835
    %v3837 = vadd.f32 %v3520, %v3521
    %v3838 = vadd.f32 %v3837, %v3522
    %v3839 = vadd.f32 %v3838, %v3523
    %v3840 = vadd.f32 %v3839, %v3524
    %v3841 = vadd.f32 %v3840, %v3525
    %v3842 = vadd.f32 %v3841, %v3526
    %v3843 = vadd.f32 %v3842, %v3527
    %v3844 = vadd.f32 %v3843, %v3528
    %v3845 = vadd.f32 %v3844, %v3529
    %v3846 = vadd.f32 %v3845, %v3530
    %v3847 = vadd.f32 %v3846, %v3531
    %v3848 = vadd.f32 %v3847, %v3532
    %v3849 = vadd.f32 %v3848, %v3533
    %v3850 = vadd.f32 %v3849, %v3534
    %v3851 = vadd.f32 %v3850, %v3535
    %v3852 = vadd.f32 %v3851, %v3536
    %v3853 = vadd.f32 %v3852, %v3537
    %v3854 = vadd.f32 %v3853, %v3538
    %v3855 = vadd.f32 %v3854, %v3539
    %v3856 = vadd.f32 %v3855, %v3540
    %v3857 = vsel %vm3760, %v3541, 0.0
    %v3858 = vadd.f32 %v3856, %v3857
    %3859 = vadd.xlane.f32.xlu0 %v3858
    %v3860 = vpop.xlane.xlu0 %3859
    %v3861 = vadd.f32 %v3542, %v3543
    %v3862 = vadd.f32 %v3861, %v3544
    %v3863 = vadd.f32 %v3862, %v3545
    %v3864 = vadd.f32 %v3863, %v3546
    %v3865 = vadd.f32 %v3864, %v3547
    %v3866 = vadd.f32 %v3865, %v3548
    %v3867 = vadd.f32 %v3866, %v3549
    %v3868 = vadd.f32 %v3867, %v3550
    %v3869 = vadd.f32 %v3868, %v3551
    %v3870 = vadd.f32 %v3869, %v3552
    %v3871 = vadd.f32 %v3870, %v3553
    %v3872 = vadd.f32 %v3871, %v3554
    %v3873 = vadd.f32 %v3872, %v3555
    %v3874 = vadd.f32 %v3873, %v3556
    %v3875 = vadd.f32 %v3874, %v3557
    %v3876 = vadd.f32 %v3875, %v3558
    %v3877 = vadd.f32 %v3876, %v3559
    %v3878 = vadd.f32 %v3877, %v3560
    %v3879 = vadd.f32 %v3878, %v3561
    %v3880 = vadd.f32 %v3879, %v3562
    %v3881 = vsel %vm3760, %v3563, 0.0
    %v3882 = vadd.f32 %v3880, %v3881
    %3883 = vadd.xlane.f32.xlu0 %v3882
    %v3884 = vpop.xlane.xlu0 %3883
    %v3885 = vsel %vm352, %v3564, 0.0
    %v3886 = vsel %vm352, %v3565, 0.0
    %v3887 = vadd.f32 %v3885, %v3886
    %v3888 = vsel %vm352, %v3566, 0.0
    %v3889 = vadd.f32 %v3887, %v3888
    %v3890 = vsel %vm352, %v3567, 0.0
    %v3891 = vadd.f32 %v3889, %v3890
    %v3892 = vsel %vm352, %v3568, 0.0
    %v3893 = vadd.f32 %v3891, %v3892
    %v3894 = vsel %vm352, %v3569, 0.0
    %v3895 = vadd.f32 %v3893, %v3894
    %v3896 = vsel %vm352, %v3570, 0.0
    %v3897 = vadd.f32 %v3895, %v3896
    %v3898 = vsel %vm352, %v3571, 0.0
    %v3899 = vadd.f32 %v3897, %v3898
    %v3900 = vsel %vm352, %v3572, 0.0
    %v3901 = vadd.f32 %v3899, %v3900
    %v3902 = vsel %vm352, %v3573, 0.0
    %v3903 = vadd.f32 %v3901, %v3902
    %v3904 = vsel %vm352, %v3574, 0.0
    %v3905 = vadd.f32 %v3903, %v3904
    %v3906 = vsel %vm352, %v3575, 0.0
    %v3907 = vadd.f32 %v3905, %v3906
    %v3908 = vsel %vm352, %v3576, 0.0
    %v3909 = vadd.f32 %v3907, %v3908
    %v3910 = vsel %vm352, %v3577, 0.0
    %v3911 = vadd.f32 %v3909, %v3910
    %v3912 = vsel %vm352, %v3578, 0.0
    %v3913 = vadd.f32 %v3911, %v3912
    %v3914 = vsel %vm352, %v3579, 0.0
    %v3915 = vadd.f32 %v3913, %v3914
    %v3916 = vsel %vm352, %v3580, 0.0
    %v3917 = vadd.f32 %v3915, %v3916
    %v3918 = vsel %vm352, %v3581, 0.0
    %v3919 = vadd.f32 %v3917, %v3918
    %v3920 = vsel %vm352, %v3582, 0.0
    %v3921 = vadd.f32 %v3919, %v3920
    %v3922 = vsel %vm352, %v3583, 0.0
    %v3923 = vadd.f32 %v3921, %v3922
    %v3924 = vsel %vm352, %v3584, 0.0
    %v3925 = vadd.f32 %v3923, %v3924
    %vm3926 = vcmask 128000
    %v3927 = vsel %vm3926, %v3585, 0.0
    %v3928 = vadd.f32 %v3925, %v3927
    %3929 = vadd.xlane.f32.xlu0 %v3928
    %v3930 = vpop.xlane.xlu0 %3929
    %v3931 = vmul.f32 %v3586, %v3586
    %v3932 = vmul.f32 %v3587, %v3587
    %v3933 = vmul.f32 %v3588, %v3588
    %v3934 = vmul.f32 %v3589, %v3589
    %v3935 = vmul.f32 %v3590, %v3590
    %v3936 = vmul.f32 %v3591, %v3591
    %v3937 = vmul.f32 %v3592, %v3592
    %v3938 = vmul.f32 %v3593, %v3593
    %v3939 = vmul.f32 %v3594, %v3594
    %v3940 = vmul.f32 %v3595, %v3595
    %v3941 = vmul.f32 %v3596, %v3596
    %v3942 = vmul.f32 %v3597, %v3597
    %v3943 = vmul.f32 %v3598, %v3598
    %v3944 = vmul.f32 %v3599, %v3599
    %v3945 = vmul.f32 %v3600, %v3600
    %v3946 = vmul.f32 %v3601, %v3601
    %v3947 = vmul.f32 %v3602, %v3602
    %v3948 = vmul.f32 %v3603, %v3603
    %v3949 = vmul.f32 %v3604, %v3604
    %v3950 = vmul.f32 %v3605, %v3605
    %v3951 = vmul.f32 %v3606, %v3606
    %v3952 = vmul.f32 %v3607, %v3607
    %v3953 = vmul.f32 %v3608, %v3608
    %v3954 = vmul.f32 %v3609, %v3609
    %v3955 = vmul.f32 %v3610, %v3610
    %v3956 = vmul.f32 %v3611, %v3611
    %v3957 = vmul.f32 %v3612, %v3612
    %v3958 = vmul.f32 %v3613, %v3613
    %v3959 = vmul.f32 %v3614, %v3614
    %v3960 = vmul.f32 %v3615, %v3615
    %v3961 = vmul.f32 %v3616, %v3616
    %v3962 = vmul.f32 %v3617, %v3617
    %v3963 = vmul.f32 %v3618, %v3618
    %v3964 = vmul.f32 %v3619, %v3619
    %v3965 = vmul.f32 %v3620, %v3620
    %v3966 = vmul.f32 %v3621, %v3621
    %v3967 = vmul.f32 %v3622, %v3622
    %v3968 = vmul.f32 %v3623, %v3623
    %v3969 = vmul.f32 %v3624, %v3624
    %v3970 = vmul.f32 %v3625, %v3625
    %v3971 = vmul.f32 %v3626, %v3626
    %v3972 = vmul.f32 %v3627, %v3627
    %v3973 = vmul.f32 %v3628, %v3628
    %v3974 = vmul.f32 %v3629, %v3629
    %v3975 = vmul.f32 %v3630, %v3630
    %v3976 = vmul.f32 %v3631, %v3631
    %v3977 = vmul.f32 %v3632, %v3632
    %v3978 = vmul.f32 %v3633, %v3633
    %v3979 = vmul.f32 %v3634, %v3634
    %v3980 = vmul.f32 %v3635, %v3635
    %v3981 = vmul.f32 %v3636, %v3636
    %v3982 = vmul.f32 %v3637, %v3637
    %v3983 = vmul.f32 %v3638, %v3638
    %v3984 = vmul.f32 %v3639, %v3639
    %v3985 = vmul.f32 %v3640, %v3640
    %v3986 = vmul.f32 %v3641, %v3641
    %v3987 = vmul.f32 %v3642, %v3642
    %v3988 = vmul.f32 %v3643, %v3643
    %v3989 = vmul.f32 %v3644, %v3644
    %v3990 = vmul.f32 %v3645, %v3645
    %v3991 = vmul.f32 %v3646, %v3646
    %v3992 = vmul.f32 %v3647, %v3647
    %v3993 = vmul.f32 %v3648, %v3648
    %v3994 = vmul.f32 %v3649, %v3649
    %v3995 = vmul.f32 %v3650, %v3650
    %v3996 = vmul.f32 %v3651, %v3651
    %v3997 = vmul.f32 %v3652, %v3652
    %v3998 = vmul.f32 %v3653, %v3653
    %v3999 = vmul.f32 %v3654, %v3654
    %v4000 = vmul.f32 %v3655, %v3655
    %v4001 = vmul.f32 %v3656, %v3656
    %v4002 = vmul.f32 %v3657, %v3657
    %v4003 = vmul.f32 %v3658, %v3658
    %v4004 = vmul.f32 %v3659, %v3659
    %v4005 = vmul.f32 %v3660, %v3660
    %v4006 = vmul.f32 %v3661, %v3661
    %v4007 = vmul.f32 %v3662, %v3662
    %v4008 = vmul.f32 %v3663, %v3663
    %v4009 = vmul.f32 %v3664, %v3664
    %v4010 = vmul.f32 %v3665, %v3665
    %v4011 = vmul.f32 %v3666, %v3666
    %v4012 = vmul.f32 %v3667, %v3667
    %v4013 = vmul.f32 %v3668, %v3668
    %v4014 = vmul.f32 %v3669, %v3669
    %v4015 = vmul.f32 %v3670, %v3670
    %v4016 = vmul.f32 %v3671, %v3671
    %v4017 = vmul.f32 %v3672, %v3672
    %v4018 = vmul.f32 %v3673, %v3673
    %v4019 = vmul.f32 %v3674, %v3674
    %v4020 = vmul.f32 %v3675, %v3675
    %v4021 = vmul.f32 %v3676, %v3676
    %v4022 = vmul.f32 %v3677, %v3677
    %v4023 = vmul.f32 %v3678, %v3678
    %v4024 = vmul.f32 %v3679, %v3679
    %v4025 = vmul.f32 %v3680, %v3680
    %v4026 = vmul.f32 %v3681, %v3681
    %v4027 = vmul.f32 %v3682, %v3682
    %v4028 = vmul.f32 %v3683, %v3683
    %v4029 = vmul.f32 %v3684, %v3684
    %v4030 = vmul.f32 %v3685, %v3685
    %v4031 = vmul.f32 %v3686, %v3686
    %v4032 = vmul.f32 %v3687, %v3687
    %v4033 = vmul.f32 %v3688, %v3688
    %v4034 = vmul.f32 %v3689, %v3689
    %v4035 = vmul.f32 %v3690, %v3690
    %v4036 = vmul.f32 %v3691, %v3691
    %v4037 = vmul.f32 %v3692, %v3692
    %v4038 = vmul.f32 %v3693, %v3693
    %v4039 = vmul.f32 %v3694, %v3694
    %v4040 = vmul.f32 %v3695, %v3695
    %v4041 = vmul.f32 %v3696, %v3696
    %v4042 = vmul.f32 %v3697, %v3697
    %v4043 = vmul.f32 %v3698, %v3698
    %v4044 = vmul.f32 %v3699, %v3699
    %v4045 = vmul.f32 %v3700, %v3700
    %v4046 = vmul.f32 %v3701, %v3701
    %v4047 = vmul.f32 %v3702, %v3702
    %v4048 = vmul.f32 %v3703, %v3703
    %v4049 = vmul.f32 %v3704, %v3704
    %v4050 = vmul.f32 %v3705, %v3705
    %v4051 = vmul.f32 %v3706, %v3706
    %v4052 = vmul.f32 %v3707, %v3707
    %v4053 = vmul.f32 %v3708, %v3708
    %v4054 = vmul.f32 %v3709, %v3709
    %v4055 = vmul.f32 %v3710, %v3710
    %v4056 = vmul.f32 %v3711, %v3711
    %v4057 = vmul.f32 %v3712, %v3712
    %v4058 = vmul.f32 %v3713, %v3713
    %v4059 = vmul.f32 %v3714, %v3714
    %v4060 = vmul.f32 %v3715, %v3715
    %v4061 = vmul.f32 %v3716, %v3716
    %v4062 = vmul.f32 %v3717, %v3717
    %v4063 = vmul.f32 %v3718, %v3718
    %v4064 = vmul.f32 %v3719, %v3719
    %v4065 = vmul.f32 %v3720, %v3720
    %v4066 = vmul.f32 %v3721, %v3721
    %v4067 = vmul.f32 %v3722, %v3722
    %v4068 = vmul.f32 %v3723, %v3723
    %v4069 = vmul.f32 %v3724, %v3724
    %v4070 = vmul.f32 %v3725, %v3725
    %v4071 = vmul.f32 %v3726, %v3726
    %v4072 = vmul.f32 %v3727, %v3727
    %v4073 = vmul.f32 %v3728, %v3728
    %v4074 = vmul.f32 %v3729, %v3729
    %v4075 = vmul.f32 %v3730, %v3730
    %v4076 = vmul.f32 %v3731, %v3731
    %v4077 = vmul.f32 %v3732, %v3732
    %v4078 = vmul.f32 %v3733, %v3733
    %v4079 = vmul.f32 %v3734, %v3734
    %v4080 = vmul.f32 %v3735, %v3735
    %v4081 = vmul.f32 %v3736, %v3736
    %v4082 = vmul.f32 %v3737, %v3737
    %v4083 = vmul.f32 %v3738, %v3738
    %v4084 = vmul.f32 %v3739, %v3739
    %v4085 = vadd.f32 %v3931, %v3932
    %v4086 = vadd.f32 %v4085, %v3933
    %v4087 = vadd.f32 %v4086, %v3934
    %v4088 = vadd.f32 %v4087, %v3935
    %v4089 = vadd.f32 %v4088, %v3936
    %v4090 = vadd.f32 %v4089, %v3937
    %v4091 = vadd.f32 %v4090, %v3938
    %v4092 = vadd.f32 %v4091, %v3939
    %v4093 = vadd.f32 %v4092, %v3940
    %v4094 = vadd.f32 %v4093, %v3941
    %v4095 = vadd.f32 %v4094, %v3942
    %v4096 = vadd.f32 %v4095, %v3943
    %v4097 = vadd.f32 %v4096, %v3944
    %v4098 = vadd.f32 %v4097, %v3945
    %v4099 = vadd.f32 %v4098, %v3946
    %v4100 = vadd.f32 %v4099, %v3947
    %v4101 = vadd.f32 %v4100, %v3948
    %v4102 = vadd.f32 %v4101, %v3949
    %v4103 = vadd.f32 %v4102, %v3950
    %v4104 = vadd.f32 %v4103, %v3951
    %v4105 = vsel %vm3760, %v3952, 0.0
    %v4106 = vadd.f32 %v4104, %v4105
    %4107 = vadd.xlane.f32.xlu0 %v4106
    %v4108 = vpop.xlane.xlu0 %4107
    %v4109 = vadd.f32 %v3953, %v3954
    %v4110 = vadd.f32 %v4109, %v3955
    %v4111 = vadd.f32 %v4110, %v3956
    %v4112 = vadd.f32 %v4111, %v3957
    %v4113 = vadd.f32 %v4112, %v3958
    %v4114 = vadd.f32 %v4113, %v3959
    %v4115 = vadd.f32 %v4114, %v3960
    %v4116 = vadd.f32 %v4115, %v3961
    %v4117 = vadd.f32 %v4116, %v3962
    %v4118 = vadd.f32 %v4117, %v3963
    %v4119 = vadd.f32 %v4118, %v3964
    %v4120 = vadd.f32 %v4119, %v3965
    %v4121 = vadd.f32 %v4120, %v3966
    %v4122 = vadd.f32 %v4121, %v3967
    %v4123 = vadd.f32 %v4122, %v3968
    %v4124 = vadd.f32 %v4123, %v3969
    %v4125 = vadd.f32 %v4124, %v3970
    %v4126 = vadd.f32 %v4125, %v3971
    %v4127 = vadd.f32 %v4126, %v3972
    %v4128 = vadd.f32 %v4127, %v3973
    %v4129 = vsel %vm3760, %v3974, 0.0
    %v4130 = vadd.f32 %v4128, %v4129
    %4131 = vadd.xlane.f32.xlu0 %v4130
    %v4132 = vpop.xlane.xlu0 %4131
    %v4133 = vadd.f32 %v3975, %v3976
    %v4134 = vadd.f32 %v4133, %v3977
    %v4135 = vadd.f32 %v4134, %v3978
    %v4136 = vadd.f32 %v4135, %v3979
    %v4137 = vadd.f32 %v4136, %v3980
    %v4138 = vadd.f32 %v4137, %v3981
    %v4139 = vadd.f32 %v4138, %v3982
    %v4140 = vadd.f32 %v4139, %v3983
    %v4141 = vadd.f32 %v4140, %v3984
    %v4142 = vadd.f32 %v4141, %v3985
    %v4143 = vadd.f32 %v4142, %v3986
    %v4144 = vadd.f32 %v4143, %v3987
    %v4145 = vadd.f32 %v4144, %v3988
    %v4146 = vadd.f32 %v4145, %v3989
    %v4147 = vadd.f32 %v4146, %v3990
    %v4148 = vadd.f32 %v4147, %v3991
    %v4149 = vadd.f32 %v4148, %v3992
    %v4150 = vadd.f32 %v4149, %v3993
    %v4151 = vadd.f32 %v4150, %v3994
    %v4152 = vadd.f32 %v4151, %v3995
    %v4153 = vsel %vm3760, %v3996, 0.0
    %v4154 = vadd.f32 %v4152, %v4153
    %4155 = vadd.xlane.f32.xlu0 %v4154
    %v4156 = vpop.xlane.xlu0 %4155
    %v4157 = vadd.f32 %v3997, %v3998
    %v4158 = vadd.f32 %v4157, %v3999
    %v4159 = vadd.f32 %v4158, %v4000
    %v4160 = vadd.f32 %v4159, %v4001
    %v4161 = vadd.f32 %v4160, %v4002
    %v4162 = vadd.f32 %v4161, %v4003
    %v4163 = vadd.f32 %v4162, %v4004
    %v4164 = vadd.f32 %v4163, %v4005
    %v4165 = vadd.f32 %v4164, %v4006
    %v4166 = vadd.f32 %v4165, %v4007
    %v4167 = vadd.f32 %v4166, %v4008
    %v4168 = vadd.f32 %v4167, %v4009
    %v4169 = vadd.f32 %v4168, %v4010
    %v4170 = vadd.f32 %v4169, %v4011
    %v4171 = vadd.f32 %v4170, %v4012
    %v4172 = vadd.f32 %v4171, %v4013
    %v4173 = vadd.f32 %v4172, %v4014
    %v4174 = vadd.f32 %v4173, %v4015
    %v4175 = vadd.f32 %v4174, %v4016
    %v4176 = vadd.f32 %v4175, %v4017
    %v4177 = vsel %vm3760, %v4018, 0.0
    %v4178 = vadd.f32 %v4176, %v4177
    %4179 = vadd.xlane.f32.xlu0 %v4178
    %v4180 = vpop.xlane.xlu0 %4179
    %v4181 = vadd.f32 %v4019, %v4020
    %v4182 = vadd.f32 %v4181, %v4021
    %v4183 = vadd.f32 %v4182, %v4022
    %v4184 = vadd.f32 %v4183, %v4023
    %v4185 = vadd.f32 %v4184, %v4024
    %v4186 = vadd.f32 %v4185, %v4025
    %v4187 = vadd.f32 %v4186, %v4026
    %v4188 = vadd.f32 %v4187, %v4027
    %v4189 = vadd.f32 %v4188, %v4028
    %v4190 = vadd.f32 %v4189, %v4029
    %v4191 = vadd.f32 %v4190, %v4030
    %v4192 = vadd.f32 %v4191, %v4031
    %v4193 = vadd.f32 %v4192, %v4032
    %v4194 = vadd.f32 %v4193, %v4033
    %v4195 = vadd.f32 %v4194, %v4034
    %v4196 = vadd.f32 %v4195, %v4035
    %v4197 = vadd.f32 %v4196, %v4036
    %v4198 = vadd.f32 %v4197, %v4037
    %v4199 = vadd.f32 %v4198, %v4038
    %v4200 = vadd.f32 %v4199, %v4039
    %v4201 = vsel %vm3760, %v4040, 0.0
    %v4202 = vadd.f32 %v4200, %v4201
    %4203 = vadd.xlane.f32.xlu0 %v4202
    %v4204 = vpop.xlane.xlu0 %4203
    %v4205 = vadd.f32 %v4041, %v4042
    %v4206 = vadd.f32 %v4205, %v4043
    %v4207 = vadd.f32 %v4206, %v4044
    %v4208 = vadd.f32 %v4207, %v4045
    %v4209 = vadd.f32 %v4208, %v4046
    %v4210 = vadd.f32 %v4209, %v4047
    %v4211 = vadd.f32 %v4210, %v4048
    %v4212 = vadd.f32 %v4211, %v4049
    %v4213 = vadd.f32 %v4212, %v4050
    %v4214 = vadd.f32 %v4213, %v4051
    %v4215 = vadd.f32 %v4214, %v4052
    %v4216 = vadd.f32 %v4215, %v4053
    %v4217 = vadd.f32 %v4216, %v4054
    %v4218 = vadd.f32 %v4217, %v4055
    %v4219 = vadd.f32 %v4218, %v4056
    %v4220 = vadd.f32 %v4219, %v4057
    %v4221 = vadd.f32 %v4220, %v4058
    %v4222 = vadd.f32 %v4221, %v4059
    %v4223 = vadd.f32 %v4222, %v4060
    %v4224 = vadd.f32 %v4223, %v4061
    %v4225 = vsel %vm3760, %v4062, 0.0
    %v4226 = vadd.f32 %v4224, %v4225
    %4227 = vadd.xlane.f32.xlu0 %v4226
    %v4228 = vpop.xlane.xlu0 %4227
    %v4229 = vsel %vm352, %v4063, 0.0
    %v4230 = vsel %vm352, %v4064, 0.0
    %v4231 = vadd.f32 %v4229, %v4230
    %v4232 = vsel %vm352, %v4065, 0.0
    %v4233 = vadd.f32 %v4231, %v4232
    %v4234 = vsel %vm352, %v4066, 0.0
    %v4235 = vadd.f32 %v4233, %v4234
    %v4236 = vsel %vm352, %v4067, 0.0
    %v4237 = vadd.f32 %v4235, %v4236
    %v4238 = vsel %vm352, %v4068, 0.0
    %v4239 = vadd.f32 %v4237, %v4238
    %v4240 = vsel %vm352, %v4069, 0.0
    %v4241 = vadd.f32 %v4239, %v4240
    %v4242 = vsel %vm352, %v4070, 0.0
    %v4243 = vadd.f32 %v4241, %v4242
    %v4244 = vsel %vm352, %v4071, 0.0
    %v4245 = vadd.f32 %v4243, %v4244
    %v4246 = vsel %vm352, %v4072, 0.0
    %v4247 = vadd.f32 %v4245, %v4246
    %v4248 = vsel %vm352, %v4073, 0.0
    %v4249 = vadd.f32 %v4247, %v4248
    %v4250 = vsel %vm352, %v4074, 0.0
    %v4251 = vadd.f32 %v4249, %v4250
    %v4252 = vsel %vm352, %v4075, 0.0
    %v4253 = vadd.f32 %v4251, %v4252
    %v4254 = vsel %vm352, %v4076, 0.0
    %v4255 = vadd.f32 %v4253, %v4254
    %v4256 = vsel %vm352, %v4077, 0.0
    %v4257 = vadd.f32 %v4255, %v4256
    %v4258 = vsel %vm352, %v4078, 0.0
    %v4259 = vadd.f32 %v4257, %v4258
    %v4260 = vsel %vm352, %v4079, 0.0
    %v4261 = vadd.f32 %v4259, %v4260
    %v4262 = vsel %vm352, %v4080, 0.0
    %v4263 = vadd.f32 %v4261, %v4262
    %v4264 = vsel %vm352, %v4081, 0.0
    %v4265 = vadd.f32 %v4263, %v4264
    %v4266 = vsel %vm352, %v4082, 0.0
    %v4267 = vadd.f32 %v4265, %v4266
    %v4268 = vsel %vm352, %v4083, 0.0
    %v4269 = vadd.f32 %v4267, %v4268
    %v4270 = vsel %vm3926, %v4084, 0.0
    %v4271 = vadd.f32 %v4269, %v4270
    %4272 = vadd.xlane.f32.xlu0 %v4271
    %v4273 = vpop.xlane.xlu0 %4272
    %4274 = vst.msk [vmem:[%s10] sm:$0xff] %vm402, %v3764
    %4275 = vst.msk [vmem:[%s10 + $0x8] sm:$0xff] %vm402, %v3788
    %4276 = vst.msk [vmem:[%s10 + $0x10] sm:$0xff] %vm402, %v3812
    %4277 = vst.msk [vmem:[%s10 + $0x18] sm:$0xff] %vm402, %v3836
    %4278 = vst.msk [vmem:[%s10 + $0x20] sm:$0xff] %vm402, %v3860
    %4279 = vst.msk [vmem:[%s10 + $0x28] sm:$0xff] %vm402, %v3884
    %4280 = vst.msk [vmem:[%s10 + $0x30] sm:$0x3f] %vm409, %v3930
    %4281 = vst.msk [vmem:[%s11] sm:$0xff] %vm402, %v4108
    %4282 = vst.msk [vmem:[%s11 + $0x8] sm:$0xff] %vm402, %v4132
    %4283 = vst.msk [vmem:[%s11 + $0x10] sm:$0xff] %vm402, %v4156
    %4284 = vst.msk [vmem:[%s11 + $0x18] sm:$0xff] %vm402, %v4180
    %4285 = vst.msk [vmem:[%s11 + $0x20] sm:$0xff] %vm402, %v4204
    %4286 = vst.msk [vmem:[%s11 + $0x28] sm:$0xff] %vm402, %v4228
    %4287 = vst.msk [vmem:[%s11 + $0x30] sm:$0x3f] %vm409, %v4273
    // Predicated region
    $region42: #{_device_forward.1} parent=1 // pred_check
      _
    $region43: #{_device_forward.1} parent=1 // pred_check_branch
      %4289 = sbr.rel (0) target = $region45
    $region44: #{_device_forward.1} parent=1 // pred_region
      _
    $region45: #{_device_forward.1} parent=1 // pred_fallthru
      _
    // Predicated region
    $region46: #{_device_forward.1} parent=1 // pred_check
      _
    $region47: #{_device_forward.1} parent=1 // pred_check_branch
      %4291 = sbr.rel (0) target = $region49
    $region48: #{_device_forward.1} parent=1 // pred_region
      _
    $region49: #{_device_forward.1} parent=1 // pred_fallthru
      _
    // Predicated region
    $region50: #{_device_forward.1} parent=1 // pred_check
      _
    $region51: #{_device_forward.1} parent=1 // pred_check_branch
      %4293 = sbr.rel (0) target = $region53
    $region52: #{_device_forward.1} parent=1 // pred_region
      _
    $region53: #{_device_forward.1} parent=1 // pred_fallthru
      _
    // Predicated region
    $region54: #{_device_forward.1} parent=1 // pred_check
      _
    $region55: #{_device_forward.1} parent=1 // pred_check_branch
      %4295 = sbr.rel (0) target = $region57
    $region56: #{_device_forward.1} parent=1 // pred_region
      _
    $region57: #{_device_forward.1} parent=1 // pred_fallthru
      _
    // Predicated region
    $region58: #{_device_forward.1} parent=1 // pred_check
      _
    $region59: #{_device_forward.1} parent=1 // pred_check_branch
      %4297 = sbr.rel (0) target = $region61
    $region60: #{_device_forward.1} parent=1 // pred_region
      _
    $region61: #{_device_forward.1} parent=1 // pred_fallthru
      _
    // Predicated region
    $region62: #{_device_forward.1} parent=1 // pred_check
      _
    $region63: #{_device_forward.1} parent=1 // pred_check_branch
      %4299 = sbr.rel (0) target = $region65
    $region64: #{_device_forward.1} parent=1 // pred_region
      _
    $region65: #{_device_forward.1} parent=1 // pred_fallthru
      _
    // Predicated region
    $region66: #{_device_forward.1} parent=1 // pred_check
      _
    $region67: #{_device_forward.1} parent=1 // pred_check_branch
      %4301 = sbr.rel (0) target = $region69
    $region68: #{_device_forward.1} parent=1 // pred_region
      _
    $region69: #{_device_forward.1} parent=1 // pred_fallthru
      _
    // Predicated region
    $region70: #{_device_forward.1} parent=1 // pred_check
      _
    $region71: #{_device_forward.1} parent=1 // pred_check_branch
      %4303 = sbr.rel (0) target = $region73
    $region72: #{_device_forward.1} parent=1 // pred_region
      _
    $region73: #{_device_forward.1} parent=1 // pred_fallthru
      _
    // Predicated region
    $region74: #{_device_forward.1} parent=1 // pred_check
      _
    $region75: #{_device_forward.1} parent=1 // pred_check_branch
      %4305 = sbr.rel (0) target = $region77
    $region76: #{_device_forward.1} parent=1 // pred_region
      _
    $region77: #{_device_forward.1} parent=1 // pred_fallthru
      _
    // Predicated region
    $region78: #{_device_forward.1} parent=1 // pred_check
      _
    $region79: #{_device_forward.1} parent=1 // pred_check_branch
      %4307 = sbr.rel (0) target = $region81
    $region80: #{_device_forward.1} parent=1 // pred_region
      _
    $region81: #{_device_forward.1} parent=1 // pred_fallthru
      _
    // Predicated region
    $region82: #{_device_forward.1} parent=1 // pred_check
      _
    $region83: #{_device_forward.1} parent=1 // pred_check_branch
      %4309 = sbr.rel (0) target = $region85
    $region84: #{_device_forward.1} parent=1 // pred_region
      _
    $region85: #{_device_forward.1} parent=1 // pred_fallthru
      _
    // Predicated region
    $region86: #{_device_forward.1} parent=1 // pred_check
      _
    $region87: #{_device_forward.1} parent=1 // pred_check_branch
      %4311 = sbr.rel (0) target = $region89
    $region88: #{_device_forward.1} parent=1 // pred_region
      _
    $region89: #{_device_forward.1} parent=1 // pred_fallthru
      _
    %4312 = vsyncpa [#allocation6], 1
    %4313 = vsyncpa [#allocation8], 1
    %4314 = vsyncpa [#allocation11], 1
  %4315 = vsyncmov [#allocation4]
  %s4316 = vpop.sfrf %4315
  %p4317 = scmp.eq.s32.totalorder %s4316, 0
  %p4318 = pneg %p4317
  %4320 = shalt.err (%p4318)
  %s4321 = scalar_lea.sflag [#allocation4], 1
  %4322 = vsyncmov %s4321
  %s4323 = vpop.sfrf %4322
  %p4324 = scmp.eq.s32.totalorder %s4323, 0
  %p4325 = pneg %p4324
  %4327 = shalt.err (%p4325)

</llo_original>
